<compile_context>
chip_gen: v5e
topology: v5e:2x2
jax: 0.10.0
libtpu: 0.0.40
codegen_flags: <defaults>
</compile_context>

<pallas_src>
import numpy as np
import jax
import jax.numpy as jnp
from jax import lax
from jax.experimental import pallas as pl
from jax.experimental.pallas import tpu as pltpu

EPS = 1e-5
OUT_H, OUT_W = 112, 96


def _nearest_src_indices(in_size, out_size):
    # PyTorch 'nearest': src = floor(dst * (in/out)), scale computed in float32.
    scale = np.float32(in_size) / np.float32(out_size)
    idx = np.floor(np.arange(out_size, dtype=np.float32) * scale).astype(np.int32)
    return np.minimum(idx, in_size - 1)


def bn_resize_nhwc_kernel(x_ref, hsel_ref, wsel_ref, gamma_ref, beta_ref, o_ref):
    """x_ref: (C,H,W) f32 VMEM; hsel_ref: (H_out,1) int32 (source row per output row);
    wsel_ref: (C,1,C*W_out) int32 (source col per interleaved output column, -1 for
    other channels' columns); gamma/beta: (C,) f32 SMEM;
    o_ref: (H_out, C*W_out) f32 VMEM -- NHWC channel-interleaved output."""
    C, H, W = x_ref.shape
    H_out, CW = o_ref.shape
    inv_n = 1.0 / float(H * W)

    # One-hot H selector (built once, on the VPU): selh[i, h] = (h == h_idx[i]).
    h_col = lax.broadcasted_iota(jnp.int32, (H_out, H), 1)
    selh = (h_col == hsel_ref[...]).astype(jnp.float32)              # (H_out, H)

    # Source-row iota reused by the per-channel interleaved W selectors.
    w_row = lax.broadcasted_iota(jnp.int32, (W, CW), 0)              # (W, C*W_out)

    acc = None
    for c in range(C):                                               # C == 3, static unroll
        xc = x_ref[c]                                                # (H, W)

        # One-pass batch statistics (biased variance, train-mode BN).
        s1 = jnp.sum(xc)
        s2 = jnp.sum(xc * xc)
        mean = s1 * inv_n
        var = s2 * inv_n - mean * mean
        scale = lax.rsqrt(var + EPS) * gamma_ref[c]
        shift = beta_ref[c] - mean * scale

        # H-downsample first (pure one-hot row selection on the MXU), then the
        # BN affine on the already-halved tile.
        xh = jnp.dot(selh, xc, preferred_element_type=jnp.float32)   # (H_out, W)
        y = xh * scale + shift

        # Interleaved W selector: column 3*j + c is one-hot at row w_idx[j] for
        # this channel and all-zero elsewhere, so this matmul both resizes W and
        # scatters channel c into the NHWC lane layout.  Inactive columns of the
        # selector are all-zero, so the shift folded into `y` only lands on this
        # channel's output columns.
        selw_c = (w_row == wsel_ref[c]).astype(jnp.float32)          # (W, C*W_out)
        r = jnp.dot(y, selw_c, preferred_element_type=jnp.float32)   # (H_out, C*W_out)
        acc = r if acc is None else acc + r

    o_ref[...] = acc


@jax.jit
def model_forward(x, gamma, beta):
    # x: (N, C, H, W) float32, N must be 1 (matches the reference program).
    N, C, H, W = x.shape
    assert N == 1, "kernel assumes batch size 1 (as in the reference program)"
    H_out, W_out = OUT_H, OUT_W

    h_idx = _nearest_src_indices(H, H_out)                 # (112,)
    w_idx = _nearest_src_indices(W, W_out)                 # (96,)
    hsel = jnp.asarray(h_idx.reshape(H_out, 1))            # (112, 1) int32
    wsel_np = np.full((C, 1, C * W_out), -1, np.int32)     # (3, 1, 288) int32
    for c in range(C):
        wsel_np[c, 0, c::C] = w_idx
    wsel = jnp.asarray(wsel_np)

    flops = 3 * 2 * H_out * W * (H + C * W_out) + 8 * C * H * W
    bytes_accessed = 4 * (C * H * W + H_out * C * W_out + H_out + C * C * W_out + 2 * C)

    out2d = pl.pallas_call(
        bn_resize_nhwc_kernel,
        out_shape=jax.ShapeDtypeStruct((H_out, C * W_out), jnp.float32),
        in_specs=[
            pl.BlockSpec(memory_space=pltpu.MemorySpace.VMEM),  # x (C,H,W)
            pl.BlockSpec(memory_space=pltpu.MemorySpace.VMEM),  # hsel (H_out,1)
            pl.BlockSpec(memory_space=pltpu.MemorySpace.VMEM),  # wsel (C,1,C*W_out)
            pl.BlockSpec(memory_space=pltpu.MemorySpace.SMEM),  # gamma (C,)
            pl.BlockSpec(memory_space=pltpu.MemorySpace.SMEM),  # beta  (C,)
        ],
        out_specs=pl.BlockSpec(memory_space=pltpu.MemorySpace.VMEM),
        cost_estimate=pl.CostEstimate(
            flops=int(flops), transcendentals=C, bytes_accessed=int(bytes_accessed)),
    )(x[0], hsel, wsel, gamma, beta)

    # Free reshape: (112, 288) is already channel-interleaved -> (1, 112, 96, 3).
    return out2d.reshape(1, H_out, W_out, C)


def _reference(x, gamma, beta):
    # Pure-JAX reference of the PyTorch forward (train-mode BN + nearest resize + permute).
    N, C, H, W = x.shape
    mean = jnp.mean(x, axis=(0, 2, 3), keepdims=True)
    var = jnp.mean((x - mean) ** 2, axis=(0, 2, 3), keepdims=True)
    xn = (x - mean) * lax.rsqrt(var + EPS)
    xn = xn * gamma[None, :, None, None] + beta[None, :, None, None]
    h_idx = _nearest_src_indices(H, OUT_H)
    w_idx = _nearest_src_indices(W, OUT_W)
    v2 = xn[:, :, h_idx, :][:, :, :, w_idx]
    return jnp.transpose(v2, (0, 2, 3, 1))


if __name__ == "__main__":
    key = jax.random.PRNGKey(0)
    kx, kg, kb = jax.random.split(key, 3)

    # Module input: x = torch.randn(1, 3, 224, 224)
    x = jax.random.normal(kx, (1, 3, 224, 224), dtype=jnp.float32)
    # BatchNorm2d(3) parameters (weight/bias), deterministic in-script init.
    gamma = 1.0 + 0.1 * jax.random.normal(kg, (3,), dtype=jnp.float32)
    beta = 0.1 * jax.random.normal(kb, (3,), dtype=jnp.float32)

    out = jax.block_until_ready(model_forward(x, gamma, beta))
    ref = jax.block_until_ready(_reference(x, gamma, beta))

    assert out.shape == (1, OUT_H, OUT_W, 3), out.shape
    np.testing.assert_allclose(np.asarray(out), np.asarray(ref), rtol=1e-4, atol=1e-4)

    print("KERNEL_OK")
</pallas_src>

<mosaic_0001>
module attributes {stable_mosaic.version = 11 : i64} {
  func.func @bn_resize_nhwc_kernel(%arg0: memref<3x224x224xf32, #tpu.memory_space<vmem>>, %arg1: memref<112x1xi32, #tpu.memory_space<vmem>>, %arg2: memref<3x1x288xi32, #tpu.memory_space<vmem>>, %arg3: memref<3xf32, #tpu.memory_space<smem>>, %arg4: memref<3xf32, #tpu.memory_space<smem>>, %arg5: memref<112x288xf32, #tpu.memory_space<vmem>>) attributes {dimension_semantics = [], scalar_prefetch = 0 : i64, scratch_operands = 0 : i64, tpu.core_type = #tpu.core_type<tc>} {
    %0 = tpu.iota {dimensions = array<i32: 1>} : vector<112x224xi32>
    %c0 = arith.constant 0 : index
    %c0_0 = arith.constant 0 : index
    %1 = vector.load %arg1[%c0, %c0_0] : memref<112x1xi32, #tpu.memory_space<vmem>>, vector<112x1xi32>
    %2 = vector.broadcast %1 : vector<112x1xi32> to vector<112x224xi32>
    %3 = arith.cmpi eq, %0, %2 : vector<112x224xi32>
    %4 = arith.extui %3 : vector<112x224xi1> to vector<112x224xi32>
    %5 = arith.sitofp %4 : vector<112x224xi32> to vector<112x224xf32>
    %6 = tpu.iota {dimensions = array<i32: 0>} : vector<224x288xi32>
    %c0_1 = arith.constant 0 : index
    %c0_2 = arith.constant 0 : index
    %c0_3 = arith.constant 0 : index
    %7 = vector.load %arg0[%c0_1, %c0_2, %c0_3] : memref<3x224x224xf32, #tpu.memory_space<vmem>>, vector<1x224x224xf32>
    %8 = vector.shape_cast %7 : vector<1x224x224xf32> to vector<224x224xf32>
    %9 = vector.shape_cast %8 : vector<224x224xf32> to vector<1x224x224xf32>
    %cst = arith.constant dense<0.000000e+00> : vector<1xf32>
    %10 = vector.multi_reduction <add>, %9, %cst [1, 2] : vector<1x224x224xf32> to vector<1xf32>
    %11 = vector.shape_cast %10 : vector<1xf32> to vector<1x1x1xf32>
    %12 = vector.extract %11[0, 0, 0] : f32 from vector<1x1x1xf32>
    %13 = arith.mulf %8, %8 : vector<224x224xf32>
    %14 = vector.shape_cast %13 : vector<224x224xf32> to vector<1x224x224xf32>
    %cst_4 = arith.constant dense<0.000000e+00> : vector<1xf32>
    %15 = vector.multi_reduction <add>, %14, %cst_4 [1, 2] : vector<1x224x224xf32> to vector<1xf32>
    %16 = vector.shape_cast %15 : vector<1xf32> to vector<1x1x1xf32>
    %17 = vector.extract %16[0, 0, 0] : f32 from vector<1x1x1xf32>
    %cst_5 = arith.constant 1.99298465E-5 : f32
    %18 = arith.mulf %12, %cst_5 : f32
    %cst_6 = arith.constant 1.99298465E-5 : f32
    %19 = arith.mulf %17, %cst_6 : f32
    %20 = arith.mulf %18, %18 : f32
    %21 = arith.subf %19, %20 : f32
    %cst_7 = arith.constant 9.99999974E-6 : f32
    %22 = arith.addf %21, %cst_7 : f32
    %23 = math.rsqrt %22 : f32
    %c0_8 = arith.constant 0 : index
    %24 = memref.load %arg3[%c0_8] : memref<3xf32, #tpu.memory_space<smem>>
    %25 = arith.mulf %23, %24 : f32
    %c0_9 = arith.constant 0 : index
    %26 = memref.load %arg4[%c0_9] : memref<3xf32, #tpu.memory_space<smem>>
    %27 = arith.mulf %18, %25 : f32
    %28 = arith.subf %26, %27 : f32
    %cst_10 = arith.constant dense<0.000000e+00> : vector<112x224xf32>
    %29 = tpu.matmul %5, %8, %cst_10 {dimension_numbers = #tpu.dot_dimension_numbers<[1], [0], [0], [1], [0, 0, 1, 1], [], []>} : vector<112x224xf32>, vector<224x224xf32>, vector<112x224xf32> -> vector<112x224xf32>
    %30 = vector.broadcast %25 : f32 to vector<112x224xf32>
    %31 = arith.mulf %29, %30 : vector<112x224xf32>
    %32 = vector.broadcast %28 : f32 to vector<112x224xf32>
    %33 = arith.addf %31, %32 : vector<112x224xf32>
    %c0_11 = arith.constant 0 : index
    %c0_12 = arith.constant 0 : index
    %c0_13 = arith.constant 0 : index
    %34 = vector.load %arg2[%c0_11, %c0_12, %c0_13] : memref<3x1x288xi32, #tpu.memory_space<vmem>>, vector<1x1x288xi32>
    %35 = vector.shape_cast %34 : vector<1x1x288xi32> to vector<1x288xi32>
    %36 = vector.broadcast %35 : vector<1x288xi32> to vector<224x288xi32>
    %37 = arith.cmpi eq, %6, %36 : vector<224x288xi32>
    %38 = arith.extui %37 : vector<224x288xi1> to vector<224x288xi32>
    %39 = arith.sitofp %38 : vector<224x288xi32> to vector<224x288xf32>
    %cst_14 = arith.constant dense<0.000000e+00> : vector<112x288xf32>
    %40 = tpu.matmul %33, %39, %cst_14 {dimension_numbers = #tpu.dot_dimension_numbers<[1], [0], [0], [1], [0, 0, 1, 1], [], []>} : vector<112x224xf32>, vector<224x288xf32>, vector<112x288xf32> -> vector<112x288xf32>
    %c1 = arith.constant 1 : index
    %c0_15 = arith.constant 0 : index
    %c0_16 = arith.constant 0 : index
    %41 = vector.load %arg0[%c1, %c0_15, %c0_16] : memref<3x224x224xf32, #tpu.memory_space<vmem>>, vector<1x224x224xf32>
    %42 = vector.shape_cast %41 : vector<1x224x224xf32> to vector<224x224xf32>
    %43 = vector.shape_cast %42 : vector<224x224xf32> to vector<1x224x224xf32>
    %cst_17 = arith.constant dense<0.000000e+00> : vector<1xf32>
    %44 = vector.multi_reduction <add>, %43, %cst_17 [1, 2] : vector<1x224x224xf32> to vector<1xf32>
    %45 = vector.shape_cast %44 : vector<1xf32> to vector<1x1x1xf32>
    %46 = vector.extract %45[0, 0, 0] : f32 from vector<1x1x1xf32>
    %47 = arith.mulf %42, %42 : vector<224x224xf32>
    %48 = vector.shape_cast %47 : vector<224x224xf32> to vector<1x224x224xf32>
    %cst_18 = arith.constant dense<0.000000e+00> : vector<1xf32>
    %49 = vector.multi_reduction <add>, %48, %cst_18 [1, 2] : vector<1x224x224xf32> to vector<1xf32>
    %50 = vector.shape_cast %49 : vector<1xf32> to vector<1x1x1xf32>
    %51 = vector.extract %50[0, 0, 0] : f32 from vector<1x1x1xf32>
    %cst_19 = arith.constant 1.99298465E-5 : f32
    %52 = arith.mulf %46, %cst_19 : f32
    %cst_20 = arith.constant 1.99298465E-5 : f32
    %53 = arith.mulf %51, %cst_20 : f32
    %54 = arith.mulf %52, %52 : f32
    %55 = arith.subf %53, %54 : f32
    %cst_21 = arith.constant 9.99999974E-6 : f32
    %56 = arith.addf %55, %cst_21 : f32
    %57 = math.rsqrt %56 : f32
    %c1_22 = arith.constant 1 : index
    %58 = memref.load %arg3[%c1_22] : memref<3xf32, #tpu.memory_space<smem>>
    %59 = arith.mulf %57, %58 : f32
    %c1_23 = arith.constant 1 : index
    %60 = memref.load %arg4[%c1_23] : memref<3xf32, #tpu.memory_space<smem>>
    %61 = arith.mulf %52, %59 : f32
    %62 = arith.subf %60, %61 : f32
    %cst_24 = arith.constant dense<0.000000e+00> : vector<112x224xf32>
    %63 = tpu.matmul %5, %42, %cst_24 {dimension_numbers = #tpu.dot_dimension_numbers<[1], [0], [0], [1], [0, 0, 1, 1], [], []>} : vector<112x224xf32>, vector<224x224xf32>, vector<112x224xf32> -> vector<112x224xf32>
    %64 = vector.broadcast %59 : f32 to vector<112x224xf32>
    %65 = arith.mulf %63, %64 : vector<112x224xf32>
    %66 = vector.broadcast %62 : f32 to vector<112x224xf32>
    %67 = arith.addf %65, %66 : vector<112x224xf32>
    %c1_25 = arith.constant 1 : index
    %c0_26 = arith.constant 0 : index
    %c0_27 = arith.constant 0 : index
    %68 = vector.load %arg2[%c1_25, %c0_26, %c0_27] : memref<3x1x288xi32, #tpu.memory_space<vmem>>, vector<1x1x288xi32>
    %69 = vector.shape_cast %68 : vector<1x1x288xi32> to vector<1x288xi32>
    %70 = vector.broadcast %69 : vector<1x288xi32> to vector<224x288xi32>
    %71 = arith.cmpi eq, %6, %70 : vector<224x288xi32>
    %72 = arith.extui %71 : vector<224x288xi1> to vector<224x288xi32>
    %73 = arith.sitofp %72 : vector<224x288xi32> to vector<224x288xf32>
    %cst_28 = arith.constant dense<0.000000e+00> : vector<112x288xf32>
    %74 = tpu.matmul %67, %73, %cst_28 {dimension_numbers = #tpu.dot_dimension_numbers<[1], [0], [0], [1], [0, 0, 1, 1], [], []>} : vector<112x224xf32>, vector<224x288xf32>, vector<112x288xf32> -> vector<112x288xf32>
    %75 = arith.addf %40, %74 : vector<112x288xf32>
    %c2 = arith.constant 2 : index
    %c0_29 = arith.constant 0 : index
    %c0_30 = arith.constant 0 : index
    %76 = vector.load %arg0[%c2, %c0_29, %c0_30] : memref<3x224x224xf32, #tpu.memory_space<vmem>>, vector<1x224x224xf32>
    %77 = vector.shape_cast %76 : vector<1x224x224xf32> to vector<224x224xf32>
    %78 = vector.shape_cast %77 : vector<224x224xf32> to vector<1x224x224xf32>
    %cst_31 = arith.constant dense<0.000000e+00> : vector<1xf32>
    %79 = vector.multi_reduction <add>, %78, %cst_31 [1, 2] : vector<1x224x224xf32> to vector<1xf32>
    %80 = vector.shape_cast %79 : vector<1xf32> to vector<1x1x1xf32>
    %81 = vector.extract %80[0, 0, 0] : f32 from vector<1x1x1xf32>
    %82 = arith.mulf %77, %77 : vector<224x224xf32>
    %83 = vector.shape_cast %82 : vector<224x224xf32> to vector<1x224x224xf32>
    %cst_32 = arith.constant dense<0.000000e+00> : vector<1xf32>
    %84 = vector.multi_reduction <add>, %83, %cst_32 [1, 2] : vector<1x224x224xf32> to vector<1xf32>
    %85 = vector.shape_cast %84 : vector<1xf32> to vector<1x1x1xf32>
    %86 = vector.extract %85[0, 0, 0] : f32 from vector<1x1x1xf32>
    %cst_33 = arith.constant 1.99298465E-5 : f32
    %87 = arith.mulf %81, %cst_33 : f32
    %cst_34 = arith.constant 1.99298465E-5 : f32
    %88 = arith.mulf %86, %cst_34 : f32
    %89 = arith.mulf %87, %87 : f32
    %90 = arith.subf %88, %89 : f32
    %cst_35 = arith.constant 9.99999974E-6 : f32
    %91 = arith.addf %90, %cst_35 : f32
    %92 = math.rsqrt %91 : f32
    %c2_36 = arith.constant 2 : index
    %93 = memref.load %arg3[%c2_36] : memref<3xf32, #tpu.memory_space<smem>>
    %94 = arith.mulf %92, %93 : f32
    %c2_37 = arith.constant 2 : index
    %95 = memref.load %arg4[%c2_37] : memref<3xf32, #tpu.memory_space<smem>>
    %96 = arith.mulf %87, %94 : f32
    %97 = arith.subf %95, %96 : f32
    %cst_38 = arith.constant dense<0.000000e+00> : vector<112x224xf32>
    %98 = tpu.matmul %5, %77, %cst_38 {dimension_numbers = #tpu.dot_dimension_numbers<[1], [0], [0], [1], [0, 0, 1, 1], [], []>} : vector<112x224xf32>, vector<224x224xf32>, vector<112x224xf32> -> vector<112x224xf32>
    %99 = vector.broadcast %94 : f32 to vector<112x224xf32>
    %100 = arith.mulf %98, %99 : vector<112x224xf32>
    %101 = vector.broadcast %97 : f32 to vector<112x224xf32>
    %102 = arith.addf %100, %101 : vector<112x224xf32>
    %c2_39 = arith.constant 2 : index
    %c0_40 = arith.constant 0 : index
    %c0_41 = arith.constant 0 : index
    %103 = vector.load %arg2[%c2_39, %c0_40, %c0_41] : memref<3x1x288xi32, #tpu.memory_space<vmem>>, vector<1x1x288xi32>
    %104 = vector.shape_cast %103 : vector<1x1x288xi32> to vector<1x288xi32>
    %105 = vector.broadcast %104 : vector<1x288xi32> to vector<224x288xi32>
    %106 = arith.cmpi eq, %6, %105 : vector<224x288xi32>
    %107 = arith.extui %106 : vector<224x288xi1> to vector<224x288xi32>
    %108 = arith.sitofp %107 : vector<224x288xi32> to vector<224x288xf32>
    %cst_42 = arith.constant dense<0.000000e+00> : vector<112x288xf32>
    %109 = tpu.matmul %102, %108, %cst_42 {dimension_numbers = #tpu.dot_dimension_numbers<[1], [0], [0], [1], [0, 0, 1, 1], [], []>} : vector<112x224xf32>, vector<224x288xf32>, vector<112x288xf32> -> vector<112x288xf32>
    %110 = arith.addf %75, %109 : vector<112x288xf32>
    %c0_43 = arith.constant 0 : index
    %c0_44 = arith.constant 0 : index
    %111 = vector.load %arg5[%c0_43, %c0_44] : memref<112x288xf32, #tpu.memory_space<vmem>>, vector<112x288xf32>
    tpu.vector_store %arg5[%c0_43, %c0_44], %110 {strides = array<i32>} : memref<112x288xf32, #tpu.memory_space<vmem>>, vector<112x288xf32>,
    return
  }
}

</mosaic_0001>

<llo_original>
// kernel: model_forward.1
$region0: #{model_forward.1}
  #allocation0 [shape = 'u32[]', space=smem, size = 0x4, offset = 0x4, fixed_abs, tag = 'smem constant byte address 0x4 - core index']
  #allocation1 [shape = 'u32[72,128]{1,0:T(1,128)}', space=vmem, size = 0x9000, scoped, tag = 'internal scratch']
  %s0 = inlined_call_operand.hbm [shape: f32[3,224,224], index: 0, kind: input, shape index: {}]
  %s1 = inlined_call_operand.hbm [shape: s32[112,1], index: 1, kind: input, shape index: {}]
  %s2 = inlined_call_operand.hbm [shape: s32[3,1,288], index: 2, kind: input, shape index: {}]
  %s3 = inlined_call_operand.vmem [shape: f32[3], index: 3, kind: input, shape index: {}]
  %s4 = inlined_call_operand.vmem [shape: f32[3], index: 4, kind: input, shape index: {}]
  %s5 = inlined_call_operand.vmem [shape: f32[112,288], index: 5, kind: output, shape index: {}]
  %s6 = sld [smem:[#allocation0]]
  $region50: #{model_forward.1} parent=0
    _
  %s8 = ssub.s32 1, %s6
  %s9 = scalar_select 0, %s8, %s6
  $region1: #{model_forward.1} parent=0
    #allocation2 [shape = 'u8[688128]{0}', space=vmem, size = 0xa8000, scoped, tag = 'input window, operand 0, single buffered']
    #allocation3 [shape = 's32[1]{0}', space=sflag, size = 0x4, scoped, tag = 'scoped memory for model_forward.1']
    #allocation4 [shape = 's32[1]{0}', space=sflag, size = 0x4, scoped, tag = 'scoped memory for model_forward.1']
    #allocation5 [shape = 'u8[57344]{0}', space=vmem, size = 0xe000, scoped, tag = 'input window, operand 1, single buffered']
    #allocation6 [shape = 's32[1]{0}', space=sflag, size = 0x4, scoped, tag = 'scoped memory for model_forward.1']
    #allocation7 [shape = 'u8[4608]{0}', space=vmem, size = 0x1400, scoped, tag = 'input window, operand 2, single buffered']
    #allocation8 [shape = 'u8[512]{0}', space=smem, size = 0x200, scoped, tag = 'input window, operand 3, single buffered']
    #allocation9 [shape = 'u8[512]{0}', space=smem, size = 0x200, scoped, tag = 'input window, operand 4, single buffered']
    #allocation10 [shape = 's32[1]{0}', space=sflag, size = 0x4, scoped, tag = 'scoped memory for model_forward.1']
    %10 = vsyncpa [#allocation3], 0
    %11 = vsyncpa [#allocation6], 0
    %12 = vsyncpa [#allocation4], 0
    %13 = vsyncpa [#allocation10], 0
    // Predicated region
    $region2: #{model_forward.1} parent=1 // pred_check
      _
    $region3: #{model_forward.1} parent=1 // pred_check_branch
      %15 = sbr.rel (0) target = $region5
    $region4: #{model_forward.1} parent=1 // pred_region
      %17 = vsyncadd [#allocation3], 0
      %s18 = sshll.u32 %s0, 4
      %s19 = int_to_ptr.hbm [resolvable:$true] %s18
      %s20 = sshll.u32 [#allocation2], 4
      %s21 = int_to_ptr.vmem [resolvable:$true] %s20
      %26 = dma.hbm_to_vmem [thread:$0]  %s19, 21504, %s21, [#allocation3], 256, 256, 16
    $region5: #{model_forward.1} parent=1 // pred_fallthru
      _
    // Predicated region
    $region6: #{model_forward.1} parent=1 // pred_check
      _
    $region7: #{model_forward.1} parent=1 // pred_check_branch
      %28 = sbr.rel (0) target = $region9
    $region8: #{model_forward.1} parent=1 // pred_region
      %30 = vsyncadd [#allocation6], 0
      %s31 = sshll.u32 %s1, 4
      %s32 = int_to_ptr.hbm [resolvable:$true] %s31
      %s33 = sshll.u32 [#allocation5], 4
      %s34 = int_to_ptr.vmem [resolvable:$true] %s33
      %39 = dma.hbm_to_vmem [thread:$0]  %s32, 1792, %s34, [#allocation6], 128, 128, 8
    $region9: #{model_forward.1} parent=1 // pred_fallthru
      _
    // Predicated region
    $region10: #{model_forward.1} parent=1 // pred_check
      _
    $region11: #{model_forward.1} parent=1 // pred_check_branch
      %41 = sbr.rel (0) target = $region13
    $region12: #{model_forward.1} parent=1 // pred_region
      %43 = vsyncadd [#allocation6], 0
      %s44 = sshll.u32 %s2, 4
      %s45 = int_to_ptr.hbm [resolvable:$true] %s44
      %s46 = sshll.u32 [#allocation7], 4
      %s47 = int_to_ptr.vmem [resolvable:$true] %s46
      %52 = dma.hbm_to_vmem [thread:$0]  %s45, 144, %s47, [#allocation6], 48, 48, 3
    $region13: #{model_forward.1} parent=1 // pred_fallthru
      _
    // Predicated region
    $region14: #{model_forward.1} parent=1 // pred_check
      _
    $region15: #{model_forward.1} parent=1 // pred_check_branch
      %54 = sbr.rel (0) target = $region17
    $region16: #{model_forward.1} parent=1 // pred_region
      %56 = vsyncadd [#allocation4], 0
      %s58 = sshll.u32 %s3, 4
      %s59 = int_to_ptr.vmem [resolvable:$true] %s58
      %61 = dma.vmem_to_smem %s59, 16, [#allocation8], [#allocation4]
    $region17: #{model_forward.1} parent=1 // pred_fallthru
      _
    // Predicated region
    $region18: #{model_forward.1} parent=1 // pred_check
      _
    $region19: #{model_forward.1} parent=1 // pred_check_branch
      %63 = sbr.rel (0) target = $region21
    $region20: #{model_forward.1} parent=1 // pred_region
      %65 = vsyncadd [#allocation10], 0
      %s67 = sshll.u32 %s4, 4
      %s68 = int_to_ptr.vmem [resolvable:$true] %s67
      %70 = dma.vmem_to_smem %s68, 16, [#allocation9], [#allocation10]
    $region21: #{model_forward.1} parent=1 // pred_fallthru
      _
    // Predicated region
    $region22: #{model_forward.1} parent=1 // pred_check
      _
    $region23: #{model_forward.1} parent=1 // pred_check_branch
      %72 = sbr.rel (0) target = $region25
    $region24: #{model_forward.1} parent=1 // pred_region
      %74 = dma.done [#allocation3], 21504
    $region25: #{model_forward.1} parent=1 // pred_fallthru
      _
    // Predicated region
    $region26: #{model_forward.1} parent=1 // pred_check
      _
    $region27: #{model_forward.1} parent=1 // pred_check_branch
      %76 = sbr.rel (0) target = $region29
    $region28: #{model_forward.1} parent=1 // pred_region
      %78 = dma.done [#allocation6], 1792
    $region29: #{model_forward.1} parent=1 // pred_fallthru
      _
    // Predicated region
    $region30: #{model_forward.1} parent=1 // pred_check
      _
    $region31: #{model_forward.1} parent=1 // pred_check_branch
      %80 = sbr.rel (0) target = $region33
    $region32: #{model_forward.1} parent=1 // pred_region
      %82 = dma.done [#allocation6], 144
    $region33: #{model_forward.1} parent=1 // pred_fallthru
      _
    // Predicated region
    $region34: #{model_forward.1} parent=1 // pred_check
      _
    $region35: #{model_forward.1} parent=1 // pred_check_branch
      %84 = sbr.rel (0) target = $region37
    $region36: #{model_forward.1} parent=1 // pred_region
      %86 = dma.done [#allocation4], 16
    $region37: #{model_forward.1} parent=1 // pred_fallthru
      _
    // Predicated region
    $region38: #{model_forward.1} parent=1 // pred_check
      _
    $region39: #{model_forward.1} parent=1 // pred_check_branch
      %88 = sbr.rel (0) target = $region41
    $region40: #{model_forward.1} parent=1 // pred_region
      %90 = dma.done [#allocation10], 16
    $region41: #{model_forward.1} parent=1 // pred_fallthru
      _
    %91 = sfence
    %v92 = vlaneseq
    %v93 = vand.u32 %v92, 127
    %v94 = vadd.s32 %v93, 128
    %v95 = vld [vmem:[#allocation5] sm:$0xff]
    %v96 = vld [vmem:[#allocation5 + $0x8] sm:$0xff]
    %v97 = vld [vmem:[#allocation5 + $0x10] sm:$0xff]
    %v98 = vld [vmem:[#allocation5 + $0x18] sm:$0xff]
    %v99 = vld [vmem:[#allocation5 + $0x20] sm:$0xff]
    %v100 = vld [vmem:[#allocation5 + $0x28] sm:$0xff]
    %v101 = vld [vmem:[#allocation5 + $0x30] sm:$0xff]
    %v102 = vld [vmem:[#allocation5 + $0x38] sm:$0xff]
    %v103 = vld [vmem:[#allocation5 + $0x40] sm:$0xff]
    %v104 = vld [vmem:[#allocation5 + $0x48] sm:$0xff]
    %v105 = vld [vmem:[#allocation5 + $0x50] sm:$0xff]
    %v106 = vld [vmem:[#allocation5 + $0x58] sm:$0xff]
    %v107 = vld [vmem:[#allocation5 + $0x60] sm:$0xff]
    %v108 = vld [vmem:[#allocation5 + $0x68] sm:$0xff]
    %109 = vset.pattern.permute.xlu0 0
    %110 = vperm.xlu0 %109, %v95
    %v111 = vpop.permute.xlu0 %110
    %112 = vset.pattern.permute.xlu0 0
    %113 = vperm.xlu0 %112, %v96
    %v114 = vpop.permute.xlu0 %113
    %115 = vset.pattern.permute.xlu0 0
    %116 = vperm.xlu0 %115, %v97
    %v117 = vpop.permute.xlu0 %116
    %118 = vset.pattern.permute.xlu0 0
    %119 = vperm.xlu0 %118, %v98
    %v120 = vpop.permute.xlu0 %119
    %121 = vset.pattern.permute.xlu0 0
    %122 = vperm.xlu0 %121, %v99
    %v123 = vpop.permute.xlu0 %122
    %124 = vset.pattern.permute.xlu0 0
    %125 = vperm.xlu0 %124, %v100
    %v126 = vpop.permute.xlu0 %125
    %127 = vset.pattern.permute.xlu0 0
    %128 = vperm.xlu0 %127, %v101
    %v129 = vpop.permute.xlu0 %128
    %130 = vset.pattern.permute.xlu0 0
    %131 = vperm.xlu0 %130, %v102
    %v132 = vpop.permute.xlu0 %131
    %133 = vset.pattern.permute.xlu0 0
    %134 = vperm.xlu0 %133, %v103
    %v135 = vpop.permute.xlu0 %134
    %136 = vset.pattern.permute.xlu0 0
    %137 = vperm.xlu0 %136, %v104
    %v138 = vpop.permute.xlu0 %137
    %139 = vset.pattern.permute.xlu0 0
    %140 = vperm.xlu0 %139, %v105
    %v141 = vpop.permute.xlu0 %140
    %142 = vset.pattern.permute.xlu0 0
    %143 = vperm.xlu0 %142, %v106
    %v144 = vpop.permute.xlu0 %143
    %145 = vset.pattern.permute.xlu0 0
    %146 = vperm.xlu0 %145, %v107
    %v147 = vpop.permute.xlu0 %146
    %148 = vset.pattern.permute.xlu0 0
    %149 = vperm.xlu0 %148, %v108
    %v150 = vpop.permute.xlu0 %149
    %vm151 = vcmp.eq.s32.totalorder %v93, %v111
    %vm152 = vcmp.eq.s32.totalorder %v94, %v111
    %vm153 = vcmp.eq.s32.totalorder %v93, %v114
    %vm154 = vcmp.eq.s32.totalorder %v94, %v114
    %vm155 = vcmp.eq.s32.totalorder %v93, %v117
    %vm156 = vcmp.eq.s32.totalorder %v94, %v117
    %vm157 = vcmp.eq.s32.totalorder %v93, %v120
    %vm158 = vcmp.eq.s32.totalorder %v94, %v120
    %vm159 = vcmp.eq.s32.totalorder %v93, %v123
    %vm160 = vcmp.eq.s32.totalorder %v94, %v123
    %vm161 = vcmp.eq.s32.totalorder %v93, %v126
    %vm162 = vcmp.eq.s32.totalorder %v94, %v126
    %vm163 = vcmp.eq.s32.totalorder %v93, %v129
    %vm164 = vcmp.eq.s32.totalorder %v94, %v129
    %vm165 = vcmp.eq.s32.totalorder %v93, %v132
    %vm166 = vcmp.eq.s32.totalorder %v94, %v132
    %vm167 = vcmp.eq.s32.totalorder %v93, %v135
    %vm168 = vcmp.eq.s32.totalorder %v94, %v135
    %vm169 = vcmp.eq.s32.totalorder %v93, %v138
    %vm170 = vcmp.eq.s32.totalorder %v94, %v138
    %vm171 = vcmp.eq.s32.totalorder %v93, %v141
    %vm172 = vcmp.eq.s32.totalorder %v94, %v141
    %vm173 = vcmp.eq.s32.totalorder %v93, %v144
    %vm174 = vcmp.eq.s32.totalorder %v94, %v144
    %vm175 = vcmp.eq.s32.totalorder %v93, %v147
    %vm176 = vcmp.eq.s32.totalorder %v94, %v147
    %vm177 = vcmp.eq.s32.totalorder %v93, %v150
    %vm178 = vcmp.eq.s32.totalorder %v94, %v150
    %v179 = vsel %vm151, 1, 0
    %v180 = vsel %vm152, 1, 0
    %v181 = vsel %vm153, 1, 0
    %v182 = vsel %vm154, 1, 0
    %v183 = vsel %vm155, 1, 0
    %v184 = vsel %vm156, 1, 0
    %v185 = vsel %vm157, 1, 0
    %v186 = vsel %vm158, 1, 0
    %v187 = vsel %vm159, 1, 0
    %v188 = vsel %vm160, 1, 0
    %v189 = vsel %vm161, 1, 0
    %v190 = vsel %vm162, 1, 0
    %v191 = vsel %vm163, 1, 0
    %v192 = vsel %vm164, 1, 0
    %v193 = vsel %vm165, 1, 0
    %v194 = vsel %vm166, 1, 0
    %v195 = vsel %vm167, 1, 0
    %v196 = vsel %vm168, 1, 0
    %v197 = vsel %vm169, 1, 0
    %v198 = vsel %vm170, 1, 0
    %v199 = vsel %vm171, 1, 0
    %v200 = vsel %vm172, 1, 0
    %v201 = vsel %vm173, 1, 0
    %v202 = vsel %vm174, 1, 0
    %v203 = vsel %vm175, 1, 0
    %v204 = vsel %vm176, 1, 0
    %v205 = vsel %vm177, 1, 0
    %v206 = vsel %vm178, 1, 0
    %v207 = vcvt.s32.f32 %v179
    %v208 = vcvt.s32.f32 %v180
    %v209 = vcvt.s32.f32 %v181
    %v210 = vcvt.s32.f32 %v182
    %v211 = vcvt.s32.f32 %v183
    %v212 = vcvt.s32.f32 %v184
    %v213 = vcvt.s32.f32 %v185
    %v214 = vcvt.s32.f32 %v186
    %v215 = vcvt.s32.f32 %v187
    %v216 = vcvt.s32.f32 %v188
    %v217 = vcvt.s32.f32 %v189
    %v218 = vcvt.s32.f32 %v190
    %v219 = vcvt.s32.f32 %v191
    %v220 = vcvt.s32.f32 %v192
    %v221 = vcvt.s32.f32 %v193
    %v222 = vcvt.s32.f32 %v194
    %v223 = vcvt.s32.f32 %v195
    %v224 = vcvt.s32.f32 %v196
    %v225 = vcvt.s32.f32 %v197
    %v226 = vcvt.s32.f32 %v198
    %v227 = vcvt.s32.f32 %v199
    %v228 = vcvt.s32.f32 %v200
    %v229 = vcvt.s32.f32 %v201
    %v230 = vcvt.s32.f32 %v202
    %v231 = vcvt.s32.f32 %v203
    %v232 = vcvt.s32.f32 %v204
    %v233 = vcvt.s32.f32 %v205
    %v234 = vcvt.s32.f32 %v206
    %v235 = vlaneseq
    %v236 = vshrl.u32 %v235, 7
    %v237 = vadd.s32 %v236, 8
    %v238 = vadd.s32 %v236, 16
    %v239 = vadd.s32 %v236, 24
    %v240 = vadd.s32 %v236, 32
    %v241 = vadd.s32 %v236, 40
    %v242 = vadd.s32 %v236, 48
    %v243 = vadd.s32 %v236, 56
    %v244 = vadd.s32 %v236, 64
    %v245 = vadd.s32 %v236, 72
    %v246 = vadd.s32 %v236, 80
    %v247 = vadd.s32 %v236, 88
    %v248 = vadd.s32 %v236, 96
    %v249 = vadd.s32 %v236, 104
    %v250 = vadd.s32 %v236, 112
    %v251 = vadd.s32 %v236, 120
    %v252 = vadd.s32 %v236, 128
    %v253 = vadd.s32 %v236, 136
    %v254 = vadd.s32 %v236, 144
    %v255 = vadd.s32 %v236, 152
    %v256 = vadd.s32 %v236, 160
    %v257 = vadd.s32 %v236, 168
    %v258 = vadd.s32 %v236, 176
    %v259 = vadd.s32 %v236, 184
    %v260 = vadd.s32 %v236, 192
    %v261 = vadd.s32 %v236, 200
    %v262 = vadd.s32 %v236, 208
    %v263 = vadd.s32 %v236, 216
    %v264 = vld [vmem:[#allocation2] sm:$0xff]
    %v265 = vld [vmem:[#allocation2 + $0x8] sm:$0xff]
    %v266 = vld [vmem:[#allocation2 + $0x10] sm:$0xff]
    %v267 = vld [vmem:[#allocation2 + $0x18] sm:$0xff]
    %v268 = vld [vmem:[#allocation2 + $0x20] sm:$0xff]
    %v269 = vld [vmem:[#allocation2 + $0x28] sm:$0xff]
    %v270 = vld [vmem:[#allocation2 + $0x30] sm:$0xff]
    %v271 = vld [vmem:[#allocation2 + $0x38] sm:$0xff]
    %v272 = vld [vmem:[#allocation2 + $0x40] sm:$0xff]
    %v273 = vld [vmem:[#allocation2 + $0x48] sm:$0xff]
    %v274 = vld [vmem:[#allocation2 + $0x50] sm:$0xff]
    %v275 = vld [vmem:[#allocation2 + $0x58] sm:$0xff]
    %v276 = vld [vmem:[#allocation2 + $0x60] sm:$0xff]
    %v277 = vld [vmem:[#allocation2 + $0x68] sm:$0xff]
    %v278 = vld [vmem:[#allocation2 + $0x70] sm:$0xff]
    %v279 = vld [vmem:[#allocation2 + $0x78] sm:$0xff]
    %v280 = vld [vmem:[#allocation2 + $0x80] sm:$0xff]
    %v281 = vld [vmem:[#allocation2 + $0x88] sm:$0xff]
    %v282 = vld [vmem:[#allocation2 + $0x90] sm:$0xff]
    %v283 = vld [vmem:[#allocation2 + $0x98] sm:$0xff]
    %v284 = vld [vmem:[#allocation2 + $0xa0] sm:$0xff]
    %v285 = vld [vmem:[#allocation2 + $0xa8] sm:$0xff]
    %v286 = vld [vmem:[#allocation2 + $0xb0] sm:$0xff]
    %v287 = vld [vmem:[#allocation2 + $0xb8] sm:$0xff]
    %v288 = vld [vmem:[#allocation2 + $0xc0] sm:$0xff]
    %v289 = vld [vmem:[#allocation2 + $0xc8] sm:$0xff]
    %v290 = vld [vmem:[#allocation2 + $0xd0] sm:$0xff]
    %v291 = vld [vmem:[#allocation2 + $0xd8] sm:$0xff]
    %v292 = vld [vmem:[#allocation2 + $0xe0] sm:$0xff]
    %v293 = vld [vmem:[#allocation2 + $0xe8] sm:$0xff]
    %v294 = vld [vmem:[#allocation2 + $0xf0] sm:$0xff]
    %v295 = vld [vmem:[#allocation2 + $0xf8] sm:$0xff]
    %v296 = vld [vmem:[#allocation2 + $0x100] sm:$0xff]
    %v297 = vld [vmem:[#allocation2 + $0x108] sm:$0xff]
    %v298 = vld [vmem:[#allocation2 + $0x110] sm:$0xff]
    %v299 = vld [vmem:[#allocation2 + $0x118] sm:$0xff]
    %v300 = vld [vmem:[#allocation2 + $0x120] sm:$0xff]
    %v301 = vld [vmem:[#allocation2 + $0x128] sm:$0xff]
    %v302 = vld [vmem:[#allocation2 + $0x130] sm:$0xff]
    %v303 = vld [vmem:[#allocation2 + $0x138] sm:$0xff]
    %v304 = vld [vmem:[#allocation2 + $0x140] sm:$0xff]
    %v305 = vld [vmem:[#allocation2 + $0x148] sm:$0xff]
    %v306 = vld [vmem:[#allocation2 + $0x150] sm:$0xff]
    %v307 = vld [vmem:[#allocation2 + $0x158] sm:$0xff]
    %v308 = vld [vmem:[#allocation2 + $0x160] sm:$0xff]
    %v309 = vld [vmem:[#allocation2 + $0x168] sm:$0xff]
    %v310 = vld [vmem:[#allocation2 + $0x170] sm:$0xff]
    %v311 = vld [vmem:[#allocation2 + $0x178] sm:$0xff]
    %v312 = vld [vmem:[#allocation2 + $0x180] sm:$0xff]
    %v313 = vld [vmem:[#allocation2 + $0x188] sm:$0xff]
    %v314 = vld [vmem:[#allocation2 + $0x190] sm:$0xff]
    %v315 = vld [vmem:[#allocation2 + $0x198] sm:$0xff]
    %v316 = vld [vmem:[#allocation2 + $0x1a0] sm:$0xff]
    %v317 = vld [vmem:[#allocation2 + $0x1a8] sm:$0xff]
    %v318 = vld [vmem:[#allocation2 + $0x1b0] sm:$0xff]
    %v319 = vld [vmem:[#allocation2 + $0x1b8] sm:$0xff]
    %vm320 = vcmask 785408
    %v321 = vsel %vm320, %v265, 0.0
    %v322 = vadd.f32 %v264, %v321
    %v323 = vadd.f32 %v322, %v266
    %v324 = vsel %vm320, %v267, 0.0
    %v325 = vadd.f32 %v323, %v324
    %v326 = vadd.f32 %v325, %v268
    %v327 = vsel %vm320, %v269, 0.0
    %v328 = vadd.f32 %v326, %v327
    %v329 = vadd.f32 %v328, %v270
    %v330 = vsel %vm320, %v271, 0.0
    %v331 = vadd.f32 %v329, %v330
    %v332 = vadd.f32 %v331, %v272
    %v333 = vsel %vm320, %v273, 0.0
    %v334 = vadd.f32 %v332, %v333
    %v335 = vadd.f32 %v334, %v274
    %v336 = vsel %vm320, %v275, 0.0
    %v337 = vadd.f32 %v335, %v336
    %v338 = vadd.f32 %v337, %v276
    %v339 = vsel %vm320, %v277, 0.0
    %v340 = vadd.f32 %v338, %v339
    %v341 = vadd.f32 %v340, %v278
    %v342 = vsel %vm320, %v279, 0.0
    %v343 = vadd.f32 %v341, %v342
    %v344 = vadd.f32 %v343, %v280
    %v345 = vsel %vm320, %v281, 0.0
    %v346 = vadd.f32 %v344, %v345
    %v347 = vadd.f32 %v346, %v282
    %v348 = vsel %vm320, %v283, 0.0
    %v349 = vadd.f32 %v347, %v348
    %v350 = vadd.f32 %v349, %v284
    %v351 = vsel %vm320, %v285, 0.0
    %v352 = vadd.f32 %v350, %v351
    %v353 = vadd.f32 %v352, %v286
    %v354 = vsel %vm320, %v287, 0.0
    %v355 = vadd.f32 %v353, %v354
    %v356 = vadd.f32 %v355, %v288
    %v357 = vsel %vm320, %v289, 0.0
    %v358 = vadd.f32 %v356, %v357
    %v359 = vadd.f32 %v358, %v290
    %v360 = vsel %vm320, %v291, 0.0
    %v361 = vadd.f32 %v359, %v360
    %v362 = vadd.f32 %v361, %v292
    %v363 = vsel %vm320, %v293, 0.0
    %v364 = vadd.f32 %v362, %v363
    %v365 = vadd.f32 %v364, %v294
    %v366 = vsel %vm320, %v295, 0.0
    %v367 = vadd.f32 %v365, %v366
    %v368 = vadd.f32 %v367, %v296
    %v369 = vsel %vm320, %v297, 0.0
    %v370 = vadd.f32 %v368, %v369
    %v371 = vadd.f32 %v370, %v298
    %v372 = vsel %vm320, %v299, 0.0
    %v373 = vadd.f32 %v371, %v372
    %v374 = vadd.f32 %v373, %v300
    %v375 = vsel %vm320, %v301, 0.0
    %v376 = vadd.f32 %v374, %v375
    %v377 = vadd.f32 %v376, %v302
    %v378 = vsel %vm320, %v303, 0.0
    %v379 = vadd.f32 %v377, %v378
    %v380 = vadd.f32 %v379, %v304
    %v381 = vsel %vm320, %v305, 0.0
    %v382 = vadd.f32 %v380, %v381
    %v383 = vadd.f32 %v382, %v306
    %v384 = vsel %vm320, %v307, 0.0
    %v385 = vadd.f32 %v383, %v384
    %v386 = vadd.f32 %v385, %v308
    %v387 = vsel %vm320, %v309, 0.0
    %v388 = vadd.f32 %v386, %v387
    %v389 = vadd.f32 %v388, %v310
    %v390 = vsel %vm320, %v311, 0.0
    %v391 = vadd.f32 %v389, %v390
    %v392 = vadd.f32 %v391, %v312
    %v393 = vsel %vm320, %v313, 0.0
    %v394 = vadd.f32 %v392, %v393
    %v395 = vadd.f32 %v394, %v314
    %v396 = vsel %vm320, %v315, 0.0
    %v397 = vadd.f32 %v395, %v396
    %v398 = vadd.f32 %v397, %v316
    %v399 = vsel %vm320, %v317, 0.0
    %v400 = vadd.f32 %v398, %v399
    %v401 = vadd.f32 %v400, %v318
    %v402 = vsel %vm320, %v319, 0.0
    %v403 = vadd.f32 %v401, %v402
    %404 = vadd.xlane.f32.xlu0 %v403
    %v405 = vpop.xlane.xlu0 %404
    %v406 = vrot.slane %v405, 4
    %v407 = vadd.f32 %v405, %v406
    %v408 = vrot.slane %v407, 2
    %v409 = vadd.f32 %v407, %v408
    %v410 = vrot.slane %v409, 1
    %v411 = vadd.f32 %v409, %v410
    %s412 = vtos %v411
    %v413 = vmul.f32 %v264, %v264
    %v414 = vmul.f32 %v265, %v265
    %v415 = vmul.f32 %v266, %v266
    %v416 = vmul.f32 %v267, %v267
    %v417 = vmul.f32 %v268, %v268
    %v418 = vmul.f32 %v269, %v269
    %v419 = vmul.f32 %v270, %v270
    %v420 = vmul.f32 %v271, %v271
    %v421 = vmul.f32 %v272, %v272
    %v422 = vmul.f32 %v273, %v273
    %v423 = vmul.f32 %v274, %v274
    %v424 = vmul.f32 %v275, %v275
    %v425 = vmul.f32 %v276, %v276
    %v426 = vmul.f32 %v277, %v277
    %v427 = vmul.f32 %v278, %v278
    %v428 = vmul.f32 %v279, %v279
    %v429 = vmul.f32 %v280, %v280
    %v430 = vmul.f32 %v281, %v281
    %v431 = vmul.f32 %v282, %v282
    %v432 = vmul.f32 %v283, %v283
    %v433 = vmul.f32 %v284, %v284
    %v434 = vmul.f32 %v285, %v285
    %v435 = vmul.f32 %v286, %v286
    %v436 = vmul.f32 %v287, %v287
    %v437 = vmul.f32 %v288, %v288
    %v438 = vmul.f32 %v289, %v289
    %v439 = vmul.f32 %v290, %v290
    %v440 = vmul.f32 %v291, %v291
    %v441 = vmul.f32 %v292, %v292
    %v442 = vmul.f32 %v293, %v293
    %v443 = vmul.f32 %v294, %v294
    %v444 = vmul.f32 %v295, %v295
    %v445 = vmul.f32 %v296, %v296
    %v446 = vmul.f32 %v297, %v297
    %v447 = vmul.f32 %v298, %v298
    %v448 = vmul.f32 %v299, %v299
    %v449 = vmul.f32 %v300, %v300
    %v450 = vmul.f32 %v301, %v301
    %v451 = vmul.f32 %v302, %v302
    %v452 = vmul.f32 %v303, %v303
    %v453 = vmul.f32 %v304, %v304
    %v454 = vmul.f32 %v305, %v305
    %v455 = vmul.f32 %v306, %v306
    %v456 = vmul.f32 %v307, %v307
    %v457 = vmul.f32 %v308, %v308
    %v458 = vmul.f32 %v309, %v309
    %v459 = vmul.f32 %v310, %v310
    %v460 = vmul.f32 %v311, %v311
    %v461 = vmul.f32 %v312, %v312
    %v462 = vmul.f32 %v313, %v313
    %v463 = vmul.f32 %v314, %v314
    %v464 = vmul.f32 %v315, %v315
    %v465 = vmul.f32 %v316, %v316
    %v466 = vmul.f32 %v317, %v317
    %v467 = vmul.f32 %v318, %v318
    %v468 = vmul.f32 %v319, %v319
    %v469 = vsel %vm320, %v414, 0.0
    %v470 = vadd.f32 %v413, %v469
    %v471 = vadd.f32 %v470, %v415
    %v472 = vsel %vm320, %v416, 0.0
    %v473 = vadd.f32 %v471, %v472
    %v474 = vadd.f32 %v473, %v417
    %v475 = vsel %vm320, %v418, 0.0
    %v476 = vadd.f32 %v474, %v475
    %v477 = vadd.f32 %v476, %v419
    %v478 = vsel %vm320, %v420, 0.0
    %v479 = vadd.f32 %v477, %v478
    %v480 = vadd.f32 %v479, %v421
    %v481 = vsel %vm320, %v422, 0.0
    %v482 = vadd.f32 %v480, %v481
    %v483 = vadd.f32 %v482, %v423
    %v484 = vsel %vm320, %v424, 0.0
    %v485 = vadd.f32 %v483, %v484
    %v486 = vadd.f32 %v485, %v425
    %v487 = vsel %vm320, %v426, 0.0
    %v488 = vadd.f32 %v486, %v487
    %v489 = vadd.f32 %v488, %v427
    %v490 = vsel %vm320, %v428, 0.0
    %v491 = vadd.f32 %v489, %v490
    %v492 = vadd.f32 %v491, %v429
    %v493 = vsel %vm320, %v430, 0.0
    %v494 = vadd.f32 %v492, %v493
    %v495 = vadd.f32 %v494, %v431
    %v496 = vsel %vm320, %v432, 0.0
    %v497 = vadd.f32 %v495, %v496
    %v498 = vadd.f32 %v497, %v433
    %v499 = vsel %vm320, %v434, 0.0
    %v500 = vadd.f32 %v498, %v499
    %v501 = vadd.f32 %v500, %v435
    %v502 = vsel %vm320, %v436, 0.0
    %v503 = vadd.f32 %v501, %v502
    %v504 = vadd.f32 %v503, %v437
    %v505 = vsel %vm320, %v438, 0.0
    %v506 = vadd.f32 %v504, %v505
    %v507 = vadd.f32 %v506, %v439
    %v508 = vsel %vm320, %v440, 0.0
    %v509 = vadd.f32 %v507, %v508
    %v510 = vadd.f32 %v509, %v441
    %v511 = vsel %vm320, %v442, 0.0
    %v512 = vadd.f32 %v510, %v511
    %v513 = vadd.f32 %v512, %v443
    %v514 = vsel %vm320, %v444, 0.0
    %v515 = vadd.f32 %v513, %v514
    %v516 = vadd.f32 %v515, %v445
    %v517 = vsel %vm320, %v446, 0.0
    %v518 = vadd.f32 %v516, %v517
    %v519 = vadd.f32 %v518, %v447
    %v520 = vsel %vm320, %v448, 0.0
    %v521 = vadd.f32 %v519, %v520
    %v522 = vadd.f32 %v521, %v449
    %v523 = vsel %vm320, %v450, 0.0
    %v524 = vadd.f32 %v522, %v523
    %v525 = vadd.f32 %v524, %v451
    %v526 = vsel %vm320, %v452, 0.0
    %v527 = vadd.f32 %v525, %v526
    %v528 = vadd.f32 %v527, %v453
    %v529 = vsel %vm320, %v454, 0.0
    %v530 = vadd.f32 %v528, %v529
    %v531 = vadd.f32 %v530, %v455
    %v532 = vsel %vm320, %v456, 0.0
    %v533 = vadd.f32 %v531, %v532
    %v534 = vadd.f32 %v533, %v457
    %v535 = vsel %vm320, %v458, 0.0
    %v536 = vadd.f32 %v534, %v535
    %v537 = vadd.f32 %v536, %v459
    %v538 = vsel %vm320, %v460, 0.0
    %v539 = vadd.f32 %v537, %v538
    %v540 = vadd.f32 %v539, %v461
    %v541 = vsel %vm320, %v462, 0.0
    %v542 = vadd.f32 %v540, %v541
    %v543 = vadd.f32 %v542, %v463
    %v544 = vsel %vm320, %v464, 0.0
    %v545 = vadd.f32 %v543, %v544
    %v546 = vadd.f32 %v545, %v465
    %v547 = vsel %vm320, %v466, 0.0
    %v548 = vadd.f32 %v546, %v547
    %v549 = vadd.f32 %v548, %v467
    %v550 = vsel %vm320, %v468, 0.0
    %v551 = vadd.f32 %v549, %v550
    %552 = vadd.xlane.f32.xlu0 %v551
    %v553 = vpop.xlane.xlu0 %552
    %v554 = vrot.slane %v553, 4
    %v555 = vadd.f32 %v553, %v554
    %v556 = vrot.slane %v555, 2
    %v557 = vadd.f32 %v555, %v556
    %v558 = vrot.slane %v557, 1
    %v559 = vadd.f32 %v557, %v558
    %s560 = vtos %v559
    %s561 = smul.f32 %s412, 1.9929847e-05
    %s562 = smul.f32 %s560, 1.9929847e-05
    %s563 = smul.f32 %s561, %s561
    %s564 = ssub.f32 %s562, %s563
    %s565 = sadd.f32 %s564, 1e-05
    %v566 = vstv %s565
    %v567 = vrsqrt.pop %v566
    %v568 = vmul.f32 %v567, %v566
    %v569 = vmul.f32 %v568, %v567
    %v570 = vmul.f32 0.5, %v569
    %v571 = vsub.f32 1.5, %v570
    %v572 = vmul.f32 %v567, %v571
    %vm573 = vweird.f32 %v566
    %vm574 = vweird.f32 %v567
    %vm575 = vmor %vm573, %vm574
    %v576 = vsel %vm575, %v567, %v572
    %s577 = vtos %v576
    %s578 = sld [smem:[#allocation8]]
    %s579 = smul.f32 %s577, %s578
    %s580 = sld [smem:[#allocation9]]
    %s581 = smul.f32 %s561, %s579
    %s582 = ssub.f32 %s580, %s581
    %v584 = vsel %vm320, %v208, 0
    %v587 = vsel %vm320, %v210, 0
    %v590 = vsel %vm320, %v212, 0
    %v593 = vsel %vm320, %v214, 0
    %v596 = vsel %vm320, %v216, 0
    %v599 = vsel %vm320, %v218, 0
    %v602 = vsel %vm320, %v220, 0
    %v605 = vsel %vm320, %v222, 0
    %v608 = vsel %vm320, %v224, 0
    %v611 = vsel %vm320, %v226, 0
    %v614 = vsel %vm320, %v228, 0
    %v617 = vsel %vm320, %v230, 0
    %v620 = vsel %vm320, %v232, 0
    %v623 = vsel %vm320, %v234, 0
    %625 = vmatpush.msra.mxu0 %v294
    %626 = vmatpush.msra.mxu0 %v292
    %627 = vmatpush.msra.mxu0 %v290
    %628 = vmatpush.msra.mxu0 %v288
    %629 = vmatpush.msra.mxu0 %v286
    %630 = vmatpush.msra.mxu0 %v284
    %631 = vmatpush.msra.mxu0 %v282
    %632 = vmatpush.msra.mxu0 %v280
    %633 = vmatpush.msra.mxu0 %v278
    %634 = vmatpush.msra.mxu0 %v276
    %635 = vmatpush.msra.mxu0 %v274
    %636 = vmatpush.msra.mxu0 %v272
    %637 = vmatpush.msra.mxu0 %v270
    %638 = vmatpush.msra.mxu0 %v268
    %639 = vmatpush.msra.mxu0 %v266
    %640 = vmatpush.msra.mxu0 %v264
    %641 = vmatmul.f32.gmra.mxu0 %v207
    %v642 = vpop.f32.mrf.mxu0
    %v643 = vadd.f32 0.0, %v642
    %644 = vmatmul.f32.gmra.mxu0 %v209
    %v645 = vpop.f32.mrf.mxu0
    %v646 = vadd.f32 0.0, %v645
    %647 = vmatmul.f32.gmra.mxu0 %v211
    %v648 = vpop.f32.mrf.mxu0
    %v649 = vadd.f32 0.0, %v648
    %650 = vmatmul.f32.gmra.mxu0 %v213
    %v651 = vpop.f32.mrf.mxu0
    %v652 = vadd.f32 0.0, %v651
    %653 = vmatmul.f32.gmra.mxu0 %v215
    %v654 = vpop.f32.mrf.mxu0
    %v655 = vadd.f32 0.0, %v654
    %656 = vmatmul.f32.gmra.mxu0 %v217
    %v657 = vpop.f32.mrf.mxu0
    %v658 = vadd.f32 0.0, %v657
    %659 = vmatmul.f32.gmra.mxu0 %v219
    %v660 = vpop.f32.mrf.mxu0
    %v661 = vadd.f32 0.0, %v660
    %662 = vmatmul.f32.gmra.mxu0 %v221
    %v663 = vpop.f32.mrf.mxu0
    %v664 = vadd.f32 0.0, %v663
    %665 = vmatmul.f32.gmra.mxu0 %v223
    %v666 = vpop.f32.mrf.mxu0
    %v667 = vadd.f32 0.0, %v666
    %668 = vmatmul.f32.gmra.mxu0 %v225
    %v669 = vpop.f32.mrf.mxu0
    %v670 = vadd.f32 0.0, %v669
    %671 = vmatmul.f32.gmra.mxu0 %v227
    %v672 = vpop.f32.mrf.mxu0
    %v673 = vadd.f32 0.0, %v672
    %674 = vmatmul.f32.gmra.mxu0 %v229
    %v675 = vpop.f32.mrf.mxu0
    %v676 = vadd.f32 0.0, %v675
    %677 = vmatmul.f32.gmra.mxu0 %v231
    %v678 = vpop.f32.mrf.mxu0
    %v679 = vadd.f32 0.0, %v678
    %680 = vmatmul.f32.gmra.mxu0 %v233
    %v681 = vpop.f32.mrf.mxu0
    %v682 = vadd.f32 0.0, %v681
    %683 = vdwg.mxu0
    %684 = vmatpush.msra.mxu0 0.0
    %685 = vmatpush.msra.mxu0 0.0
    %686 = vmatpush.msra.mxu0 0.0
    %687 = vmatpush.msra.mxu0 0.0
    %688 = vmatpush.msra.mxu0 %v318
    %689 = vmatpush.msra.mxu0 %v316
    %690 = vmatpush.msra.mxu0 %v314
    %691 = vmatpush.msra.mxu0 %v312
    %692 = vmatpush.msra.mxu0 %v310
    %693 = vmatpush.msra.mxu0 %v308
    %694 = vmatpush.msra.mxu0 %v306
    %695 = vmatpush.msra.mxu0 %v304
    %696 = vmatpush.msra.mxu0 %v302
    %697 = vmatpush.msra.mxu0 %v300
    %698 = vmatpush.msra.mxu0 %v298
    %699 = vmatpush.msra.mxu0 %v296
    %700 = vmatmul.f32.gmra.mxu0 %v584
    %v701 = vpop.f32.mrf.mxu0
    %v702 = vadd.f32 %v643, %v701
    %703 = vmatmul.f32.gmra.mxu0 %v587
    %v704 = vpop.f32.mrf.mxu0
    %v705 = vadd.f32 %v646, %v704
    %706 = vmatmul.f32.gmra.mxu0 %v590
    %v707 = vpop.f32.mrf.mxu0
    %v708 = vadd.f32 %v649, %v707
    %709 = vmatmul.f32.gmra.mxu0 %v593
    %v710 = vpop.f32.mrf.mxu0
    %v711 = vadd.f32 %v652, %v710
    %712 = vmatmul.f32.gmra.mxu0 %v596
    %v713 = vpop.f32.mrf.mxu0
    %v714 = vadd.f32 %v655, %v713
    %715 = vmatmul.f32.gmra.mxu0 %v599
    %v716 = vpop.f32.mrf.mxu0
    %v717 = vadd.f32 %v658, %v716
    %718 = vmatmul.f32.gmra.mxu0 %v602
    %v719 = vpop.f32.mrf.mxu0
    %v720 = vadd.f32 %v661, %v719
    %721 = vmatmul.f32.gmra.mxu0 %v605
    %v722 = vpop.f32.mrf.mxu0
    %v723 = vadd.f32 %v664, %v722
    %724 = vmatmul.f32.gmra.mxu0 %v608
    %v725 = vpop.f32.mrf.mxu0
    %v726 = vadd.f32 %v667, %v725
    %727 = vmatmul.f32.gmra.mxu0 %v611
    %v728 = vpop.f32.mrf.mxu0
    %v729 = vadd.f32 %v670, %v728
    %730 = vmatmul.f32.gmra.mxu0 %v614
    %v731 = vpop.f32.mrf.mxu0
    %v732 = vadd.f32 %v673, %v731
    %733 = vmatmul.f32.gmra.mxu0 %v617
    %v734 = vpop.f32.mrf.mxu0
    %v735 = vadd.f32 %v676, %v734
    %736 = vmatmul.f32.gmra.mxu0 %v620
    %v737 = vpop.f32.mrf.mxu0
    %v738 = vadd.f32 %v679, %v737
    %739 = vmatmul.f32.gmra.mxu0 %v623
    %v740 = vpop.f32.mrf.mxu0
    %v741 = vadd.f32 %v682, %v740
    %742 = vdwg.mxu0
    %743 = vmatpush.msra.mxu0 %v295
    %744 = vmatpush.msra.mxu0 %v293
    %745 = vmatpush.msra.mxu0 %v291
    %746 = vmatpush.msra.mxu0 %v289
    %747 = vmatpush.msra.mxu0 %v287
    %748 = vmatpush.msra.mxu0 %v285
    %749 = vmatpush.msra.mxu0 %v283
    %750 = vmatpush.msra.mxu0 %v281
    %751 = vmatpush.msra.mxu0 %v279
    %752 = vmatpush.msra.mxu0 %v277
    %753 = vmatpush.msra.mxu0 %v275
    %754 = vmatpush.msra.mxu0 %v273
    %755 = vmatpush.msra.mxu0 %v271
    %756 = vmatpush.msra.mxu0 %v269
    %757 = vmatpush.msra.mxu0 %v267
    %758 = vmatpush.msra.mxu0 %v265
    %759 = vmatmul.f32.gmra.mxu0 %v207
    %v760 = vpop.f32.mrf.mxu0
    %v761 = vadd.f32 0.0, %v760
    %762 = vmatmul.f32.gmra.mxu0 %v209
    %v763 = vpop.f32.mrf.mxu0
    %v764 = vadd.f32 0.0, %v763
    %765 = vmatmul.f32.gmra.mxu0 %v211
    %v766 = vpop.f32.mrf.mxu0
    %v767 = vadd.f32 0.0, %v766
    %768 = vmatmul.f32.gmra.mxu0 %v213
    %v769 = vpop.f32.mrf.mxu0
    %v770 = vadd.f32 0.0, %v769
    %771 = vmatmul.f32.gmra.mxu0 %v215
    %v772 = vpop.f32.mrf.mxu0
    %v773 = vadd.f32 0.0, %v772
    %774 = vmatmul.f32.gmra.mxu0 %v217
    %v775 = vpop.f32.mrf.mxu0
    %v776 = vadd.f32 0.0, %v775
    %777 = vmatmul.f32.gmra.mxu0 %v219
    %v778 = vpop.f32.mrf.mxu0
    %v779 = vadd.f32 0.0, %v778
    %780 = vmatmul.f32.gmra.mxu0 %v221
    %v781 = vpop.f32.mrf.mxu0
    %v782 = vadd.f32 0.0, %v781
    %783 = vmatmul.f32.gmra.mxu0 %v223
    %v784 = vpop.f32.mrf.mxu0
    %v785 = vadd.f32 0.0, %v784
    %786 = vmatmul.f32.gmra.mxu0 %v225
    %v787 = vpop.f32.mrf.mxu0
    %v788 = vadd.f32 0.0, %v787
    %789 = vmatmul.f32.gmra.mxu0 %v227
    %v790 = vpop.f32.mrf.mxu0
    %v791 = vadd.f32 0.0, %v790
    %792 = vmatmul.f32.gmra.mxu0 %v229
    %v793 = vpop.f32.mrf.mxu0
    %v794 = vadd.f32 0.0, %v793
    %795 = vmatmul.f32.gmra.mxu0 %v231
    %v796 = vpop.f32.mrf.mxu0
    %v797 = vadd.f32 0.0, %v796
    %798 = vmatmul.f32.gmra.mxu0 %v233
    %v799 = vpop.f32.mrf.mxu0
    %v800 = vadd.f32 0.0, %v799
    %801 = vdwg.mxu0
    %802 = vmatpush.msra.mxu0 0.0
    %803 = vmatpush.msra.mxu0 0.0
    %804 = vmatpush.msra.mxu0 0.0
    %805 = vmatpush.msra.mxu0 0.0
    %806 = vmatpush.msra.mxu0 %v319
    %807 = vmatpush.msra.mxu0 %v317
    %808 = vmatpush.msra.mxu0 %v315
    %809 = vmatpush.msra.mxu0 %v313
    %810 = vmatpush.msra.mxu0 %v311
    %811 = vmatpush.msra.mxu0 %v309
    %812 = vmatpush.msra.mxu0 %v307
    %813 = vmatpush.msra.mxu0 %v305
    %814 = vmatpush.msra.mxu0 %v303
    %815 = vmatpush.msra.mxu0 %v301
    %816 = vmatpush.msra.mxu0 %v299
    %817 = vmatpush.msra.mxu0 %v297
    %818 = vmatmul.f32.gmra.mxu0 %v584
    %v819 = vpop.f32.mrf.mxu0
    %v820 = vadd.f32 %v761, %v819
    %821 = vmatmul.f32.gmra.mxu0 %v587
    %v822 = vpop.f32.mrf.mxu0
    %v823 = vadd.f32 %v764, %v822
    %824 = vmatmul.f32.gmra.mxu0 %v590
    %v825 = vpop.f32.mrf.mxu0
    %v826 = vadd.f32 %v767, %v825
    %827 = vmatmul.f32.gmra.mxu0 %v593
    %v828 = vpop.f32.mrf.mxu0
    %v829 = vadd.f32 %v770, %v828
    %830 = vmatmul.f32.gmra.mxu0 %v596
    %v831 = vpop.f32.mrf.mxu0
    %v832 = vadd.f32 %v773, %v831
    %833 = vmatmul.f32.gmra.mxu0 %v599
    %v834 = vpop.f32.mrf.mxu0
    %v835 = vadd.f32 %v776, %v834
    %836 = vmatmul.f32.gmra.mxu0 %v602
    %v837 = vpop.f32.mrf.mxu0
    %v838 = vadd.f32 %v779, %v837
    %839 = vmatmul.f32.gmra.mxu0 %v605
    %v840 = vpop.f32.mrf.mxu0
    %v841 = vadd.f32 %v782, %v840
    %842 = vmatmul.f32.gmra.mxu0 %v608
    %v843 = vpop.f32.mrf.mxu0
    %v844 = vadd.f32 %v785, %v843
    %845 = vmatmul.f32.gmra.mxu0 %v611
    %v846 = vpop.f32.mrf.mxu0
    %v847 = vadd.f32 %v788, %v846
    %848 = vmatmul.f32.gmra.mxu0 %v614
    %v849 = vpop.f32.mrf.mxu0
    %v850 = vadd.f32 %v791, %v849
    %851 = vmatmul.f32.gmra.mxu0 %v617
    %v852 = vpop.f32.mrf.mxu0
    %v853 = vadd.f32 %v794, %v852
    %854 = vmatmul.f32.gmra.mxu0 %v620
    %v855 = vpop.f32.mrf.mxu0
    %v856 = vadd.f32 %v797, %v855
    %857 = vmatmul.f32.gmra.mxu0 %v623
    %v858 = vpop.f32.mrf.mxu0
    %v859 = vadd.f32 %v800, %v858
    %860 = vdwg.mxu0
    %v861 = vstv %s579
    %v862 = vmul.f32 %v702, %v861
    %v863 = vmul.f32 %v820, %v861
    %v864 = vmul.f32 %v705, %v861
    %v865 = vmul.f32 %v823, %v861
    %v866 = vmul.f32 %v708, %v861
    %v867 = vmul.f32 %v826, %v861
    %v868 = vmul.f32 %v711, %v861
    %v869 = vmul.f32 %v829, %v861
    %v870 = vmul.f32 %v714, %v861
    %v871 = vmul.f32 %v832, %v861
    %v872 = vmul.f32 %v717, %v861
    %v873 = vmul.f32 %v835, %v861
    %v874 = vmul.f32 %v720, %v861
    %v875 = vmul.f32 %v838, %v861
    %v876 = vmul.f32 %v723, %v861
    %v877 = vmul.f32 %v841, %v861
    %v878 = vmul.f32 %v726, %v861
    %v879 = vmul.f32 %v844, %v861
    %v880 = vmul.f32 %v729, %v861
    %v881 = vmul.f32 %v847, %v861
    %v882 = vmul.f32 %v732, %v861
    %v883 = vmul.f32 %v850, %v861
    %v884 = vmul.f32 %v735, %v861
    %v885 = vmul.f32 %v853, %v861
    %v886 = vmul.f32 %v738, %v861
    %v887 = vmul.f32 %v856, %v861
    %v888 = vmul.f32 %v741, %v861
    %v889 = vmul.f32 %v859, %v861
    %v890 = vstv %s582
    %v891 = vadd.f32 %v862, %v890
    %v892 = vadd.f32 %v863, %v890
    %v893 = vadd.f32 %v864, %v890
    %v894 = vadd.f32 %v865, %v890
    %v895 = vadd.f32 %v866, %v890
    %v896 = vadd.f32 %v867, %v890
    %v897 = vadd.f32 %v868, %v890
    %v898 = vadd.f32 %v869, %v890
    %v899 = vadd.f32 %v870, %v890
    %v900 = vadd.f32 %v871, %v890
    %v901 = vadd.f32 %v872, %v890
    %v902 = vadd.f32 %v873, %v890
    %v903 = vadd.f32 %v874, %v890
    %v904 = vadd.f32 %v875, %v890
    %v905 = vadd.f32 %v876, %v890
    %v906 = vadd.f32 %v877, %v890
    %v907 = vadd.f32 %v878, %v890
    %v908 = vadd.f32 %v879, %v890
    %v909 = vadd.f32 %v880, %v890
    %v910 = vadd.f32 %v881, %v890
    %v911 = vadd.f32 %v882, %v890
    %v912 = vadd.f32 %v883, %v890
    %v913 = vadd.f32 %v884, %v890
    %v914 = vadd.f32 %v885, %v890
    %v915 = vadd.f32 %v886, %v890
    %v916 = vadd.f32 %v887, %v890
    %v917 = vadd.f32 %v888, %v890
    %v918 = vadd.f32 %v889, %v890
    %v919 = vld [vmem:[#allocation7] sm:$0x7]
    %v920 = vperm.slane %v919, 0
    %v921 = vperm.slane %v919, 1
    %v922 = vperm.slane %v919, 2
    %vm923 = vcmp.eq.s32.totalorder %v236, %v920
    %vm924 = vcmp.eq.s32.totalorder %v236, %v921
    %vm925 = vcmp.eq.s32.totalorder %v236, %v922
    %vm926 = vcmp.eq.s32.totalorder %v237, %v920
    %vm927 = vcmp.eq.s32.totalorder %v237, %v921
    %vm928 = vcmp.eq.s32.totalorder %v237, %v922
    %vm929 = vcmp.eq.s32.totalorder %v238, %v920
    %vm930 = vcmp.eq.s32.totalorder %v238, %v921
    %vm931 = vcmp.eq.s32.totalorder %v238, %v922
    %vm932 = vcmp.eq.s32.totalorder %v239, %v920
    %vm933 = vcmp.eq.s32.totalorder %v239, %v921
    %vm934 = vcmp.eq.s32.totalorder %v239, %v922
    %vm935 = vcmp.eq.s32.totalorder %v240, %v920
    %vm936 = vcmp.eq.s32.totalorder %v240, %v921
    %vm937 = vcmp.eq.s32.totalorder %v240, %v922
    %vm938 = vcmp.eq.s32.totalorder %v241, %v920
    %vm939 = vcmp.eq.s32.totalorder %v241, %v921
    %vm940 = vcmp.eq.s32.totalorder %v241, %v922
    %vm941 = vcmp.eq.s32.totalorder %v242, %v920
    %vm942 = vcmp.eq.s32.totalorder %v242, %v921
    %vm943 = vcmp.eq.s32.totalorder %v242, %v922
    %vm944 = vcmp.eq.s32.totalorder %v243, %v920
    %vm945 = vcmp.eq.s32.totalorder %v243, %v921
    %vm946 = vcmp.eq.s32.totalorder %v243, %v922
    %vm947 = vcmp.eq.s32.totalorder %v244, %v920
    %vm948 = vcmp.eq.s32.totalorder %v244, %v921
    %vm949 = vcmp.eq.s32.totalorder %v244, %v922
    %vm950 = vcmp.eq.s32.totalorder %v245, %v920
    %vm951 = vcmp.eq.s32.totalorder %v245, %v921
    %vm952 = vcmp.eq.s32.totalorder %v245, %v922
    %vm953 = vcmp.eq.s32.totalorder %v246, %v920
    %vm954 = vcmp.eq.s32.totalorder %v246, %v921
    %vm955 = vcmp.eq.s32.totalorder %v246, %v922
    %vm956 = vcmp.eq.s32.totalorder %v247, %v920
    %vm957 = vcmp.eq.s32.totalorder %v247, %v921
    %vm958 = vcmp.eq.s32.totalorder %v247, %v922
    %vm959 = vcmp.eq.s32.totalorder %v248, %v920
    %vm960 = vcmp.eq.s32.totalorder %v248, %v921
    %vm961 = vcmp.eq.s32.totalorder %v248, %v922
    %vm962 = vcmp.eq.s32.totalorder %v249, %v920
    %vm963 = vcmp.eq.s32.totalorder %v249, %v921
    %vm964 = vcmp.eq.s32.totalorder %v249, %v922
    %vm965 = vcmp.eq.s32.totalorder %v250, %v920
    %vm966 = vcmp.eq.s32.totalorder %v250, %v921
    %vm967 = vcmp.eq.s32.totalorder %v250, %v922
    %vm968 = vcmp.eq.s32.totalorder %v251, %v920
    %vm969 = vcmp.eq.s32.totalorder %v251, %v921
    %vm970 = vcmp.eq.s32.totalorder %v251, %v922
    %vm971 = vcmp.eq.s32.totalorder %v252, %v920
    %vm972 = vcmp.eq.s32.totalorder %v252, %v921
    %vm973 = vcmp.eq.s32.totalorder %v252, %v922
    %vm974 = vcmp.eq.s32.totalorder %v253, %v920
    %vm975 = vcmp.eq.s32.totalorder %v253, %v921
    %vm976 = vcmp.eq.s32.totalorder %v253, %v922
    %vm977 = vcmp.eq.s32.totalorder %v254, %v920
    %vm978 = vcmp.eq.s32.totalorder %v254, %v921
    %vm979 = vcmp.eq.s32.totalorder %v254, %v922
    %vm980 = vcmp.eq.s32.totalorder %v255, %v920
    %vm981 = vcmp.eq.s32.totalorder %v255, %v921
    %vm982 = vcmp.eq.s32.totalorder %v255, %v922
    %vm983 = vcmp.eq.s32.totalorder %v256, %v920
    %vm984 = vcmp.eq.s32.totalorder %v256, %v921
    %vm985 = vcmp.eq.s32.totalorder %v256, %v922
    %vm986 = vcmp.eq.s32.totalorder %v257, %v920
    %vm987 = vcmp.eq.s32.totalorder %v257, %v921
    %vm988 = vcmp.eq.s32.totalorder %v257, %v922
    %vm989 = vcmp.eq.s32.totalorder %v258, %v920
    %vm990 = vcmp.eq.s32.totalorder %v258, %v921
    %vm991 = vcmp.eq.s32.totalorder %v258, %v922
    %vm992 = vcmp.eq.s32.totalorder %v259, %v920
    %vm993 = vcmp.eq.s32.totalorder %v259, %v921
    %vm994 = vcmp.eq.s32.totalorder %v259, %v922
    %vm995 = vcmp.eq.s32.totalorder %v260, %v920
    %vm996 = vcmp.eq.s32.totalorder %v260, %v921
    %vm997 = vcmp.eq.s32.totalorder %v260, %v922
    %vm998 = vcmp.eq.s32.totalorder %v261, %v920
    %vm999 = vcmp.eq.s32.totalorder %v261, %v921
    %vm1000 = vcmp.eq.s32.totalorder %v261, %v922
    %vm1001 = vcmp.eq.s32.totalorder %v262, %v920
    %vm1002 = vcmp.eq.s32.totalorder %v262, %v921
    %vm1003 = vcmp.eq.s32.totalorder %v262, %v922
    %vm1004 = vcmp.eq.s32.totalorder %v263, %v920
    %vm1005 = vcmp.eq.s32.totalorder %v263, %v921
    %vm1006 = vcmp.eq.s32.totalorder %v263, %v922
    %v1007 = vsel %vm923, 1, 0
    %v1008 = vsel %vm924, 1, 0
    %v1009 = vsel %vm925, 1, 0
    %v1010 = vsel %vm926, 1, 0
    %v1011 = vsel %vm927, 1, 0
    %v1012 = vsel %vm928, 1, 0
    %v1013 = vsel %vm929, 1, 0
    %v1014 = vsel %vm930, 1, 0
    %v1015 = vsel %vm931, 1, 0
    %v1016 = vsel %vm932, 1, 0
    %v1017 = vsel %vm933, 1, 0
    %v1018 = vsel %vm934, 1, 0
    %v1019 = vsel %vm935, 1, 0
    %v1020 = vsel %vm936, 1, 0
    %v1021 = vsel %vm937, 1, 0
    %v1022 = vsel %vm938, 1, 0
    %v1023 = vsel %vm939, 1, 0
    %v1024 = vsel %vm940, 1, 0
    %v1025 = vsel %vm941, 1, 0
    %v1026 = vsel %vm942, 1, 0
    %v1027 = vsel %vm943, 1, 0
    %v1028 = vsel %vm944, 1, 0
    %v1029 = vsel %vm945, 1, 0
    %v1030 = vsel %vm946, 1, 0
    %v1031 = vsel %vm947, 1, 0
    %v1032 = vsel %vm948, 1, 0
    %v1033 = vsel %vm949, 1, 0
    %v1034 = vsel %vm950, 1, 0
    %v1035 = vsel %vm951, 1, 0
    %v1036 = vsel %vm952, 1, 0
    %v1037 = vsel %vm953, 1, 0
    %v1038 = vsel %vm954, 1, 0
    %v1039 = vsel %vm955, 1, 0
    %v1040 = vsel %vm956, 1, 0
    %v1041 = vsel %vm957, 1, 0
    %v1042 = vsel %vm958, 1, 0
    %v1043 = vsel %vm959, 1, 0
    %v1044 = vsel %vm960, 1, 0
    %v1045 = vsel %vm961, 1, 0
    %v1046 = vsel %vm962, 1, 0
    %v1047 = vsel %vm963, 1, 0
    %v1048 = vsel %vm964, 1, 0
    %v1049 = vsel %vm965, 1, 0
    %v1050 = vsel %vm966, 1, 0
    %v1051 = vsel %vm967, 1, 0
    %v1052 = vsel %vm968, 1, 0
    %v1053 = vsel %vm969, 1, 0
    %v1054 = vsel %vm970, 1, 0
    %v1055 = vsel %vm971, 1, 0
    %v1056 = vsel %vm972, 1, 0
    %v1057 = vsel %vm973, 1, 0
    %v1058 = vsel %vm974, 1, 0
    %v1059 = vsel %vm975, 1, 0
    %v1060 = vsel %vm976, 1, 0
    %v1061 = vsel %vm977, 1, 0
    %v1062 = vsel %vm978, 1, 0
    %v1063 = vsel %vm979, 1, 0
    %v1064 = vsel %vm980, 1, 0
    %v1065 = vsel %vm981, 1, 0
    %v1066 = vsel %vm982, 1, 0
    %v1067 = vsel %vm983, 1, 0
    %v1068 = vsel %vm984, 1, 0
    %v1069 = vsel %vm985, 1, 0
    %v1070 = vsel %vm986, 1, 0
    %v1071 = vsel %vm987, 1, 0
    %v1072 = vsel %vm988, 1, 0
    %v1073 = vsel %vm989, 1, 0
    %v1074 = vsel %vm990, 1, 0
    %v1075 = vsel %vm991, 1, 0
    %v1076 = vsel %vm992, 1, 0
    %v1077 = vsel %vm993, 1, 0
    %v1078 = vsel %vm994, 1, 0
    %v1079 = vsel %vm995, 1, 0
    %v1080 = vsel %vm996, 1, 0
    %v1081 = vsel %vm997, 1, 0
    %v1082 = vsel %vm998, 1, 0
    %v1083 = vsel %vm999, 1, 0
    %v1084 = vsel %vm1000, 1, 0
    %v1085 = vsel %vm1001, 1, 0
    %v1086 = vsel %vm1002, 1, 0
    %v1087 = vsel %vm1003, 1, 0
    %v1088 = vsel %vm1004, 1, 0
    %v1089 = vsel %vm1005, 1, 0
    %v1090 = vsel %vm1006, 1, 0
    %v1091 = vcvt.s32.f32 %v1007
    %v1092 = vcvt.s32.f32 %v1008
    %v1093 = vcvt.s32.f32 %v1009
    %v1094 = vcvt.s32.f32 %v1010
    %v1095 = vcvt.s32.f32 %v1011
    %v1096 = vcvt.s32.f32 %v1012
    %v1097 = vcvt.s32.f32 %v1013
    %v1098 = vcvt.s32.f32 %v1014
    %v1099 = vcvt.s32.f32 %v1015
    %v1100 = vcvt.s32.f32 %v1016
    %v1101 = vcvt.s32.f32 %v1017
    %v1102 = vcvt.s32.f32 %v1018
    %v1103 = vcvt.s32.f32 %v1019
    %v1104 = vcvt.s32.f32 %v1020
    %v1105 = vcvt.s32.f32 %v1021
    %v1106 = vcvt.s32.f32 %v1022
    %v1107 = vcvt.s32.f32 %v1023
    %v1108 = vcvt.s32.f32 %v1024
    %v1109 = vcvt.s32.f32 %v1025
    %v1110 = vcvt.s32.f32 %v1026
    %v1111 = vcvt.s32.f32 %v1027
    %v1112 = vcvt.s32.f32 %v1028
    %v1113 = vcvt.s32.f32 %v1029
    %v1114 = vcvt.s32.f32 %v1030
    %v1115 = vcvt.s32.f32 %v1031
    %v1116 = vcvt.s32.f32 %v1032
    %v1117 = vcvt.s32.f32 %v1033
    %v1118 = vcvt.s32.f32 %v1034
    %v1119 = vcvt.s32.f32 %v1035
    %v1120 = vcvt.s32.f32 %v1036
    %v1121 = vcvt.s32.f32 %v1037
    %v1122 = vcvt.s32.f32 %v1038
    %v1123 = vcvt.s32.f32 %v1039
    %v1124 = vcvt.s32.f32 %v1040
    %v1125 = vcvt.s32.f32 %v1041
    %v1126 = vcvt.s32.f32 %v1042
    %v1127 = vcvt.s32.f32 %v1043
    %v1128 = vcvt.s32.f32 %v1044
    %v1129 = vcvt.s32.f32 %v1045
    %v1130 = vcvt.s32.f32 %v1046
    %v1131 = vcvt.s32.f32 %v1047
    %v1132 = vcvt.s32.f32 %v1048
    %v1133 = vcvt.s32.f32 %v1049
    %v1134 = vcvt.s32.f32 %v1050
    %v1135 = vcvt.s32.f32 %v1051
    %v1136 = vcvt.s32.f32 %v1052
    %v1137 = vcvt.s32.f32 %v1053
    %v1138 = vcvt.s32.f32 %v1054
    %v1139 = vcvt.s32.f32 %v1055
    %v1140 = vcvt.s32.f32 %v1056
    %v1141 = vcvt.s32.f32 %v1057
    %v1142 = vcvt.s32.f32 %v1058
    %v1143 = vcvt.s32.f32 %v1059
    %v1144 = vcvt.s32.f32 %v1060
    %v1145 = vcvt.s32.f32 %v1061
    %v1146 = vcvt.s32.f32 %v1062
    %v1147 = vcvt.s32.f32 %v1063
    %v1148 = vcvt.s32.f32 %v1064
    %v1149 = vcvt.s32.f32 %v1065
    %v1150 = vcvt.s32.f32 %v1066
    %v1151 = vcvt.s32.f32 %v1067
    %v1152 = vcvt.s32.f32 %v1068
    %v1153 = vcvt.s32.f32 %v1069
    %v1154 = vcvt.s32.f32 %v1070
    %v1155 = vcvt.s32.f32 %v1071
    %v1156 = vcvt.s32.f32 %v1072
    %v1157 = vcvt.s32.f32 %v1073
    %v1158 = vcvt.s32.f32 %v1074
    %v1159 = vcvt.s32.f32 %v1075
    %v1160 = vcvt.s32.f32 %v1076
    %v1161 = vcvt.s32.f32 %v1077
    %v1162 = vcvt.s32.f32 %v1078
    %v1163 = vcvt.s32.f32 %v1079
    %v1164 = vcvt.s32.f32 %v1080
    %v1165 = vcvt.s32.f32 %v1081
    %v1166 = vcvt.s32.f32 %v1082
    %v1167 = vcvt.s32.f32 %v1083
    %v1168 = vcvt.s32.f32 %v1084
    %v1169 = vcvt.s32.f32 %v1085
    %v1170 = vcvt.s32.f32 %v1086
    %v1171 = vcvt.s32.f32 %v1087
    %v1172 = vcvt.s32.f32 %v1088
    %v1173 = vcvt.s32.f32 %v1089
    %v1174 = vcvt.s32.f32 %v1090
    %s1175 = scalar_lea.vmem [#allocation2], 448
    %v1176 = vld [vmem:[%s1175] sm:$0xff]
    %v1177 = vld [vmem:[%s1175 + $0x8] sm:$0xff]
    %v1178 = vld [vmem:[%s1175 + $0x10] sm:$0xff]
    %v1179 = vld [vmem:[%s1175 + $0x18] sm:$0xff]
    %v1180 = vld [vmem:[%s1175 + $0x20] sm:$0xff]
    %v1181 = vld [vmem:[%s1175 + $0x28] sm:$0xff]
    %v1182 = vld [vmem:[%s1175 + $0x30] sm:$0xff]
    %v1183 = vld [vmem:[%s1175 + $0x38] sm:$0xff]
    %v1184 = vld [vmem:[%s1175 + $0x40] sm:$0xff]
    %v1185 = vld [vmem:[%s1175 + $0x48] sm:$0xff]
    %v1186 = vld [vmem:[%s1175 + $0x50] sm:$0xff]
    %v1187 = vld [vmem:[%s1175 + $0x58] sm:$0xff]
    %v1188 = vld [vmem:[%s1175 + $0x60] sm:$0xff]
    %v1189 = vld [vmem:[%s1175 + $0x68] sm:$0xff]
    %v1190 = vld [vmem:[%s1175 + $0x70] sm:$0xff]
    %v1191 = vld [vmem:[%s1175 + $0x78] sm:$0xff]
    %v1192 = vld [vmem:[%s1175 + $0x80] sm:$0xff]
    %v1193 = vld [vmem:[%s1175 + $0x88] sm:$0xff]
    %v1194 = vld [vmem:[%s1175 + $0x90] sm:$0xff]
    %v1195 = vld [vmem:[%s1175 + $0x98] sm:$0xff]
    %v1196 = vld [vmem:[%s1175 + $0xa0] sm:$0xff]
    %v1197 = vld [vmem:[%s1175 + $0xa8] sm:$0xff]
    %v1198 = vld [vmem:[%s1175 + $0xb0] sm:$0xff]
    %v1199 = vld [vmem:[%s1175 + $0xb8] sm:$0xff]
    %v1200 = vld [vmem:[%s1175 + $0xc0] sm:$0xff]
    %v1201 = vld [vmem:[%s1175 + $0xc8] sm:$0xff]
    %v1202 = vld [vmem:[%s1175 + $0xd0] sm:$0xff]
    %v1203 = vld [vmem:[%s1175 + $0xd8] sm:$0xff]
    %v1204 = vld [vmem:[%s1175 + $0xe0] sm:$0xff]
    %v1205 = vld [vmem:[%s1175 + $0xe8] sm:$0xff]
    %v1206 = vld [vmem:[%s1175 + $0xf0] sm:$0xff]
    %v1207 = vld [vmem:[%s1175 + $0xf8] sm:$0xff]
    %v1208 = vld [vmem:[%s1175 + $0x100] sm:$0xff]
    %v1209 = vld [vmem:[%s1175 + $0x108] sm:$0xff]
    %v1210 = vld [vmem:[%s1175 + $0x110] sm:$0xff]
    %v1211 = vld [vmem:[%s1175 + $0x118] sm:$0xff]
    %v1212 = vld [vmem:[%s1175 + $0x120] sm:$0xff]
    %v1213 = vld [vmem:[%s1175 + $0x128] sm:$0xff]
    %v1214 = vld [vmem:[%s1175 + $0x130] sm:$0xff]
    %v1215 = vld [vmem:[%s1175 + $0x138] sm:$0xff]
    %v1216 = vld [vmem:[%s1175 + $0x140] sm:$0xff]
    %v1217 = vld [vmem:[%s1175 + $0x148] sm:$0xff]
    %v1218 = vld [vmem:[%s1175 + $0x150] sm:$0xff]
    %v1219 = vld [vmem:[%s1175 + $0x158] sm:$0xff]
    %v1220 = vld [vmem:[%s1175 + $0x160] sm:$0xff]
    %v1221 = vld [vmem:[%s1175 + $0x168] sm:$0xff]
    %v1222 = vld [vmem:[%s1175 + $0x170] sm:$0xff]
    %v1223 = vld [vmem:[%s1175 + $0x178] sm:$0xff]
    %v1224 = vld [vmem:[%s1175 + $0x180] sm:$0xff]
    %v1225 = vld [vmem:[%s1175 + $0x188] sm:$0xff]
    %v1226 = vld [vmem:[%s1175 + $0x190] sm:$0xff]
    %v1227 = vld [vmem:[%s1175 + $0x198] sm:$0xff]
    %v1228 = vld [vmem:[%s1175 + $0x1a0] sm:$0xff]
    %v1229 = vld [vmem:[%s1175 + $0x1a8] sm:$0xff]
    %v1230 = vld [vmem:[%s1175 + $0x1b0] sm:$0xff]
    %v1231 = vld [vmem:[%s1175 + $0x1b8] sm:$0xff]
    %v1232 = vsel %vm320, %v1177, 0.0
    %v1233 = vadd.f32 %v1176, %v1232
    %v1234 = vadd.f32 %v1233, %v1178
    %v1235 = vsel %vm320, %v1179, 0.0
    %v1236 = vadd.f32 %v1234, %v1235
    %v1237 = vadd.f32 %v1236, %v1180
    %v1238 = vsel %vm320, %v1181, 0.0
    %v1239 = vadd.f32 %v1237, %v1238
    %v1240 = vadd.f32 %v1239, %v1182
    %v1241 = vsel %vm320, %v1183, 0.0
    %v1242 = vadd.f32 %v1240, %v1241
    %v1243 = vadd.f32 %v1242, %v1184
    %v1244 = vsel %vm320, %v1185, 0.0
    %v1245 = vadd.f32 %v1243, %v1244
    %v1246 = vadd.f32 %v1245, %v1186
    %v1247 = vsel %vm320, %v1187, 0.0
    %v1248 = vadd.f32 %v1246, %v1247
    %v1249 = vadd.f32 %v1248, %v1188
    %v1250 = vsel %vm320, %v1189, 0.0
    %v1251 = vadd.f32 %v1249, %v1250
    %v1252 = vadd.f32 %v1251, %v1190
    %v1253 = vsel %vm320, %v1191, 0.0
    %v1254 = vadd.f32 %v1252, %v1253
    %v1255 = vadd.f32 %v1254, %v1192
    %v1256 = vsel %vm320, %v1193, 0.0
    %v1257 = vadd.f32 %v1255, %v1256
    %v1258 = vadd.f32 %v1257, %v1194
    %v1259 = vsel %vm320, %v1195, 0.0
    %v1260 = vadd.f32 %v1258, %v1259
    %v1261 = vadd.f32 %v1260, %v1196
    %v1262 = vsel %vm320, %v1197, 0.0
    %v1263 = vadd.f32 %v1261, %v1262
    %v1264 = vadd.f32 %v1263, %v1198
    %v1265 = vsel %vm320, %v1199, 0.0
    %v1266 = vadd.f32 %v1264, %v1265
    %v1267 = vadd.f32 %v1266, %v1200
    %v1268 = vsel %vm320, %v1201, 0.0
    %v1269 = vadd.f32 %v1267, %v1268
    %v1270 = vadd.f32 %v1269, %v1202
    %v1271 = vsel %vm320, %v1203, 0.0
    %v1272 = vadd.f32 %v1270, %v1271
    %v1273 = vadd.f32 %v1272, %v1204
    %v1274 = vsel %vm320, %v1205, 0.0
    %v1275 = vadd.f32 %v1273, %v1274
    %v1276 = vadd.f32 %v1275, %v1206
    %v1277 = vsel %vm320, %v1207, 0.0
    %v1278 = vadd.f32 %v1276, %v1277
    %v1279 = vadd.f32 %v1278, %v1208
    %v1280 = vsel %vm320, %v1209, 0.0
    %v1281 = vadd.f32 %v1279, %v1280
    %v1282 = vadd.f32 %v1281, %v1210
    %v1283 = vsel %vm320, %v1211, 0.0
    %v1284 = vadd.f32 %v1282, %v1283
    %v1285 = vadd.f32 %v1284, %v1212
    %v1286 = vsel %vm320, %v1213, 0.0
    %v1287 = vadd.f32 %v1285, %v1286
    %v1288 = vadd.f32 %v1287, %v1214
    %v1289 = vsel %vm320, %v1215, 0.0
    %v1290 = vadd.f32 %v1288, %v1289
    %v1291 = vadd.f32 %v1290, %v1216
    %v1292 = vsel %vm320, %v1217, 0.0
    %v1293 = vadd.f32 %v1291, %v1292
    %v1294 = vadd.f32 %v1293, %v1218
    %v1295 = vsel %vm320, %v1219, 0.0
    %v1296 = vadd.f32 %v1294, %v1295
    %v1297 = vadd.f32 %v1296, %v1220
    %v1298 = vsel %vm320, %v1221, 0.0
    %v1299 = vadd.f32 %v1297, %v1298
    %v1300 = vadd.f32 %v1299, %v1222
    %v1301 = vsel %vm320, %v1223, 0.0
    %v1302 = vadd.f32 %v1300, %v1301
    %v1303 = vadd.f32 %v1302, %v1224
    %v1304 = vsel %vm320, %v1225, 0.0
    %v1305 = vadd.f32 %v1303, %v1304
    %v1306 = vadd.f32 %v1305, %v1226
    %v1307 = vsel %vm320, %v1227, 0.0
    %v1308 = vadd.f32 %v1306, %v1307
    %v1309 = vadd.f32 %v1308, %v1228
    %v1310 = vsel %vm320, %v1229, 0.0
    %v1311 = vadd.f32 %v1309, %v1310
    %v1312 = vadd.f32 %v1311, %v1230
    %v1313 = vsel %vm320, %v1231, 0.0
    %v1314 = vadd.f32 %v1312, %v1313
    %1315 = vadd.xlane.f32.xlu0 %v1314
    %v1316 = vpop.xlane.xlu0 %1315
    %v1317 = vrot.slane %v1316, 4
    %v1318 = vadd.f32 %v1316, %v1317
    %v1319 = vrot.slane %v1318, 2
    %v1320 = vadd.f32 %v1318, %v1319
    %v1321 = vrot.slane %v1320, 1
    %v1322 = vadd.f32 %v1320, %v1321
    %s1323 = vtos %v1322
    %v1324 = vmul.f32 %v1176, %v1176
    %v1325 = vmul.f32 %v1177, %v1177
    %v1326 = vmul.f32 %v1178, %v1178
    %v1327 = vmul.f32 %v1179, %v1179
    %v1328 = vmul.f32 %v1180, %v1180
    %v1329 = vmul.f32 %v1181, %v1181
    %v1330 = vmul.f32 %v1182, %v1182
    %v1331 = vmul.f32 %v1183, %v1183
    %v1332 = vmul.f32 %v1184, %v1184
    %v1333 = vmul.f32 %v1185, %v1185
    %v1334 = vmul.f32 %v1186, %v1186
    %v1335 = vmul.f32 %v1187, %v1187
    %v1336 = vmul.f32 %v1188, %v1188
    %v1337 = vmul.f32 %v1189, %v1189
    %v1338 = vmul.f32 %v1190, %v1190
    %v1339 = vmul.f32 %v1191, %v1191
    %v1340 = vmul.f32 %v1192, %v1192
    %v1341 = vmul.f32 %v1193, %v1193
    %v1342 = vmul.f32 %v1194, %v1194
    %v1343 = vmul.f32 %v1195, %v1195
    %v1344 = vmul.f32 %v1196, %v1196
    %v1345 = vmul.f32 %v1197, %v1197
    %v1346 = vmul.f32 %v1198, %v1198
    %v1347 = vmul.f32 %v1199, %v1199
    %v1348 = vmul.f32 %v1200, %v1200
    %v1349 = vmul.f32 %v1201, %v1201
    %v1350 = vmul.f32 %v1202, %v1202
    %v1351 = vmul.f32 %v1203, %v1203
    %v1352 = vmul.f32 %v1204, %v1204
    %v1353 = vmul.f32 %v1205, %v1205
    %v1354 = vmul.f32 %v1206, %v1206
    %v1355 = vmul.f32 %v1207, %v1207
    %v1356 = vmul.f32 %v1208, %v1208
    %v1357 = vmul.f32 %v1209, %v1209
    %v1358 = vmul.f32 %v1210, %v1210
    %v1359 = vmul.f32 %v1211, %v1211
    %v1360 = vmul.f32 %v1212, %v1212
    %v1361 = vmul.f32 %v1213, %v1213
    %v1362 = vmul.f32 %v1214, %v1214
    %v1363 = vmul.f32 %v1215, %v1215
    %v1364 = vmul.f32 %v1216, %v1216
    %v1365 = vmul.f32 %v1217, %v1217
    %v1366 = vmul.f32 %v1218, %v1218
    %v1367 = vmul.f32 %v1219, %v1219
    %v1368 = vmul.f32 %v1220, %v1220
    %v1369 = vmul.f32 %v1221, %v1221
    %v1370 = vmul.f32 %v1222, %v1222
    %v1371 = vmul.f32 %v1223, %v1223
    %v1372 = vmul.f32 %v1224, %v1224
    %v1373 = vmul.f32 %v1225, %v1225
    %v1374 = vmul.f32 %v1226, %v1226
    %v1375 = vmul.f32 %v1227, %v1227
    %v1376 = vmul.f32 %v1228, %v1228
    %v1377 = vmul.f32 %v1229, %v1229
    %v1378 = vmul.f32 %v1230, %v1230
    %v1379 = vmul.f32 %v1231, %v1231
    %v1380 = vsel %vm320, %v1325, 0.0
    %v1381 = vadd.f32 %v1324, %v1380
    %v1382 = vadd.f32 %v1381, %v1326
    %v1383 = vsel %vm320, %v1327, 0.0
    %v1384 = vadd.f32 %v1382, %v1383
    %v1385 = vadd.f32 %v1384, %v1328
    %v1386 = vsel %vm320, %v1329, 0.0
    %v1387 = vadd.f32 %v1385, %v1386
    %v1388 = vadd.f32 %v1387, %v1330
    %v1389 = vsel %vm320, %v1331, 0.0
    %v1390 = vadd.f32 %v1388, %v1389
    %v1391 = vadd.f32 %v1390, %v1332
    %v1392 = vsel %vm320, %v1333, 0.0
    %v1393 = vadd.f32 %v1391, %v1392
    %v1394 = vadd.f32 %v1393, %v1334
    %v1395 = vsel %vm320, %v1335, 0.0
    %v1396 = vadd.f32 %v1394, %v1395
    %v1397 = vadd.f32 %v1396, %v1336
    %v1398 = vsel %vm320, %v1337, 0.0
    %v1399 = vadd.f32 %v1397, %v1398
    %v1400 = vadd.f32 %v1399, %v1338
    %v1401 = vsel %vm320, %v1339, 0.0
    %v1402 = vadd.f32 %v1400, %v1401
    %v1403 = vadd.f32 %v1402, %v1340
    %v1404 = vsel %vm320, %v1341, 0.0
    %v1405 = vadd.f32 %v1403, %v1404
    %v1406 = vadd.f32 %v1405, %v1342
    %v1407 = vsel %vm320, %v1343, 0.0
    %v1408 = vadd.f32 %v1406, %v1407
    %v1409 = vadd.f32 %v1408, %v1344
    %v1410 = vsel %vm320, %v1345, 0.0
    %v1411 = vadd.f32 %v1409, %v1410
    %v1412 = vadd.f32 %v1411, %v1346
    %v1413 = vsel %vm320, %v1347, 0.0
    %v1414 = vadd.f32 %v1412, %v1413
    %v1415 = vadd.f32 %v1414, %v1348
    %v1416 = vsel %vm320, %v1349, 0.0
    %v1417 = vadd.f32 %v1415, %v1416
    %v1418 = vadd.f32 %v1417, %v1350
    %v1419 = vsel %vm320, %v1351, 0.0
    %v1420 = vadd.f32 %v1418, %v1419
    %v1421 = vadd.f32 %v1420, %v1352
    %v1422 = vsel %vm320, %v1353, 0.0
    %v1423 = vadd.f32 %v1421, %v1422
    %v1424 = vadd.f32 %v1423, %v1354
    %v1425 = vsel %vm320, %v1355, 0.0
    %v1426 = vadd.f32 %v1424, %v1425
    %v1427 = vadd.f32 %v1426, %v1356
    %v1428 = vsel %vm320, %v1357, 0.0
    %v1429 = vadd.f32 %v1427, %v1428
    %v1430 = vadd.f32 %v1429, %v1358
    %v1431 = vsel %vm320, %v1359, 0.0
    %v1432 = vadd.f32 %v1430, %v1431
    %v1433 = vadd.f32 %v1432, %v1360
    %v1434 = vsel %vm320, %v1361, 0.0
    %v1435 = vadd.f32 %v1433, %v1434
    %v1436 = vadd.f32 %v1435, %v1362
    %v1437 = vsel %vm320, %v1363, 0.0
    %v1438 = vadd.f32 %v1436, %v1437
    %v1439 = vadd.f32 %v1438, %v1364
    %v1440 = vsel %vm320, %v1365, 0.0
    %v1441 = vadd.f32 %v1439, %v1440
    %v1442 = vadd.f32 %v1441, %v1366
    %v1443 = vsel %vm320, %v1367, 0.0
    %v1444 = vadd.f32 %v1442, %v1443
    %v1445 = vadd.f32 %v1444, %v1368
    %v1446 = vsel %vm320, %v1369, 0.0
    %v1447 = vadd.f32 %v1445, %v1446
    %v1448 = vadd.f32 %v1447, %v1370
    %v1449 = vsel %vm320, %v1371, 0.0
    %v1450 = vadd.f32 %v1448, %v1449
    %v1451 = vadd.f32 %v1450, %v1372
    %v1452 = vsel %vm320, %v1373, 0.0
    %v1453 = vadd.f32 %v1451, %v1452
    %v1454 = vadd.f32 %v1453, %v1374
    %v1455 = vsel %vm320, %v1375, 0.0
    %v1456 = vadd.f32 %v1454, %v1455
    %v1457 = vadd.f32 %v1456, %v1376
    %v1458 = vsel %vm320, %v1377, 0.0
    %v1459 = vadd.f32 %v1457, %v1458
    %v1460 = vadd.f32 %v1459, %v1378
    %v1461 = vsel %vm320, %v1379, 0.0
    %v1462 = vadd.f32 %v1460, %v1461
    %1463 = vadd.xlane.f32.xlu0 %v1462
    %v1464 = vpop.xlane.xlu0 %1463
    %v1465 = vrot.slane %v1464, 4
    %v1466 = vadd.f32 %v1464, %v1465
    %v1467 = vrot.slane %v1466, 2
    %v1468 = vadd.f32 %v1466, %v1467
    %v1469 = vrot.slane %v1468, 1
    %v1470 = vadd.f32 %v1468, %v1469
    %s1471 = vtos %v1470
    %s1472 = smul.f32 %s1323, 1.9929847e-05
    %s1473 = smul.f32 %s1471, 1.9929847e-05
    %s1474 = smul.f32 %s1472, %s1472
    %s1475 = ssub.f32 %s1473, %s1474
    %s1476 = sadd.f32 %s1475, 1e-05
    %v1477 = vstv %s1476
    %v1478 = vrsqrt.pop %v1477
    %v1479 = vmul.f32 %v1478, %v1477
    %v1480 = vmul.f32 %v1479, %v1478
    %v1481 = vmul.f32 0.5, %v1480
    %v1482 = vsub.f32 1.5, %v1481
    %v1483 = vmul.f32 %v1478, %v1482
    %vm1484 = vweird.f32 %v1477
    %vm1485 = vweird.f32 %v1478
    %vm1486 = vmor %vm1484, %vm1485
    %v1487 = vsel %vm1486, %v1478, %v1483
    %s1488 = vtos %v1487
    %s1489 = sld [smem:[#allocation8 + $0x1]]
    %s1490 = smul.f32 %s1488, %s1489
    %s1491 = sld [smem:[#allocation9 + $0x1]]
    %s1492 = smul.f32 %s1472, %s1490
    %s1493 = ssub.f32 %s1491, %s1492
    %1494 = vmatpush.msra.mxu0 %v1206
    %1495 = vmatpush.msra.mxu0 %v1204
    %1496 = vmatpush.msra.mxu0 %v1202
    %1497 = vmatpush.msra.mxu0 %v1200
    %1498 = vmatpush.msra.mxu0 %v1198
    %1499 = vmatpush.msra.mxu0 %v1196
    %1500 = vmatpush.msra.mxu0 %v1194
    %1501 = vmatpush.msra.mxu0 %v1192
    %1502 = vmatpush.msra.mxu0 %v1190
    %1503 = vmatpush.msra.mxu0 %v1188
    %1504 = vmatpush.msra.mxu0 %v1186
    %1505 = vmatpush.msra.mxu0 %v1184
    %1506 = vmatpush.msra.mxu0 %v1182
    %1507 = vmatpush.msra.mxu0 %v1180
    %1508 = vmatpush.msra.mxu0 %v1178
    %1509 = vmatpush.msra.mxu0 %v1176
    %1510 = vmatmul.f32.gmra.mxu0 %v207
    %v1511 = vpop.f32.mrf.mxu0
    %v1512 = vadd.f32 0.0, %v1511
    %1513 = vmatmul.f32.gmra.mxu0 %v209
    %v1514 = vpop.f32.mrf.mxu0
    %v1515 = vadd.f32 0.0, %v1514
    %1516 = vmatmul.f32.gmra.mxu0 %v211
    %v1517 = vpop.f32.mrf.mxu0
    %v1518 = vadd.f32 0.0, %v1517
    %1519 = vmatmul.f32.gmra.mxu0 %v213
    %v1520 = vpop.f32.mrf.mxu0
    %v1521 = vadd.f32 0.0, %v1520
    %1522 = vmatmul.f32.gmra.mxu0 %v215
    %v1523 = vpop.f32.mrf.mxu0
    %v1524 = vadd.f32 0.0, %v1523
    %1525 = vmatmul.f32.gmra.mxu0 %v217
    %v1526 = vpop.f32.mrf.mxu0
    %v1527 = vadd.f32 0.0, %v1526
    %1528 = vmatmul.f32.gmra.mxu0 %v219
    %v1529 = vpop.f32.mrf.mxu0
    %v1530 = vadd.f32 0.0, %v1529
    %1531 = vmatmul.f32.gmra.mxu0 %v221
    %v1532 = vpop.f32.mrf.mxu0
    %v1533 = vadd.f32 0.0, %v1532
    %1534 = vmatmul.f32.gmra.mxu0 %v223
    %v1535 = vpop.f32.mrf.mxu0
    %v1536 = vadd.f32 0.0, %v1535
    %1537 = vmatmul.f32.gmra.mxu0 %v225
    %v1538 = vpop.f32.mrf.mxu0
    %v1539 = vadd.f32 0.0, %v1538
    %1540 = vmatmul.f32.gmra.mxu0 %v227
    %v1541 = vpop.f32.mrf.mxu0
    %v1542 = vadd.f32 0.0, %v1541
    %1543 = vmatmul.f32.gmra.mxu0 %v229
    %v1544 = vpop.f32.mrf.mxu0
    %v1545 = vadd.f32 0.0, %v1544
    %1546 = vmatmul.f32.gmra.mxu0 %v231
    %v1547 = vpop.f32.mrf.mxu0
    %v1548 = vadd.f32 0.0, %v1547
    %1549 = vmatmul.f32.gmra.mxu0 %v233
    %v1550 = vpop.f32.mrf.mxu0
    %v1551 = vadd.f32 0.0, %v1550
    %1552 = vdwg.mxu0
    %1553 = vmatpush.msra.mxu0 0.0
    %1554 = vmatpush.msra.mxu0 0.0
    %1555 = vmatpush.msra.mxu0 0.0
    %1556 = vmatpush.msra.mxu0 0.0
    %1557 = vmatpush.msra.mxu0 %v1230
    %1558 = vmatpush.msra.mxu0 %v1228
    %1559 = vmatpush.msra.mxu0 %v1226
    %1560 = vmatpush.msra.mxu0 %v1224
    %1561 = vmatpush.msra.mxu0 %v1222
    %1562 = vmatpush.msra.mxu0 %v1220
    %1563 = vmatpush.msra.mxu0 %v1218
    %1564 = vmatpush.msra.mxu0 %v1216
    %1565 = vmatpush.msra.mxu0 %v1214
    %1566 = vmatpush.msra.mxu0 %v1212
    %1567 = vmatpush.msra.mxu0 %v1210
    %1568 = vmatpush.msra.mxu0 %v1208
    %1569 = vmatmul.f32.gmra.mxu0 %v584
    %v1570 = vpop.f32.mrf.mxu0
    %v1571 = vadd.f32 %v1512, %v1570
    %1572 = vmatmul.f32.gmra.mxu0 %v587
    %v1573 = vpop.f32.mrf.mxu0
    %v1574 = vadd.f32 %v1515, %v1573
    %1575 = vmatmul.f32.gmra.mxu0 %v590
    %v1576 = vpop.f32.mrf.mxu0
    %v1577 = vadd.f32 %v1518, %v1576
    %1578 = vmatmul.f32.gmra.mxu0 %v593
    %v1579 = vpop.f32.mrf.mxu0
    %v1580 = vadd.f32 %v1521, %v1579
    %1581 = vmatmul.f32.gmra.mxu0 %v596
    %v1582 = vpop.f32.mrf.mxu0
    %v1583 = vadd.f32 %v1524, %v1582
    %1584 = vmatmul.f32.gmra.mxu0 %v599
    %v1585 = vpop.f32.mrf.mxu0
    %v1586 = vadd.f32 %v1527, %v1585
    %1587 = vmatmul.f32.gmra.mxu0 %v602
    %v1588 = vpop.f32.mrf.mxu0
    %v1589 = vadd.f32 %v1530, %v1588
    %1590 = vmatmul.f32.gmra.mxu0 %v605
    %v1591 = vpop.f32.mrf.mxu0
    %v1592 = vadd.f32 %v1533, %v1591
    %1593 = vmatmul.f32.gmra.mxu0 %v608
    %v1594 = vpop.f32.mrf.mxu0
    %v1595 = vadd.f32 %v1536, %v1594
    %1596 = vmatmul.f32.gmra.mxu0 %v611
    %v1597 = vpop.f32.mrf.mxu0
    %v1598 = vadd.f32 %v1539, %v1597
    %1599 = vmatmul.f32.gmra.mxu0 %v614
    %v1600 = vpop.f32.mrf.mxu0
    %v1601 = vadd.f32 %v1542, %v1600
    %1602 = vmatmul.f32.gmra.mxu0 %v617
    %v1603 = vpop.f32.mrf.mxu0
    %v1604 = vadd.f32 %v1545, %v1603
    %1605 = vmatmul.f32.gmra.mxu0 %v620
    %v1606 = vpop.f32.mrf.mxu0
    %v1607 = vadd.f32 %v1548, %v1606
    %1608 = vmatmul.f32.gmra.mxu0 %v623
    %v1609 = vpop.f32.mrf.mxu0
    %v1610 = vadd.f32 %v1551, %v1609
    %1611 = vdwg.mxu0
    %1612 = vmatpush.msra.mxu0 %v1207
    %1613 = vmatpush.msra.mxu0 %v1205
    %1614 = vmatpush.msra.mxu0 %v1203
    %1615 = vmatpush.msra.mxu0 %v1201
    %1616 = vmatpush.msra.mxu0 %v1199
    %1617 = vmatpush.msra.mxu0 %v1197
    %1618 = vmatpush.msra.mxu0 %v1195
    %1619 = vmatpush.msra.mxu0 %v1193
    %1620 = vmatpush.msra.mxu0 %v1191
    %1621 = vmatpush.msra.mxu0 %v1189
    %1622 = vmatpush.msra.mxu0 %v1187
    %1623 = vmatpush.msra.mxu0 %v1185
    %1624 = vmatpush.msra.mxu0 %v1183
    %1625 = vmatpush.msra.mxu0 %v1181
    %1626 = vmatpush.msra.mxu0 %v1179
    %1627 = vmatpush.msra.mxu0 %v1177
    %1628 = vmatmul.f32.gmra.mxu0 %v207
    %v1629 = vpop.f32.mrf.mxu0
    %v1630 = vadd.f32 0.0, %v1629
    %1631 = vmatmul.f32.gmra.mxu0 %v209
    %v1632 = vpop.f32.mrf.mxu0
    %v1633 = vadd.f32 0.0, %v1632
    %1634 = vmatmul.f32.gmra.mxu0 %v211
    %v1635 = vpop.f32.mrf.mxu0
    %v1636 = vadd.f32 0.0, %v1635
    %1637 = vmatmul.f32.gmra.mxu0 %v213
    %v1638 = vpop.f32.mrf.mxu0
    %v1639 = vadd.f32 0.0, %v1638
    %1640 = vmatmul.f32.gmra.mxu0 %v215
    %v1641 = vpop.f32.mrf.mxu0
    %v1642 = vadd.f32 0.0, %v1641
    %1643 = vmatmul.f32.gmra.mxu0 %v217
    %v1644 = vpop.f32.mrf.mxu0
    %v1645 = vadd.f32 0.0, %v1644
    %1646 = vmatmul.f32.gmra.mxu0 %v219
    %v1647 = vpop.f32.mrf.mxu0
    %v1648 = vadd.f32 0.0, %v1647
    %1649 = vmatmul.f32.gmra.mxu0 %v221
    %v1650 = vpop.f32.mrf.mxu0
    %v1651 = vadd.f32 0.0, %v1650
    %1652 = vmatmul.f32.gmra.mxu0 %v223
    %v1653 = vpop.f32.mrf.mxu0
    %v1654 = vadd.f32 0.0, %v1653
    %1655 = vmatmul.f32.gmra.mxu0 %v225
    %v1656 = vpop.f32.mrf.mxu0
    %v1657 = vadd.f32 0.0, %v1656
    %1658 = vmatmul.f32.gmra.mxu0 %v227
    %v1659 = vpop.f32.mrf.mxu0
    %v1660 = vadd.f32 0.0, %v1659
    %1661 = vmatmul.f32.gmra.mxu0 %v229
    %v1662 = vpop.f32.mrf.mxu0
    %v1663 = vadd.f32 0.0, %v1662
    %1664 = vmatmul.f32.gmra.mxu0 %v231
    %v1665 = vpop.f32.mrf.mxu0
    %v1666 = vadd.f32 0.0, %v1665
    %1667 = vmatmul.f32.gmra.mxu0 %v233
    %v1668 = vpop.f32.mrf.mxu0
    %v1669 = vadd.f32 0.0, %v1668
    %1670 = vdwg.mxu0
    %1671 = vmatpush.msra.mxu0 0.0
    %1672 = vmatpush.msra.mxu0 0.0
    %1673 = vmatpush.msra.mxu0 0.0
    %1674 = vmatpush.msra.mxu0 0.0
    %1675 = vmatpush.msra.mxu0 %v1231
    %1676 = vmatpush.msra.mxu0 %v1229
    %1677 = vmatpush.msra.mxu0 %v1227
    %1678 = vmatpush.msra.mxu0 %v1225
    %1679 = vmatpush.msra.mxu0 %v1223
    %1680 = vmatpush.msra.mxu0 %v1221
    %1681 = vmatpush.msra.mxu0 %v1219
    %1682 = vmatpush.msra.mxu0 %v1217
    %1683 = vmatpush.msra.mxu0 %v1215
    %1684 = vmatpush.msra.mxu0 %v1213
    %1685 = vmatpush.msra.mxu0 %v1211
    %1686 = vmatpush.msra.mxu0 %v1209
    %1687 = vmatmul.f32.gmra.mxu0 %v584
    %v1688 = vpop.f32.mrf.mxu0
    %v1689 = vadd.f32 %v1630, %v1688
    %1690 = vmatmul.f32.gmra.mxu0 %v587
    %v1691 = vpop.f32.mrf.mxu0
    %v1692 = vadd.f32 %v1633, %v1691
    %1693 = vmatmul.f32.gmra.mxu0 %v590
    %v1694 = vpop.f32.mrf.mxu0
    %v1695 = vadd.f32 %v1636, %v1694
    %1696 = vmatmul.f32.gmra.mxu0 %v593
    %v1697 = vpop.f32.mrf.mxu0
    %v1698 = vadd.f32 %v1639, %v1697
    %1699 = vmatmul.f32.gmra.mxu0 %v596
    %v1700 = vpop.f32.mrf.mxu0
    %v1701 = vadd.f32 %v1642, %v1700
    %1702 = vmatmul.f32.gmra.mxu0 %v599
    %v1703 = vpop.f32.mrf.mxu0
    %v1704 = vadd.f32 %v1645, %v1703
    %1705 = vmatmul.f32.gmra.mxu0 %v602
    %v1706 = vpop.f32.mrf.mxu0
    %v1707 = vadd.f32 %v1648, %v1706
    %1708 = vmatmul.f32.gmra.mxu0 %v605
    %v1709 = vpop.f32.mrf.mxu0
    %v1710 = vadd.f32 %v1651, %v1709
    %1711 = vmatmul.f32.gmra.mxu0 %v608
    %v1712 = vpop.f32.mrf.mxu0
    %v1713 = vadd.f32 %v1654, %v1712
    %1714 = vmatmul.f32.gmra.mxu0 %v611
    %v1715 = vpop.f32.mrf.mxu0
    %v1716 = vadd.f32 %v1657, %v1715
    %1717 = vmatmul.f32.gmra.mxu0 %v614
    %v1718 = vpop.f32.mrf.mxu0
    %v1719 = vadd.f32 %v1660, %v1718
    %1720 = vmatmul.f32.gmra.mxu0 %v617
    %v1721 = vpop.f32.mrf.mxu0
    %v1722 = vadd.f32 %v1663, %v1721
    %1723 = vmatmul.f32.gmra.mxu0 %v620
    %v1724 = vpop.f32.mrf.mxu0
    %v1725 = vadd.f32 %v1666, %v1724
    %1726 = vmatmul.f32.gmra.mxu0 %v623
    %v1727 = vpop.f32.mrf.mxu0
    %v1728 = vadd.f32 %v1669, %v1727
    %1729 = vdwg.mxu0
    %v1730 = vstv %s1490
    %v1731 = vmul.f32 %v1571, %v1730
    %v1732 = vmul.f32 %v1689, %v1730
    %v1733 = vmul.f32 %v1574, %v1730
    %v1734 = vmul.f32 %v1692, %v1730
    %v1735 = vmul.f32 %v1577, %v1730
    %v1736 = vmul.f32 %v1695, %v1730
    %v1737 = vmul.f32 %v1580, %v1730
    %v1738 = vmul.f32 %v1698, %v1730
    %v1739 = vmul.f32 %v1583, %v1730
    %v1740 = vmul.f32 %v1701, %v1730
    %v1741 = vmul.f32 %v1586, %v1730
    %v1742 = vmul.f32 %v1704, %v1730
    %v1743 = vmul.f32 %v1589, %v1730
    %v1744 = vmul.f32 %v1707, %v1730
    %v1745 = vmul.f32 %v1592, %v1730
    %v1746 = vmul.f32 %v1710, %v1730
    %v1747 = vmul.f32 %v1595, %v1730
    %v1748 = vmul.f32 %v1713, %v1730
    %v1749 = vmul.f32 %v1598, %v1730
    %v1750 = vmul.f32 %v1716, %v1730
    %v1751 = vmul.f32 %v1601, %v1730
    %v1752 = vmul.f32 %v1719, %v1730
    %v1753 = vmul.f32 %v1604, %v1730
    %v1754 = vmul.f32 %v1722, %v1730
    %v1755 = vmul.f32 %v1607, %v1730
    %v1756 = vmul.f32 %v1725, %v1730
    %v1757 = vmul.f32 %v1610, %v1730
    %v1758 = vmul.f32 %v1728, %v1730
    %v1759 = vstv %s1493
    %v1760 = vadd.f32 %v1731, %v1759
    %v1761 = vadd.f32 %v1732, %v1759
    %v1762 = vadd.f32 %v1733, %v1759
    %v1763 = vadd.f32 %v1734, %v1759
    %v1764 = vadd.f32 %v1735, %v1759
    %v1765 = vadd.f32 %v1736, %v1759
    %v1766 = vadd.f32 %v1737, %v1759
    %v1767 = vadd.f32 %v1738, %v1759
    %v1768 = vadd.f32 %v1739, %v1759
    %v1769 = vadd.f32 %v1740, %v1759
    %v1770 = vadd.f32 %v1741, %v1759
    %v1771 = vadd.f32 %v1742, %v1759
    %v1772 = vadd.f32 %v1743, %v1759
    %v1773 = vadd.f32 %v1744, %v1759
    %v1774 = vadd.f32 %v1745, %v1759
    %v1775 = vadd.f32 %v1746, %v1759
    %v1776 = vadd.f32 %v1747, %v1759
    %v1777 = vadd.f32 %v1748, %v1759
    %v1778 = vadd.f32 %v1749, %v1759
    %v1779 = vadd.f32 %v1750, %v1759
    %v1780 = vadd.f32 %v1751, %v1759
    %v1781 = vadd.f32 %v1752, %v1759
    %v1782 = vadd.f32 %v1753, %v1759
    %v1783 = vadd.f32 %v1754, %v1759
    %v1784 = vadd.f32 %v1755, %v1759
    %v1785 = vadd.f32 %v1756, %v1759
    %v1786 = vadd.f32 %v1757, %v1759
    %v1787 = vadd.f32 %v1758, %v1759
    %s1788 = scalar_lea.vmem [#allocation7], 3
    %v1789 = vld [vmem:[%s1788] sm:$0x7]
    %v1790 = vperm.slane %v1789, 0
    %v1791 = vperm.slane %v1789, 1
    %v1792 = vperm.slane %v1789, 2
    %vm1793 = vcmp.eq.s32.totalorder %v236, %v1790
    %vm1794 = vcmp.eq.s32.totalorder %v236, %v1791
    %vm1795 = vcmp.eq.s32.totalorder %v236, %v1792
    %vm1796 = vcmp.eq.s32.totalorder %v237, %v1790
    %vm1797 = vcmp.eq.s32.totalorder %v237, %v1791
    %vm1798 = vcmp.eq.s32.totalorder %v237, %v1792
    %vm1799 = vcmp.eq.s32.totalorder %v238, %v1790
    %vm1800 = vcmp.eq.s32.totalorder %v238, %v1791
    %vm1801 = vcmp.eq.s32.totalorder %v238, %v1792
    %vm1802 = vcmp.eq.s32.totalorder %v239, %v1790
    %vm1803 = vcmp.eq.s32.totalorder %v239, %v1791
    %vm1804 = vcmp.eq.s32.totalorder %v239, %v1792
    %vm1805 = vcmp.eq.s32.totalorder %v240, %v1790
    %vm1806 = vcmp.eq.s32.totalorder %v240, %v1791
    %vm1807 = vcmp.eq.s32.totalorder %v240, %v1792
    %vm1808 = vcmp.eq.s32.totalorder %v241, %v1790
    %vm1809 = vcmp.eq.s32.totalorder %v241, %v1791
    %vm1810 = vcmp.eq.s32.totalorder %v241, %v1792
    %vm1811 = vcmp.eq.s32.totalorder %v242, %v1790
    %vm1812 = vcmp.eq.s32.totalorder %v242, %v1791
    %vm1813 = vcmp.eq.s32.totalorder %v242, %v1792
    %vm1814 = vcmp.eq.s32.totalorder %v243, %v1790
    %vm1815 = vcmp.eq.s32.totalorder %v243, %v1791
    %vm1816 = vcmp.eq.s32.totalorder %v243, %v1792
    %vm1817 = vcmp.eq.s32.totalorder %v244, %v1790
    %vm1818 = vcmp.eq.s32.totalorder %v244, %v1791
    %vm1819 = vcmp.eq.s32.totalorder %v244, %v1792
    %vm1820 = vcmp.eq.s32.totalorder %v245, %v1790
    %vm1821 = vcmp.eq.s32.totalorder %v245, %v1791
    %vm1822 = vcmp.eq.s32.totalorder %v245, %v1792
    %vm1823 = vcmp.eq.s32.totalorder %v246, %v1790
    %vm1824 = vcmp.eq.s32.totalorder %v246, %v1791
    %vm1825 = vcmp.eq.s32.totalorder %v246, %v1792
    %vm1826 = vcmp.eq.s32.totalorder %v247, %v1790
    %vm1827 = vcmp.eq.s32.totalorder %v247, %v1791
    %vm1828 = vcmp.eq.s32.totalorder %v247, %v1792
    %vm1829 = vcmp.eq.s32.totalorder %v248, %v1790
    %vm1830 = vcmp.eq.s32.totalorder %v248, %v1791
    %vm1831 = vcmp.eq.s32.totalorder %v248, %v1792
    %vm1832 = vcmp.eq.s32.totalorder %v249, %v1790
    %vm1833 = vcmp.eq.s32.totalorder %v249, %v1791
    %vm1834 = vcmp.eq.s32.totalorder %v249, %v1792
    %vm1835 = vcmp.eq.s32.totalorder %v250, %v1790
    %vm1836 = vcmp.eq.s32.totalorder %v250, %v1791
    %vm1837 = vcmp.eq.s32.totalorder %v250, %v1792
    %vm1838 = vcmp.eq.s32.totalorder %v251, %v1790
    %vm1839 = vcmp.eq.s32.totalorder %v251, %v1791
    %vm1840 = vcmp.eq.s32.totalorder %v251, %v1792
    %vm1841 = vcmp.eq.s32.totalorder %v252, %v1790
    %vm1842 = vcmp.eq.s32.totalorder %v252, %v1791
    %vm1843 = vcmp.eq.s32.totalorder %v252, %v1792
    %vm1844 = vcmp.eq.s32.totalorder %v253, %v1790
    %vm1845 = vcmp.eq.s32.totalorder %v253, %v1791
    %vm1846 = vcmp.eq.s32.totalorder %v253, %v1792
    %vm1847 = vcmp.eq.s32.totalorder %v254, %v1790
    %vm1848 = vcmp.eq.s32.totalorder %v254, %v1791
    %vm1849 = vcmp.eq.s32.totalorder %v254, %v1792
    %vm1850 = vcmp.eq.s32.totalorder %v255, %v1790
    %vm1851 = vcmp.eq.s32.totalorder %v255, %v1791
    %vm1852 = vcmp.eq.s32.totalorder %v255, %v1792
    %vm1853 = vcmp.eq.s32.totalorder %v256, %v1790
    %vm1854 = vcmp.eq.s32.totalorder %v256, %v1791
    %vm1855 = vcmp.eq.s32.totalorder %v256, %v1792
    %vm1856 = vcmp.eq.s32.totalorder %v257, %v1790
    %vm1857 = vcmp.eq.s32.totalorder %v257, %v1791
    %vm1858 = vcmp.eq.s32.totalorder %v257, %v1792
    %vm1859 = vcmp.eq.s32.totalorder %v258, %v1790
    %vm1860 = vcmp.eq.s32.totalorder %v258, %v1791
    %vm1861 = vcmp.eq.s32.totalorder %v258, %v1792
    %vm1862 = vcmp.eq.s32.totalorder %v259, %v1790
    %vm1863 = vcmp.eq.s32.totalorder %v259, %v1791
    %vm1864 = vcmp.eq.s32.totalorder %v259, %v1792
    %vm1865 = vcmp.eq.s32.totalorder %v260, %v1790
    %vm1866 = vcmp.eq.s32.totalorder %v260, %v1791
    %vm1867 = vcmp.eq.s32.totalorder %v260, %v1792
    %vm1868 = vcmp.eq.s32.totalorder %v261, %v1790
    %vm1869 = vcmp.eq.s32.totalorder %v261, %v1791
    %vm1870 = vcmp.eq.s32.totalorder %v261, %v1792
    %vm1871 = vcmp.eq.s32.totalorder %v262, %v1790
    %vm1872 = vcmp.eq.s32.totalorder %v262, %v1791
    %vm1873 = vcmp.eq.s32.totalorder %v262, %v1792
    %vm1874 = vcmp.eq.s32.totalorder %v263, %v1790
    %vm1875 = vcmp.eq.s32.totalorder %v263, %v1791
    %vm1876 = vcmp.eq.s32.totalorder %v263, %v1792
    %v1877 = vsel %vm1793, 1, 0
    %v1878 = vsel %vm1794, 1, 0
    %v1879 = vsel %vm1795, 1, 0
    %v1880 = vsel %vm1796, 1, 0
    %v1881 = vsel %vm1797, 1, 0
    %v1882 = vsel %vm1798, 1, 0
    %v1883 = vsel %vm1799, 1, 0
    %v1884 = vsel %vm1800, 1, 0
    %v1885 = vsel %vm1801, 1, 0
    %v1886 = vsel %vm1802, 1, 0
    %v1887 = vsel %vm1803, 1, 0
    %v1888 = vsel %vm1804, 1, 0
    %v1889 = vsel %vm1805, 1, 0
    %v1890 = vsel %vm1806, 1, 0
    %v1891 = vsel %vm1807, 1, 0
    %v1892 = vsel %vm1808, 1, 0
    %v1893 = vsel %vm1809, 1, 0
    %v1894 = vsel %vm1810, 1, 0
    %v1895 = vsel %vm1811, 1, 0
    %v1896 = vsel %vm1812, 1, 0
    %v1897 = vsel %vm1813, 1, 0
    %v1898 = vsel %vm1814, 1, 0
    %v1899 = vsel %vm1815, 1, 0
    %v1900 = vsel %vm1816, 1, 0
    %v1901 = vsel %vm1817, 1, 0
    %v1902 = vsel %vm1818, 1, 0
    %v1903 = vsel %vm1819, 1, 0
    %v1904 = vsel %vm1820, 1, 0
    %v1905 = vsel %vm1821, 1, 0
    %v1906 = vsel %vm1822, 1, 0
    %v1907 = vsel %vm1823, 1, 0
    %v1908 = vsel %vm1824, 1, 0
    %v1909 = vsel %vm1825, 1, 0
    %v1910 = vsel %vm1826, 1, 0
    %v1911 = vsel %vm1827, 1, 0
    %v1912 = vsel %vm1828, 1, 0
    %v1913 = vsel %vm1829, 1, 0
    %v1914 = vsel %vm1830, 1, 0
    %v1915 = vsel %vm1831, 1, 0
    %v1916 = vsel %vm1832, 1, 0
    %v1917 = vsel %vm1833, 1, 0
    %v1918 = vsel %vm1834, 1, 0
    %v1919 = vsel %vm1835, 1, 0
    %v1920 = vsel %vm1836, 1, 0
    %v1921 = vsel %vm1837, 1, 0
    %v1922 = vsel %vm1838, 1, 0
    %v1923 = vsel %vm1839, 1, 0
    %v1924 = vsel %vm1840, 1, 0
    %v1925 = vsel %vm1841, 1, 0
    %v1926 = vsel %vm1842, 1, 0
    %v1927 = vsel %vm1843, 1, 0
    %v1928 = vsel %vm1844, 1, 0
    %v1929 = vsel %vm1845, 1, 0
    %v1930 = vsel %vm1846, 1, 0
    %v1931 = vsel %vm1847, 1, 0
    %v1932 = vsel %vm1848, 1, 0
    %v1933 = vsel %vm1849, 1, 0
    %v1934 = vsel %vm1850, 1, 0
    %v1935 = vsel %vm1851, 1, 0
    %v1936 = vsel %vm1852, 1, 0
    %v1937 = vsel %vm1853, 1, 0
    %v1938 = vsel %vm1854, 1, 0
    %v1939 = vsel %vm1855, 1, 0
    %v1940 = vsel %vm1856, 1, 0
    %v1941 = vsel %vm1857, 1, 0
    %v1942 = vsel %vm1858, 1, 0
    %v1943 = vsel %vm1859, 1, 0
    %v1944 = vsel %vm1860, 1, 0
    %v1945 = vsel %vm1861, 1, 0
    %v1946 = vsel %vm1862, 1, 0
    %v1947 = vsel %vm1863, 1, 0
    %v1948 = vsel %vm1864, 1, 0
    %v1949 = vsel %vm1865, 1, 0
    %v1950 = vsel %vm1866, 1, 0
    %v1951 = vsel %vm1867, 1, 0
    %v1952 = vsel %vm1868, 1, 0
    %v1953 = vsel %vm1869, 1, 0
    %v1954 = vsel %vm1870, 1, 0
    %v1955 = vsel %vm1871, 1, 0
    %v1956 = vsel %vm1872, 1, 0
    %v1957 = vsel %vm1873, 1, 0
    %v1958 = vsel %vm1874, 1, 0
    %v1959 = vsel %vm1875, 1, 0
    %v1960 = vsel %vm1876, 1, 0
    %v1961 = vcvt.s32.f32 %v1877
    %v1962 = vcvt.s32.f32 %v1878
    %v1963 = vcvt.s32.f32 %v1879
    %v1964 = vcvt.s32.f32 %v1880
    %v1965 = vcvt.s32.f32 %v1881
    %v1966 = vcvt.s32.f32 %v1882
    %v1967 = vcvt.s32.f32 %v1883
    %v1968 = vcvt.s32.f32 %v1884
    %v1969 = vcvt.s32.f32 %v1885
    %v1970 = vcvt.s32.f32 %v1886
    %v1971 = vcvt.s32.f32 %v1887
    %v1972 = vcvt.s32.f32 %v1888
    %v1973 = vcvt.s32.f32 %v1889
    %v1974 = vcvt.s32.f32 %v1890
    %v1975 = vcvt.s32.f32 %v1891
    %v1976 = vcvt.s32.f32 %v1892
    %v1977 = vcvt.s32.f32 %v1893
    %v1978 = vcvt.s32.f32 %v1894
    %v1979 = vcvt.s32.f32 %v1895
    %v1980 = vcvt.s32.f32 %v1896
    %v1981 = vcvt.s32.f32 %v1897
    %v1982 = vcvt.s32.f32 %v1898
    %v1983 = vcvt.s32.f32 %v1899
    %v1984 = vcvt.s32.f32 %v1900
    %v1985 = vcvt.s32.f32 %v1901
    %v1986 = vcvt.s32.f32 %v1902
    %v1987 = vcvt.s32.f32 %v1903
    %v1988 = vcvt.s32.f32 %v1904
    %v1989 = vcvt.s32.f32 %v1905
    %v1990 = vcvt.s32.f32 %v1906
    %v1991 = vcvt.s32.f32 %v1907
    %v1992 = vcvt.s32.f32 %v1908
    %v1993 = vcvt.s32.f32 %v1909
    %v1994 = vcvt.s32.f32 %v1910
    %v1995 = vcvt.s32.f32 %v1911
    %v1996 = vcvt.s32.f32 %v1912
    %v1997 = vcvt.s32.f32 %v1913
    %v1998 = vcvt.s32.f32 %v1914
    %v1999 = vcvt.s32.f32 %v1915
    %v2000 = vcvt.s32.f32 %v1916
    %v2001 = vcvt.s32.f32 %v1917
    %v2002 = vcvt.s32.f32 %v1918
    %v2003 = vcvt.s32.f32 %v1919
    %v2004 = vcvt.s32.f32 %v1920
    %v2005 = vcvt.s32.f32 %v1921
    %v2006 = vcvt.s32.f32 %v1922
    %v2007 = vcvt.s32.f32 %v1923
    %v2008 = vcvt.s32.f32 %v1924
    %v2009 = vcvt.s32.f32 %v1925
    %v2010 = vcvt.s32.f32 %v1926
    %v2011 = vcvt.s32.f32 %v1927
    %v2012 = vcvt.s32.f32 %v1928
    %v2013 = vcvt.s32.f32 %v1929
    %v2014 = vcvt.s32.f32 %v1930
    %v2015 = vcvt.s32.f32 %v1931
    %v2016 = vcvt.s32.f32 %v1932
    %v2017 = vcvt.s32.f32 %v1933
    %v2018 = vcvt.s32.f32 %v1934
    %v2019 = vcvt.s32.f32 %v1935
    %v2020 = vcvt.s32.f32 %v1936
    %v2021 = vcvt.s32.f32 %v1937
    %v2022 = vcvt.s32.f32 %v1938
    %v2023 = vcvt.s32.f32 %v1939
    %v2024 = vcvt.s32.f32 %v1940
    %v2025 = vcvt.s32.f32 %v1941
    %v2026 = vcvt.s32.f32 %v1942
    %v2027 = vcvt.s32.f32 %v1943
    %v2028 = vcvt.s32.f32 %v1944
    %v2029 = vcvt.s32.f32 %v1945
    %v2030 = vcvt.s32.f32 %v1946
    %v2031 = vcvt.s32.f32 %v1947
    %v2032 = vcvt.s32.f32 %v1948
    %v2033 = vcvt.s32.f32 %v1949
    %v2034 = vcvt.s32.f32 %v1950
    %v2035 = vcvt.s32.f32 %v1951
    %v2036 = vcvt.s32.f32 %v1952
    %v2037 = vcvt.s32.f32 %v1953
    %v2038 = vcvt.s32.f32 %v1954
    %v2039 = vcvt.s32.f32 %v1955
    %v2040 = vcvt.s32.f32 %v1956
    %v2041 = vcvt.s32.f32 %v1957
    %v2042 = vcvt.s32.f32 %v1958
    %v2043 = vcvt.s32.f32 %v1959
    %v2044 = vcvt.s32.f32 %v1960
    %v2046 = vsel %vm320, %v1761, 0
    %v2049 = vsel %vm320, %v1763, 0
    %v2052 = vsel %vm320, %v1765, 0
    %v2055 = vsel %vm320, %v1767, 0
    %v2058 = vsel %vm320, %v1769, 0
    %v2061 = vsel %vm320, %v1771, 0
    %v2064 = vsel %vm320, %v1773, 0
    %v2067 = vsel %vm320, %v1775, 0
    %v2070 = vsel %vm320, %v1777, 0
    %v2073 = vsel %vm320, %v1779, 0
    %v2076 = vsel %vm320, %v1781, 0
    %v2079 = vsel %vm320, %v1783, 0
    %v2082 = vsel %vm320, %v1785, 0
    %v2085 = vsel %vm320, %v1787, 0
    %2087 = vmatpush.msra.mxu0 %v2006
    %2088 = vmatpush.msra.mxu0 %v2003
    %2089 = vmatpush.msra.mxu0 %v2000
    %2090 = vmatpush.msra.mxu0 %v1997
    %2091 = vmatpush.msra.mxu0 %v1994
    %2092 = vmatpush.msra.mxu0 %v1991
    %2093 = vmatpush.msra.mxu0 %v1988
    %2094 = vmatpush.msra.mxu0 %v1985
    %2095 = vmatpush.msra.mxu0 %v1982
    %2096 = vmatpush.msra.mxu0 %v1979
    %2097 = vmatpush.msra.mxu0 %v1976
    %2098 = vmatpush.msra.mxu0 %v1973
    %2099 = vmatpush.msra.mxu0 %v1970
    %2100 = vmatpush.msra.mxu0 %v1967
    %2101 = vmatpush.msra.mxu0 %v1964
    %2102 = vmatpush.msra.mxu0 %v1961
    %2103 = vmatmul.f32.gmra.mxu0 %v1760
    %v2104 = vpop.f32.mrf.mxu0
    %v2105 = vadd.f32 0.0, %v2104
    %2106 = vmatmul.f32.gmra.mxu0 %v1762
    %v2107 = vpop.f32.mrf.mxu0
    %v2108 = vadd.f32 0.0, %v2107
    %2109 = vmatmul.f32.gmra.mxu0 %v1764
    %v2110 = vpop.f32.mrf.mxu0
    %v2111 = vadd.f32 0.0, %v2110
    %2112 = vmatmul.f32.gmra.mxu0 %v1766
    %v2113 = vpop.f32.mrf.mxu0
    %v2114 = vadd.f32 0.0, %v2113
    %2115 = vmatmul.f32.gmra.mxu0 %v1768
    %v2116 = vpop.f32.mrf.mxu0
    %v2117 = vadd.f32 0.0, %v2116
    %2118 = vmatmul.f32.gmra.mxu0 %v1770
    %v2119 = vpop.f32.mrf.mxu0
    %v2120 = vadd.f32 0.0, %v2119
    %2121 = vmatmul.f32.gmra.mxu0 %v1772
    %v2122 = vpop.f32.mrf.mxu0
    %v2123 = vadd.f32 0.0, %v2122
    %2124 = vmatmul.f32.gmra.mxu0 %v1774
    %v2125 = vpop.f32.mrf.mxu0
    %v2126 = vadd.f32 0.0, %v2125
    %2127 = vmatmul.f32.gmra.mxu0 %v1776
    %v2128 = vpop.f32.mrf.mxu0
    %v2129 = vadd.f32 0.0, %v2128
    %2130 = vmatmul.f32.gmra.mxu0 %v1778
    %v2131 = vpop.f32.mrf.mxu0
    %v2132 = vadd.f32 0.0, %v2131
    %2133 = vmatmul.f32.gmra.mxu0 %v1780
    %v2134 = vpop.f32.mrf.mxu0
    %v2135 = vadd.f32 0.0, %v2134
    %2136 = vmatmul.f32.gmra.mxu0 %v1782
    %v2137 = vpop.f32.mrf.mxu0
    %v2138 = vadd.f32 0.0, %v2137
    %2139 = vmatmul.f32.gmra.mxu0 %v1784
    %v2140 = vpop.f32.mrf.mxu0
    %v2141 = vadd.f32 0.0, %v2140
    %2142 = vmatmul.f32.gmra.mxu0 %v1786
    %v2143 = vpop.f32.mrf.mxu0
    %v2144 = vadd.f32 0.0, %v2143
    %2145 = vdwg.mxu0
    %2146 = vmatpush.msra.mxu0 0.0
    %2147 = vmatpush.msra.mxu0 0.0
    %2148 = vmatpush.msra.mxu0 0.0
    %2149 = vmatpush.msra.mxu0 0.0
    %2150 = vmatpush.msra.mxu0 %v2042
    %2151 = vmatpush.msra.mxu0 %v2039
    %2152 = vmatpush.msra.mxu0 %v2036
    %2153 = vmatpush.msra.mxu0 %v2033
    %2154 = vmatpush.msra.mxu0 %v2030
    %2155 = vmatpush.msra.mxu0 %v2027
    %2156 = vmatpush.msra.mxu0 %v2024
    %2157 = vmatpush.msra.mxu0 %v2021
    %2158 = vmatpush.msra.mxu0 %v2018
    %2159 = vmatpush.msra.mxu0 %v2015
    %2160 = vmatpush.msra.mxu0 %v2012
    %2161 = vmatpush.msra.mxu0 %v2009
    %2162 = vmatmul.f32.gmra.mxu0 %v2046
    %v2163 = vpop.f32.mrf.mxu0
    %v2164 = vadd.f32 %v2105, %v2163
    %2165 = vmatmul.f32.gmra.mxu0 %v2049
    %v2166 = vpop.f32.mrf.mxu0
    %v2167 = vadd.f32 %v2108, %v2166
    %2168 = vmatmul.f32.gmra.mxu0 %v2052
    %v2169 = vpop.f32.mrf.mxu0
    %v2170 = vadd.f32 %v2111, %v2169
    %2171 = vmatmul.f32.gmra.mxu0 %v2055
    %v2172 = vpop.f32.mrf.mxu0
    %v2173 = vadd.f32 %v2114, %v2172
    %2174 = vmatmul.f32.gmra.mxu0 %v2058
    %v2175 = vpop.f32.mrf.mxu0
    %v2176 = vadd.f32 %v2117, %v2175
    %2177 = vmatmul.f32.gmra.mxu0 %v2061
    %v2178 = vpop.f32.mrf.mxu0
    %v2179 = vadd.f32 %v2120, %v2178
    %2180 = vmatmul.f32.gmra.mxu0 %v2064
    %v2181 = vpop.f32.mrf.mxu0
    %v2182 = vadd.f32 %v2123, %v2181
    %2183 = vmatmul.f32.gmra.mxu0 %v2067
    %v2184 = vpop.f32.mrf.mxu0
    %v2185 = vadd.f32 %v2126, %v2184
    %2186 = vmatmul.f32.gmra.mxu0 %v2070
    %v2187 = vpop.f32.mrf.mxu0
    %v2188 = vadd.f32 %v2129, %v2187
    %2189 = vmatmul.f32.gmra.mxu0 %v2073
    %v2190 = vpop.f32.mrf.mxu0
    %v2191 = vadd.f32 %v2132, %v2190
    %2192 = vmatmul.f32.gmra.mxu0 %v2076
    %v2193 = vpop.f32.mrf.mxu0
    %v2194 = vadd.f32 %v2135, %v2193
    %2195 = vmatmul.f32.gmra.mxu0 %v2079
    %v2196 = vpop.f32.mrf.mxu0
    %v2197 = vadd.f32 %v2138, %v2196
    %2198 = vmatmul.f32.gmra.mxu0 %v2082
    %v2199 = vpop.f32.mrf.mxu0
    %v2200 = vadd.f32 %v2141, %v2199
    %2201 = vmatmul.f32.gmra.mxu0 %v2085
    %v2202 = vpop.f32.mrf.mxu0
    %v2203 = vadd.f32 %v2144, %v2202
    %2204 = vdwg.mxu0
    %2205 = vmatpush.msra.mxu0 %v2007
    %2206 = vmatpush.msra.mxu0 %v2004
    %2207 = vmatpush.msra.mxu0 %v2001
    %2208 = vmatpush.msra.mxu0 %v1998
    %2209 = vmatpush.msra.mxu0 %v1995
    %2210 = vmatpush.msra.mxu0 %v1992
    %2211 = vmatpush.msra.mxu0 %v1989
    %2212 = vmatpush.msra.mxu0 %v1986
    %2213 = vmatpush.msra.mxu0 %v1983
    %2214 = vmatpush.msra.mxu0 %v1980
    %2215 = vmatpush.msra.mxu0 %v1977
    %2216 = vmatpush.msra.mxu0 %v1974
    %2217 = vmatpush.msra.mxu0 %v1971
    %2218 = vmatpush.msra.mxu0 %v1968
    %2219 = vmatpush.msra.mxu0 %v1965
    %2220 = vmatpush.msra.mxu0 %v1962
    %2221 = vmatmul.f32.gmra.mxu0 %v1760
    %v2222 = vpop.f32.mrf.mxu0
    %v2223 = vadd.f32 0.0, %v2222
    %2224 = vmatmul.f32.gmra.mxu0 %v1762
    %v2225 = vpop.f32.mrf.mxu0
    %v2226 = vadd.f32 0.0, %v2225
    %2227 = vmatmul.f32.gmra.mxu0 %v1764
    %v2228 = vpop.f32.mrf.mxu0
    %v2229 = vadd.f32 0.0, %v2228
    %2230 = vmatmul.f32.gmra.mxu0 %v1766
    %v2231 = vpop.f32.mrf.mxu0
    %v2232 = vadd.f32 0.0, %v2231
    %2233 = vmatmul.f32.gmra.mxu0 %v1768
    %v2234 = vpop.f32.mrf.mxu0
    %v2235 = vadd.f32 0.0, %v2234
    %2236 = vmatmul.f32.gmra.mxu0 %v1770
    %v2237 = vpop.f32.mrf.mxu0
    %v2238 = vadd.f32 0.0, %v2237
    %2239 = vmatmul.f32.gmra.mxu0 %v1772
    %v2240 = vpop.f32.mrf.mxu0
    %v2241 = vadd.f32 0.0, %v2240
    %2242 = vmatmul.f32.gmra.mxu0 %v1774
    %v2243 = vpop.f32.mrf.mxu0
    %v2244 = vadd.f32 0.0, %v2243
    %2245 = vmatmul.f32.gmra.mxu0 %v1776
    %v2246 = vpop.f32.mrf.mxu0
    %v2247 = vadd.f32 0.0, %v2246
    %2248 = vmatmul.f32.gmra.mxu0 %v1778
    %v2249 = vpop.f32.mrf.mxu0
    %v2250 = vadd.f32 0.0, %v2249
    %2251 = vmatmul.f32.gmra.mxu0 %v1780
    %v2252 = vpop.f32.mrf.mxu0
    %v2253 = vadd.f32 0.0, %v2252
    %2254 = vmatmul.f32.gmra.mxu0 %v1782
    %v2255 = vpop.f32.mrf.mxu0
    %v2256 = vadd.f32 0.0, %v2255
    %2257 = vmatmul.f32.gmra.mxu0 %v1784
    %v2258 = vpop.f32.mrf.mxu0
    %v2259 = vadd.f32 0.0, %v2258
    %2260 = vmatmul.f32.gmra.mxu0 %v1786
    %v2261 = vpop.f32.mrf.mxu0
    %v2262 = vadd.f32 0.0, %v2261
    %2263 = vdwg.mxu0
    %2264 = vmatpush.msra.mxu0 0.0
    %2265 = vmatpush.msra.mxu0 0.0
    %2266 = vmatpush.msra.mxu0 0.0
    %2267 = vmatpush.msra.mxu0 0.0
    %2268 = vmatpush.msra.mxu0 %v2043
    %2269 = vmatpush.msra.mxu0 %v2040
    %2270 = vmatpush.msra.mxu0 %v2037
    %2271 = vmatpush.msra.mxu0 %v2034
    %2272 = vmatpush.msra.mxu0 %v2031
    %2273 = vmatpush.msra.mxu0 %v2028
    %2274 = vmatpush.msra.mxu0 %v2025
    %2275 = vmatpush.msra.mxu0 %v2022
    %2276 = vmatpush.msra.mxu0 %v2019
    %2277 = vmatpush.msra.mxu0 %v2016
    %2278 = vmatpush.msra.mxu0 %v2013
    %2279 = vmatpush.msra.mxu0 %v2010
    %2280 = vmatmul.f32.gmra.mxu0 %v2046
    %v2281 = vpop.f32.mrf.mxu0
    %v2282 = vadd.f32 %v2223, %v2281
    %2283 = vmatmul.f32.gmra.mxu0 %v2049
    %v2284 = vpop.f32.mrf.mxu0
    %v2285 = vadd.f32 %v2226, %v2284
    %2286 = vmatmul.f32.gmra.mxu0 %v2052
    %v2287 = vpop.f32.mrf.mxu0
    %v2288 = vadd.f32 %v2229, %v2287
    %2289 = vmatmul.f32.gmra.mxu0 %v2055
    %v2290 = vpop.f32.mrf.mxu0
    %v2291 = vadd.f32 %v2232, %v2290
    %2292 = vmatmul.f32.gmra.mxu0 %v2058
    %v2293 = vpop.f32.mrf.mxu0
    %v2294 = vadd.f32 %v2235, %v2293
    %2295 = vmatmul.f32.gmra.mxu0 %v2061
    %v2296 = vpop.f32.mrf.mxu0
    %v2297 = vadd.f32 %v2238, %v2296
    %2298 = vmatmul.f32.gmra.mxu0 %v2064
    %v2299 = vpop.f32.mrf.mxu0
    %v2300 = vadd.f32 %v2241, %v2299
    %2301 = vmatmul.f32.gmra.mxu0 %v2067
    %v2302 = vpop.f32.mrf.mxu0
    %v2303 = vadd.f32 %v2244, %v2302
    %2304 = vmatmul.f32.gmra.mxu0 %v2070
    %v2305 = vpop.f32.mrf.mxu0
    %v2306 = vadd.f32 %v2247, %v2305
    %2307 = vmatmul.f32.gmra.mxu0 %v2073
    %v2308 = vpop.f32.mrf.mxu0
    %v2309 = vadd.f32 %v2250, %v2308
    %2310 = vmatmul.f32.gmra.mxu0 %v2076
    %v2311 = vpop.f32.mrf.mxu0
    %v2312 = vadd.f32 %v2253, %v2311
    %2313 = vmatmul.f32.gmra.mxu0 %v2079
    %v2314 = vpop.f32.mrf.mxu0
    %v2315 = vadd.f32 %v2256, %v2314
    %2316 = vmatmul.f32.gmra.mxu0 %v2082
    %v2317 = vpop.f32.mrf.mxu0
    %v2318 = vadd.f32 %v2259, %v2317
    %2319 = vmatmul.f32.gmra.mxu0 %v2085
    %v2320 = vpop.f32.mrf.mxu0
    %v2321 = vadd.f32 %v2262, %v2320
    %2322 = vdwg.mxu0
    %2323 = vmatpush.msra.mxu0 %v2008
    %2324 = vmatpush.msra.mxu0 %v2005
    %2325 = vmatpush.msra.mxu0 %v2002
    %2326 = vmatpush.msra.mxu0 %v1999
    %2327 = vmatpush.msra.mxu0 %v1996
    %2328 = vmatpush.msra.mxu0 %v1993
    %2329 = vmatpush.msra.mxu0 %v1990
    %2330 = vmatpush.msra.mxu0 %v1987
    %2331 = vmatpush.msra.mxu0 %v1984
    %2332 = vmatpush.msra.mxu0 %v1981
    %2333 = vmatpush.msra.mxu0 %v1978
    %2334 = vmatpush.msra.mxu0 %v1975
    %2335 = vmatpush.msra.mxu0 %v1972
    %2336 = vmatpush.msra.mxu0 %v1969
    %2337 = vmatpush.msra.mxu0 %v1966
    %2338 = vmatpush.msra.mxu0 %v1963
    %2339 = vmatmul.f32.gmra.mxu0 %v1760
    %v2340 = vpop.f32.mrf.mxu0
    %v2341 = vadd.f32 0.0, %v2340
    %2342 = vmatmul.f32.gmra.mxu0 %v1762
    %v2343 = vpop.f32.mrf.mxu0
    %v2344 = vadd.f32 0.0, %v2343
    %2345 = vmatmul.f32.gmra.mxu0 %v1764
    %v2346 = vpop.f32.mrf.mxu0
    %v2347 = vadd.f32 0.0, %v2346
    %2348 = vmatmul.f32.gmra.mxu0 %v1766
    %v2349 = vpop.f32.mrf.mxu0
    %v2350 = vadd.f32 0.0, %v2349
    %2351 = vmatmul.f32.gmra.mxu0 %v1768
    %v2352 = vpop.f32.mrf.mxu0
    %v2353 = vadd.f32 0.0, %v2352
    %2354 = vmatmul.f32.gmra.mxu0 %v1770
    %v2355 = vpop.f32.mrf.mxu0
    %v2356 = vadd.f32 0.0, %v2355
    %2357 = vmatmul.f32.gmra.mxu0 %v1772
    %v2358 = vpop.f32.mrf.mxu0
    %v2359 = vadd.f32 0.0, %v2358
    %2360 = vmatmul.f32.gmra.mxu0 %v1774
    %v2361 = vpop.f32.mrf.mxu0
    %v2362 = vadd.f32 0.0, %v2361
    %2363 = vmatmul.f32.gmra.mxu0 %v1776
    %v2364 = vpop.f32.mrf.mxu0
    %v2365 = vadd.f32 0.0, %v2364
    %2366 = vmatmul.f32.gmra.mxu0 %v1778
    %v2367 = vpop.f32.mrf.mxu0
    %v2368 = vadd.f32 0.0, %v2367
    %2369 = vmatmul.f32.gmra.mxu0 %v1780
    %v2370 = vpop.f32.mrf.mxu0
    %v2371 = vadd.f32 0.0, %v2370
    %2372 = vmatmul.f32.gmra.mxu0 %v1782
    %v2373 = vpop.f32.mrf.mxu0
    %v2374 = vadd.f32 0.0, %v2373
    %2375 = vmatmul.f32.gmra.mxu0 %v1784
    %v2376 = vpop.f32.mrf.mxu0
    %v2377 = vadd.f32 0.0, %v2376
    %2378 = vmatmul.f32.gmra.mxu0 %v1786
    %v2379 = vpop.f32.mrf.mxu0
    %v2380 = vadd.f32 0.0, %v2379
    %2381 = vdwg.mxu0
    %2382 = vmatpush.msra.mxu0 0.0
    %2383 = vmatpush.msra.mxu0 0.0
    %2384 = vmatpush.msra.mxu0 0.0
    %2385 = vmatpush.msra.mxu0 0.0
    %2386 = vmatpush.msra.mxu0 %v2044
    %2387 = vmatpush.msra.mxu0 %v2041
    %2388 = vmatpush.msra.mxu0 %v2038
    %2389 = vmatpush.msra.mxu0 %v2035
    %2390 = vmatpush.msra.mxu0 %v2032
    %2391 = vmatpush.msra.mxu0 %v2029
    %2392 = vmatpush.msra.mxu0 %v2026
    %2393 = vmatpush.msra.mxu0 %v2023
    %2394 = vmatpush.msra.mxu0 %v2020
    %2395 = vmatpush.msra.mxu0 %v2017
    %2396 = vmatpush.msra.mxu0 %v2014
    %2397 = vmatpush.msra.mxu0 %v2011
    %2398 = vmatmul.f32.gmra.mxu0 %v2046
    %v2399 = vpop.f32.mrf.mxu0
    %v2400 = vadd.f32 %v2341, %v2399
    %2401 = vmatmul.f32.gmra.mxu0 %v2049
    %v2402 = vpop.f32.mrf.mxu0
    %v2403 = vadd.f32 %v2344, %v2402
    %2404 = vmatmul.f32.gmra.mxu0 %v2052
    %v2405 = vpop.f32.mrf.mxu0
    %v2406 = vadd.f32 %v2347, %v2405
    %2407 = vmatmul.f32.gmra.mxu0 %v2055
    %v2408 = vpop.f32.mrf.mxu0
    %v2409 = vadd.f32 %v2350, %v2408
    %2410 = vmatmul.f32.gmra.mxu0 %v2058
    %v2411 = vpop.f32.mrf.mxu0
    %v2412 = vadd.f32 %v2353, %v2411
    %2413 = vmatmul.f32.gmra.mxu0 %v2061
    %v2414 = vpop.f32.mrf.mxu0
    %v2415 = vadd.f32 %v2356, %v2414
    %2416 = vmatmul.f32.gmra.mxu0 %v2064
    %v2417 = vpop.f32.mrf.mxu0
    %v2418 = vadd.f32 %v2359, %v2417
    %2419 = vmatmul.f32.gmra.mxu0 %v2067
    %v2420 = vpop.f32.mrf.mxu0
    %v2421 = vadd.f32 %v2362, %v2420
    %2422 = vmatmul.f32.gmra.mxu0 %v2070
    %v2423 = vpop.f32.mrf.mxu0
    %v2424 = vadd.f32 %v2365, %v2423
    %2425 = vmatmul.f32.gmra.mxu0 %v2073
    %v2426 = vpop.f32.mrf.mxu0
    %v2427 = vadd.f32 %v2368, %v2426
    %2428 = vmatmul.f32.gmra.mxu0 %v2076
    %v2429 = vpop.f32.mrf.mxu0
    %v2430 = vadd.f32 %v2371, %v2429
    %2431 = vmatmul.f32.gmra.mxu0 %v2079
    %v2432 = vpop.f32.mrf.mxu0
    %v2433 = vadd.f32 %v2374, %v2432
    %2434 = vmatmul.f32.gmra.mxu0 %v2082
    %v2435 = vpop.f32.mrf.mxu0
    %v2436 = vadd.f32 %v2377, %v2435
    %2437 = vmatmul.f32.gmra.mxu0 %v2085
    %v2438 = vpop.f32.mrf.mxu0
    %v2439 = vadd.f32 %v2380, %v2438
    %2440 = vdwg.mxu0
    %v2442 = vsel %vm320, %v892, 0
    %v2445 = vsel %vm320, %v894, 0
    %v2448 = vsel %vm320, %v896, 0
    %v2451 = vsel %vm320, %v898, 0
    %v2454 = vsel %vm320, %v900, 0
    %v2457 = vsel %vm320, %v902, 0
    %v2460 = vsel %vm320, %v904, 0
    %v2463 = vsel %vm320, %v906, 0
    %v2466 = vsel %vm320, %v908, 0
    %v2469 = vsel %vm320, %v910, 0
    %v2472 = vsel %vm320, %v912, 0
    %v2475 = vsel %vm320, %v914, 0
    %v2478 = vsel %vm320, %v916, 0
    %v2481 = vsel %vm320, %v918, 0
    %2483 = vmatpush.msra.mxu0 %v1136
    %2484 = vmatpush.msra.mxu0 %v1133
    %2485 = vmatpush.msra.mxu0 %v1130
    %2486 = vmatpush.msra.mxu0 %v1127
    %2487 = vmatpush.msra.mxu0 %v1124
    %2488 = vmatpush.msra.mxu0 %v1121
    %2489 = vmatpush.msra.mxu0 %v1118
    %2490 = vmatpush.msra.mxu0 %v1115
    %2491 = vmatpush.msra.mxu0 %v1112
    %2492 = vmatpush.msra.mxu0 %v1109
    %2493 = vmatpush.msra.mxu0 %v1106
    %2494 = vmatpush.msra.mxu0 %v1103
    %2495 = vmatpush.msra.mxu0 %v1100
    %2496 = vmatpush.msra.mxu0 %v1097
    %2497 = vmatpush.msra.mxu0 %v1094
    %2498 = vmatpush.msra.mxu0 %v1091
    %2499 = vmatmul.f32.gmra.mxu0 %v891
    %v2500 = vpop.f32.mrf.mxu0
    %v2501 = vadd.f32 %v2164, %v2500
    %2502 = vmatmul.f32.gmra.mxu0 %v893
    %v2503 = vpop.f32.mrf.mxu0
    %v2504 = vadd.f32 %v2167, %v2503
    %2505 = vmatmul.f32.gmra.mxu0 %v895
    %v2506 = vpop.f32.mrf.mxu0
    %v2507 = vadd.f32 %v2170, %v2506
    %2508 = vmatmul.f32.gmra.mxu0 %v897
    %v2509 = vpop.f32.mrf.mxu0
    %v2510 = vadd.f32 %v2173, %v2509
    %2511 = vmatmul.f32.gmra.mxu0 %v899
    %v2512 = vpop.f32.mrf.mxu0
    %v2513 = vadd.f32 %v2176, %v2512
    %2514 = vmatmul.f32.gmra.mxu0 %v901
    %v2515 = vpop.f32.mrf.mxu0
    %v2516 = vadd.f32 %v2179, %v2515
    %2517 = vmatmul.f32.gmra.mxu0 %v903
    %v2518 = vpop.f32.mrf.mxu0
    %v2519 = vadd.f32 %v2182, %v2518
    %2520 = vmatmul.f32.gmra.mxu0 %v905
    %v2521 = vpop.f32.mrf.mxu0
    %v2522 = vadd.f32 %v2185, %v2521
    %2523 = vmatmul.f32.gmra.mxu0 %v907
    %v2524 = vpop.f32.mrf.mxu0
    %v2525 = vadd.f32 %v2188, %v2524
    %2526 = vmatmul.f32.gmra.mxu0 %v909
    %v2527 = vpop.f32.mrf.mxu0
    %v2528 = vadd.f32 %v2191, %v2527
    %2529 = vmatmul.f32.gmra.mxu0 %v911
    %v2530 = vpop.f32.mrf.mxu0
    %v2531 = vadd.f32 %v2194, %v2530
    %2532 = vmatmul.f32.gmra.mxu0 %v913
    %v2533 = vpop.f32.mrf.mxu0
    %v2534 = vadd.f32 %v2197, %v2533
    %2535 = vmatmul.f32.gmra.mxu0 %v915
    %v2536 = vpop.f32.mrf.mxu0
    %v2537 = vadd.f32 %v2200, %v2536
    %2538 = vmatmul.f32.gmra.mxu0 %v917
    %v2539 = vpop.f32.mrf.mxu0
    %v2540 = vadd.f32 %v2203, %v2539
    %2541 = vdwg.mxu0
    %2542 = vmatpush.msra.mxu0 0.0
    %2543 = vmatpush.msra.mxu0 0.0
    %2544 = vmatpush.msra.mxu0 0.0
    %2545 = vmatpush.msra.mxu0 0.0
    %2546 = vmatpush.msra.mxu0 %v1172
    %2547 = vmatpush.msra.mxu0 %v1169
    %2548 = vmatpush.msra.mxu0 %v1166
    %2549 = vmatpush.msra.mxu0 %v1163
    %2550 = vmatpush.msra.mxu0 %v1160
    %2551 = vmatpush.msra.mxu0 %v1157
    %2552 = vmatpush.msra.mxu0 %v1154
    %2553 = vmatpush.msra.mxu0 %v1151
    %2554 = vmatpush.msra.mxu0 %v1148
    %2555 = vmatpush.msra.mxu0 %v1145
    %2556 = vmatpush.msra.mxu0 %v1142
    %2557 = vmatpush.msra.mxu0 %v1139
    %2558 = vmatmul.f32.gmra.mxu0 %v2442
    %v2559 = vpop.f32.mrf.mxu0
    %v2560 = vadd.f32 %v2501, %v2559
    %2561 = vmatmul.f32.gmra.mxu0 %v2445
    %v2562 = vpop.f32.mrf.mxu0
    %v2563 = vadd.f32 %v2504, %v2562
    %2564 = vmatmul.f32.gmra.mxu0 %v2448
    %v2565 = vpop.f32.mrf.mxu0
    %v2566 = vadd.f32 %v2507, %v2565
    %2567 = vmatmul.f32.gmra.mxu0 %v2451
    %v2568 = vpop.f32.mrf.mxu0
    %v2569 = vadd.f32 %v2510, %v2568
    %2570 = vmatmul.f32.gmra.mxu0 %v2454
    %v2571 = vpop.f32.mrf.mxu0
    %v2572 = vadd.f32 %v2513, %v2571
    %2573 = vmatmul.f32.gmra.mxu0 %v2457
    %v2574 = vpop.f32.mrf.mxu0
    %v2575 = vadd.f32 %v2516, %v2574
    %2576 = vmatmul.f32.gmra.mxu0 %v2460
    %v2577 = vpop.f32.mrf.mxu0
    %v2578 = vadd.f32 %v2519, %v2577
    %2579 = vmatmul.f32.gmra.mxu0 %v2463
    %v2580 = vpop.f32.mrf.mxu0
    %v2581 = vadd.f32 %v2522, %v2580
    %2582 = vmatmul.f32.gmra.mxu0 %v2466
    %v2583 = vpop.f32.mrf.mxu0
    %v2584 = vadd.f32 %v2525, %v2583
    %2585 = vmatmul.f32.gmra.mxu0 %v2469
    %v2586 = vpop.f32.mrf.mxu0
    %v2587 = vadd.f32 %v2528, %v2586
    %2588 = vmatmul.f32.gmra.mxu0 %v2472
    %v2589 = vpop.f32.mrf.mxu0
    %v2590 = vadd.f32 %v2531, %v2589
    %2591 = vmatmul.f32.gmra.mxu0 %v2475
    %v2592 = vpop.f32.mrf.mxu0
    %v2593 = vadd.f32 %v2534, %v2592
    %2594 = vmatmul.f32.gmra.mxu0 %v2478
    %v2595 = vpop.f32.mrf.mxu0
    %v2596 = vadd.f32 %v2537, %v2595
    %2597 = vmatmul.f32.gmra.mxu0 %v2481
    %v2598 = vpop.f32.mrf.mxu0
    %v2599 = vadd.f32 %v2540, %v2598
    %2600 = vdwg.mxu0
    %2601 = vmatpush.msra.mxu0 %v1137
    %2602 = vmatpush.msra.mxu0 %v1134
    %2603 = vmatpush.msra.mxu0 %v1131
    %2604 = vmatpush.msra.mxu0 %v1128
    %2605 = vmatpush.msra.mxu0 %v1125
    %2606 = vmatpush.msra.mxu0 %v1122
    %2607 = vmatpush.msra.mxu0 %v1119
    %2608 = vmatpush.msra.mxu0 %v1116
    %2609 = vmatpush.msra.mxu0 %v1113
    %2610 = vmatpush.msra.mxu0 %v1110
    %2611 = vmatpush.msra.mxu0 %v1107
    %2612 = vmatpush.msra.mxu0 %v1104
    %2613 = vmatpush.msra.mxu0 %v1101
    %2614 = vmatpush.msra.mxu0 %v1098
    %2615 = vmatpush.msra.mxu0 %v1095
    %2616 = vmatpush.msra.mxu0 %v1092
    %2617 = vmatmul.f32.gmra.mxu0 %v891
    %v2618 = vpop.f32.mrf.mxu0
    %v2619 = vadd.f32 %v2282, %v2618
    %2620 = vmatmul.f32.gmra.mxu0 %v893
    %v2621 = vpop.f32.mrf.mxu0
    %v2622 = vadd.f32 %v2285, %v2621
    %2623 = vmatmul.f32.gmra.mxu0 %v895
    %v2624 = vpop.f32.mrf.mxu0
    %v2625 = vadd.f32 %v2288, %v2624
    %2626 = vmatmul.f32.gmra.mxu0 %v897
    %v2627 = vpop.f32.mrf.mxu0
    %v2628 = vadd.f32 %v2291, %v2627
    %2629 = vmatmul.f32.gmra.mxu0 %v899
    %v2630 = vpop.f32.mrf.mxu0
    %v2631 = vadd.f32 %v2294, %v2630
    %2632 = vmatmul.f32.gmra.mxu0 %v901
    %v2633 = vpop.f32.mrf.mxu0
    %v2634 = vadd.f32 %v2297, %v2633
    %2635 = vmatmul.f32.gmra.mxu0 %v903
    %v2636 = vpop.f32.mrf.mxu0
    %v2637 = vadd.f32 %v2300, %v2636
    %2638 = vmatmul.f32.gmra.mxu0 %v905
    %v2639 = vpop.f32.mrf.mxu0
    %v2640 = vadd.f32 %v2303, %v2639
    %2641 = vmatmul.f32.gmra.mxu0 %v907
    %v2642 = vpop.f32.mrf.mxu0
    %v2643 = vadd.f32 %v2306, %v2642
    %2644 = vmatmul.f32.gmra.mxu0 %v909
    %v2645 = vpop.f32.mrf.mxu0
    %v2646 = vadd.f32 %v2309, %v2645
    %2647 = vmatmul.f32.gmra.mxu0 %v911
    %v2648 = vpop.f32.mrf.mxu0
    %v2649 = vadd.f32 %v2312, %v2648
    %2650 = vmatmul.f32.gmra.mxu0 %v913
    %v2651 = vpop.f32.mrf.mxu0
    %v2652 = vadd.f32 %v2315, %v2651
    %2653 = vmatmul.f32.gmra.mxu0 %v915
    %v2654 = vpop.f32.mrf.mxu0
    %v2655 = vadd.f32 %v2318, %v2654
    %2656 = vmatmul.f32.gmra.mxu0 %v917
    %v2657 = vpop.f32.mrf.mxu0
    %v2658 = vadd.f32 %v2321, %v2657
    %2659 = vdwg.mxu0
    %2660 = vmatpush.msra.mxu0 0.0
    %2661 = vmatpush.msra.mxu0 0.0
    %2662 = vmatpush.msra.mxu0 0.0
    %2663 = vmatpush.msra.mxu0 0.0
    %2664 = vmatpush.msra.mxu0 %v1173
    %2665 = vmatpush.msra.mxu0 %v1170
    %2666 = vmatpush.msra.mxu0 %v1167
    %2667 = vmatpush.msra.mxu0 %v1164
    %2668 = vmatpush.msra.mxu0 %v1161
    %2669 = vmatpush.msra.mxu0 %v1158
    %2670 = vmatpush.msra.mxu0 %v1155
    %2671 = vmatpush.msra.mxu0 %v1152
    %2672 = vmatpush.msra.mxu0 %v1149
    %2673 = vmatpush.msra.mxu0 %v1146
    %2674 = vmatpush.msra.mxu0 %v1143
    %2675 = vmatpush.msra.mxu0 %v1140
    %2676 = vmatmul.f32.gmra.mxu0 %v2442
    %v2677 = vpop.f32.mrf.mxu0
    %v2678 = vadd.f32 %v2619, %v2677
    %2679 = vmatmul.f32.gmra.mxu0 %v2445
    %v2680 = vpop.f32.mrf.mxu0
    %v2681 = vadd.f32 %v2622, %v2680
    %2682 = vmatmul.f32.gmra.mxu0 %v2448
    %v2683 = vpop.f32.mrf.mxu0
    %v2684 = vadd.f32 %v2625, %v2683
    %2685 = vmatmul.f32.gmra.mxu0 %v2451
    %v2686 = vpop.f32.mrf.mxu0
    %v2687 = vadd.f32 %v2628, %v2686
    %2688 = vmatmul.f32.gmra.mxu0 %v2454
    %v2689 = vpop.f32.mrf.mxu0
    %v2690 = vadd.f32 %v2631, %v2689
    %2691 = vmatmul.f32.gmra.mxu0 %v2457
    %v2692 = vpop.f32.mrf.mxu0
    %v2693 = vadd.f32 %v2634, %v2692
    %2694 = vmatmul.f32.gmra.mxu0 %v2460
    %v2695 = vpop.f32.mrf.mxu0
    %v2696 = vadd.f32 %v2637, %v2695
    %2697 = vmatmul.f32.gmra.mxu0 %v2463
    %v2698 = vpop.f32.mrf.mxu0
    %v2699 = vadd.f32 %v2640, %v2698
    %2700 = vmatmul.f32.gmra.mxu0 %v2466
    %v2701 = vpop.f32.mrf.mxu0
    %v2702 = vadd.f32 %v2643, %v2701
    %2703 = vmatmul.f32.gmra.mxu0 %v2469
    %v2704 = vpop.f32.mrf.mxu0
    %v2705 = vadd.f32 %v2646, %v2704
    %2706 = vmatmul.f32.gmra.mxu0 %v2472
    %v2707 = vpop.f32.mrf.mxu0
    %v2708 = vadd.f32 %v2649, %v2707
    %2709 = vmatmul.f32.gmra.mxu0 %v2475
    %v2710 = vpop.f32.mrf.mxu0
    %v2711 = vadd.f32 %v2652, %v2710
    %2712 = vmatmul.f32.gmra.mxu0 %v2478
    %v2713 = vpop.f32.mrf.mxu0
    %v2714 = vadd.f32 %v2655, %v2713
    %2715 = vmatmul.f32.gmra.mxu0 %v2481
    %v2716 = vpop.f32.mrf.mxu0
    %v2717 = vadd.f32 %v2658, %v2716
    %2718 = vdwg.mxu0
    %2719 = vmatpush.msra.mxu0 %v1138
    %2720 = vmatpush.msra.mxu0 %v1135
    %2721 = vmatpush.msra.mxu0 %v1132
    %2722 = vmatpush.msra.mxu0 %v1129
    %2723 = vmatpush.msra.mxu0 %v1126
    %2724 = vmatpush.msra.mxu0 %v1123
    %2725 = vmatpush.msra.mxu0 %v1120
    %2726 = vmatpush.msra.mxu0 %v1117
    %2727 = vmatpush.msra.mxu0 %v1114
    %2728 = vmatpush.msra.mxu0 %v1111
    %2729 = vmatpush.msra.mxu0 %v1108
    %2730 = vmatpush.msra.mxu0 %v1105
    %2731 = vmatpush.msra.mxu0 %v1102
    %2732 = vmatpush.msra.mxu0 %v1099
    %2733 = vmatpush.msra.mxu0 %v1096
    %2734 = vmatpush.msra.mxu0 %v1093
    %2735 = vmatmul.f32.gmra.mxu0 %v891
    %v2736 = vpop.f32.mrf.mxu0
    %v2737 = vadd.f32 %v2400, %v2736
    %2738 = vmatmul.f32.gmra.mxu0 %v893
    %v2739 = vpop.f32.mrf.mxu0
    %v2740 = vadd.f32 %v2403, %v2739
    %2741 = vmatmul.f32.gmra.mxu0 %v895
    %v2742 = vpop.f32.mrf.mxu0
    %v2743 = vadd.f32 %v2406, %v2742
    %2744 = vmatmul.f32.gmra.mxu0 %v897
    %v2745 = vpop.f32.mrf.mxu0
    %v2746 = vadd.f32 %v2409, %v2745
    %2747 = vmatmul.f32.gmra.mxu0 %v899
    %v2748 = vpop.f32.mrf.mxu0
    %v2749 = vadd.f32 %v2412, %v2748
    %2750 = vmatmul.f32.gmra.mxu0 %v901
    %v2751 = vpop.f32.mrf.mxu0
    %v2752 = vadd.f32 %v2415, %v2751
    %2753 = vmatmul.f32.gmra.mxu0 %v903
    %v2754 = vpop.f32.mrf.mxu0
    %v2755 = vadd.f32 %v2418, %v2754
    %2756 = vmatmul.f32.gmra.mxu0 %v905
    %v2757 = vpop.f32.mrf.mxu0
    %v2758 = vadd.f32 %v2421, %v2757
    %2759 = vmatmul.f32.gmra.mxu0 %v907
    %v2760 = vpop.f32.mrf.mxu0
    %v2761 = vadd.f32 %v2424, %v2760
    %2762 = vmatmul.f32.gmra.mxu0 %v909
    %v2763 = vpop.f32.mrf.mxu0
    %v2764 = vadd.f32 %v2427, %v2763
    %2765 = vmatmul.f32.gmra.mxu0 %v911
    %v2766 = vpop.f32.mrf.mxu0
    %v2767 = vadd.f32 %v2430, %v2766
    %2768 = vmatmul.f32.gmra.mxu0 %v913
    %v2769 = vpop.f32.mrf.mxu0
    %v2770 = vadd.f32 %v2433, %v2769
    %2771 = vmatmul.f32.gmra.mxu0 %v915
    %v2772 = vpop.f32.mrf.mxu0
    %v2773 = vadd.f32 %v2436, %v2772
    %2774 = vmatmul.f32.gmra.mxu0 %v917
    %v2775 = vpop.f32.mrf.mxu0
    %v2776 = vadd.f32 %v2439, %v2775
    %2777 = vdwg.mxu0
    %2778 = vmatpush.msra.mxu0 0.0
    %2779 = vmatpush.msra.mxu0 0.0
    %2780 = vmatpush.msra.mxu0 0.0
    %2781 = vmatpush.msra.mxu0 0.0
    %2782 = vmatpush.msra.mxu0 %v1174
    %2783 = vmatpush.msra.mxu0 %v1171
    %2784 = vmatpush.msra.mxu0 %v1168
    %2785 = vmatpush.msra.mxu0 %v1165
    %2786 = vmatpush.msra.mxu0 %v1162
    %2787 = vmatpush.msra.mxu0 %v1159
    %2788 = vmatpush.msra.mxu0 %v1156
    %2789 = vmatpush.msra.mxu0 %v1153
    %2790 = vmatpush.msra.mxu0 %v1150
    %2791 = vmatpush.msra.mxu0 %v1147
    %2792 = vmatpush.msra.mxu0 %v1144
    %2793 = vmatpush.msra.mxu0 %v1141
    %2794 = vmatmul.f32.gmra.mxu0 %v2442
    %v2795 = vpop.f32.mrf.mxu0
    %v2796 = vadd.f32 %v2737, %v2795
    %2797 = vmatmul.f32.gmra.mxu0 %v2445
    %v2798 = vpop.f32.mrf.mxu0
    %v2799 = vadd.f32 %v2740, %v2798
    %2800 = vmatmul.f32.gmra.mxu0 %v2448
    %v2801 = vpop.f32.mrf.mxu0
    %v2802 = vadd.f32 %v2743, %v2801
    %2803 = vmatmul.f32.gmra.mxu0 %v2451
    %v2804 = vpop.f32.mrf.mxu0
    %v2805 = vadd.f32 %v2746, %v2804
    %2806 = vmatmul.f32.gmra.mxu0 %v2454
    %v2807 = vpop.f32.mrf.mxu0
    %v2808 = vadd.f32 %v2749, %v2807
    %2809 = vmatmul.f32.gmra.mxu0 %v2457
    %v2810 = vpop.f32.mrf.mxu0
    %v2811 = vadd.f32 %v2752, %v2810
    %2812 = vmatmul.f32.gmra.mxu0 %v2460
    %v2813 = vpop.f32.mrf.mxu0
    %v2814 = vadd.f32 %v2755, %v2813
    %2815 = vmatmul.f32.gmra.mxu0 %v2463
    %v2816 = vpop.f32.mrf.mxu0
    %v2817 = vadd.f32 %v2758, %v2816
    %2818 = vmatmul.f32.gmra.mxu0 %v2466
    %v2819 = vpop.f32.mrf.mxu0
    %v2820 = vadd.f32 %v2761, %v2819
    %2821 = vmatmul.f32.gmra.mxu0 %v2469
    %v2822 = vpop.f32.mrf.mxu0
    %v2823 = vadd.f32 %v2764, %v2822
    %2824 = vmatmul.f32.gmra.mxu0 %v2472
    %v2825 = vpop.f32.mrf.mxu0
    %v2826 = vadd.f32 %v2767, %v2825
    %2827 = vmatmul.f32.gmra.mxu0 %v2475
    %v2828 = vpop.f32.mrf.mxu0
    %v2829 = vadd.f32 %v2770, %v2828
    %2830 = vmatmul.f32.gmra.mxu0 %v2478
    %v2831 = vpop.f32.mrf.mxu0
    %v2832 = vadd.f32 %v2773, %v2831
    %2833 = vmatmul.f32.gmra.mxu0 %v2481
    %v2834 = vpop.f32.mrf.mxu0
    %v2835 = vadd.f32 %v2776, %v2834
    %2836 = vdwg.mxu0
    %s2837 = scalar_lea.vmem [#allocation2], 896
    %v2838 = vld [vmem:[%s2837] sm:$0xff]
    %v2839 = vld [vmem:[%s2837 + $0x8] sm:$0xff]
    %v2840 = vld [vmem:[%s2837 + $0x10] sm:$0xff]
    %v2841 = vld [vmem:[%s2837 + $0x18] sm:$0xff]
    %v2842 = vld [vmem:[%s2837 + $0x20] sm:$0xff]
    %v2843 = vld [vmem:[%s2837 + $0x28] sm:$0xff]
    %v2844 = vld [vmem:[%s2837 + $0x30] sm:$0xff]
    %v2845 = vld [vmem:[%s2837 + $0x38] sm:$0xff]
    %v2846 = vld [vmem:[%s2837 + $0x40] sm:$0xff]
    %v2847 = vld [vmem:[%s2837 + $0x48] sm:$0xff]
    %v2848 = vld [vmem:[%s2837 + $0x50] sm:$0xff]
    %v2849 = vld [vmem:[%s2837 + $0x58] sm:$0xff]
    %v2850 = vld [vmem:[%s2837 + $0x60] sm:$0xff]
    %v2851 = vld [vmem:[%s2837 + $0x68] sm:$0xff]
    %v2852 = vld [vmem:[%s2837 + $0x70] sm:$0xff]
    %v2853 = vld [vmem:[%s2837 + $0x78] sm:$0xff]
    %v2854 = vld [vmem:[%s2837 + $0x80] sm:$0xff]
    %v2855 = vld [vmem:[%s2837 + $0x88] sm:$0xff]
    %v2856 = vld [vmem:[%s2837 + $0x90] sm:$0xff]
    %v2857 = vld [vmem:[%s2837 + $0x98] sm:$0xff]
    %v2858 = vld [vmem:[%s2837 + $0xa0] sm:$0xff]
    %v2859 = vld [vmem:[%s2837 + $0xa8] sm:$0xff]
    %v2860 = vld [vmem:[%s2837 + $0xb0] sm:$0xff]
    %v2861 = vld [vmem:[%s2837 + $0xb8] sm:$0xff]
    %v2862 = vld [vmem:[%s2837 + $0xc0] sm:$0xff]
    %v2863 = vld [vmem:[%s2837 + $0xc8] sm:$0xff]
    %v2864 = vld [vmem:[%s2837 + $0xd0] sm:$0xff]
    %v2865 = vld [vmem:[%s2837 + $0xd8] sm:$0xff]
    %v2866 = vld [vmem:[%s2837 + $0xe0] sm:$0xff]
    %v2867 = vld [vmem:[%s2837 + $0xe8] sm:$0xff]
    %v2868 = vld [vmem:[%s2837 + $0xf0] sm:$0xff]
    %v2869 = vld [vmem:[%s2837 + $0xf8] sm:$0xff]
    %v2870 = vld [vmem:[%s2837 + $0x100] sm:$0xff]
    %v2871 = vld [vmem:[%s2837 + $0x108] sm:$0xff]
    %v2872 = vld [vmem:[%s2837 + $0x110] sm:$0xff]
    %v2873 = vld [vmem:[%s2837 + $0x118] sm:$0xff]
    %v2874 = vld [vmem:[%s2837 + $0x120] sm:$0xff]
    %v2875 = vld [vmem:[%s2837 + $0x128] sm:$0xff]
    %v2876 = vld [vmem:[%s2837 + $0x130] sm:$0xff]
    %v2877 = vld [vmem:[%s2837 + $0x138] sm:$0xff]
    %v2878 = vld [vmem:[%s2837 + $0x140] sm:$0xff]
    %v2879 = vld [vmem:[%s2837 + $0x148] sm:$0xff]
    %v2880 = vld [vmem:[%s2837 + $0x150] sm:$0xff]
    %v2881 = vld [vmem:[%s2837 + $0x158] sm:$0xff]
    %v2882 = vld [vmem:[%s2837 + $0x160] sm:$0xff]
    %v2883 = vld [vmem:[%s2837 + $0x168] sm:$0xff]
    %v2884 = vld [vmem:[%s2837 + $0x170] sm:$0xff]
    %v2885 = vld [vmem:[%s2837 + $0x178] sm:$0xff]
    %v2886 = vld [vmem:[%s2837 + $0x180] sm:$0xff]
    %v2887 = vld [vmem:[%s2837 + $0x188] sm:$0xff]
    %v2888 = vld [vmem:[%s2837 + $0x190] sm:$0xff]
    %v2889 = vld [vmem:[%s2837 + $0x198] sm:$0xff]
    %v2890 = vld [vmem:[%s2837 + $0x1a0] sm:$0xff]
    %v2891 = vld [vmem:[%s2837 + $0x1a8] sm:$0xff]
    %v2892 = vld [vmem:[%s2837 + $0x1b0] sm:$0xff]
    %v2893 = vld [vmem:[%s2837 + $0x1b8] sm:$0xff]
    %v2894 = vsel %vm320, %v2839, 0.0
    %v2895 = vadd.f32 %v2838, %v2894
    %v2896 = vadd.f32 %v2895, %v2840
    %v2897 = vsel %vm320, %v2841, 0.0
    %v2898 = vadd.f32 %v2896, %v2897
    %v2899 = vadd.f32 %v2898, %v2842
    %v2900 = vsel %vm320, %v2843, 0.0
    %v2901 = vadd.f32 %v2899, %v2900
    %v2902 = vadd.f32 %v2901, %v2844
    %v2903 = vsel %vm320, %v2845, 0.0
    %v2904 = vadd.f32 %v2902, %v2903
    %v2905 = vadd.f32 %v2904, %v2846
    %v2906 = vsel %vm320, %v2847, 0.0
    %v2907 = vadd.f32 %v2905, %v2906
    %v2908 = vadd.f32 %v2907, %v2848
    %v2909 = vsel %vm320, %v2849, 0.0
    %v2910 = vadd.f32 %v2908, %v2909
    %v2911 = vadd.f32 %v2910, %v2850
    %v2912 = vsel %vm320, %v2851, 0.0
    %v2913 = vadd.f32 %v2911, %v2912
    %v2914 = vadd.f32 %v2913, %v2852
    %v2915 = vsel %vm320, %v2853, 0.0
    %v2916 = vadd.f32 %v2914, %v2915
    %v2917 = vadd.f32 %v2916, %v2854
    %v2918 = vsel %vm320, %v2855, 0.0
    %v2919 = vadd.f32 %v2917, %v2918
    %v2920 = vadd.f32 %v2919, %v2856
    %v2921 = vsel %vm320, %v2857, 0.0
    %v2922 = vadd.f32 %v2920, %v2921
    %v2923 = vadd.f32 %v2922, %v2858
    %v2924 = vsel %vm320, %v2859, 0.0
    %v2925 = vadd.f32 %v2923, %v2924
    %v2926 = vadd.f32 %v2925, %v2860
    %v2927 = vsel %vm320, %v2861, 0.0
    %v2928 = vadd.f32 %v2926, %v2927
    %v2929 = vadd.f32 %v2928, %v2862
    %v2930 = vsel %vm320, %v2863, 0.0
    %v2931 = vadd.f32 %v2929, %v2930
    %v2932 = vadd.f32 %v2931, %v2864
    %v2933 = vsel %vm320, %v2865, 0.0
    %v2934 = vadd.f32 %v2932, %v2933
    %v2935 = vadd.f32 %v2934, %v2866
    %v2936 = vsel %vm320, %v2867, 0.0
    %v2937 = vadd.f32 %v2935, %v2936
    %v2938 = vadd.f32 %v2937, %v2868
    %v2939 = vsel %vm320, %v2869, 0.0
    %v2940 = vadd.f32 %v2938, %v2939
    %v2941 = vadd.f32 %v2940, %v2870
    %v2942 = vsel %vm320, %v2871, 0.0
    %v2943 = vadd.f32 %v2941, %v2942
    %v2944 = vadd.f32 %v2943, %v2872
    %v2945 = vsel %vm320, %v2873, 0.0
    %v2946 = vadd.f32 %v2944, %v2945
    %v2947 = vadd.f32 %v2946, %v2874
    %v2948 = vsel %vm320, %v2875, 0.0
    %v2949 = vadd.f32 %v2947, %v2948
    %v2950 = vadd.f32 %v2949, %v2876
    %v2951 = vsel %vm320, %v2877, 0.0
    %v2952 = vadd.f32 %v2950, %v2951
    %v2953 = vadd.f32 %v2952, %v2878
    %v2954 = vsel %vm320, %v2879, 0.0
    %v2955 = vadd.f32 %v2953, %v2954
    %v2956 = vadd.f32 %v2955, %v2880
    %v2957 = vsel %vm320, %v2881, 0.0
    %v2958 = vadd.f32 %v2956, %v2957
    %v2959 = vadd.f32 %v2958, %v2882
    %v2960 = vsel %vm320, %v2883, 0.0
    %v2961 = vadd.f32 %v2959, %v2960
    %v2962 = vadd.f32 %v2961, %v2884
    %v2963 = vsel %vm320, %v2885, 0.0
    %v2964 = vadd.f32 %v2962, %v2963
    %v2965 = vadd.f32 %v2964, %v2886
    %v2966 = vsel %vm320, %v2887, 0.0
    %v2967 = vadd.f32 %v2965, %v2966
    %v2968 = vadd.f32 %v2967, %v2888
    %v2969 = vsel %vm320, %v2889, 0.0
    %v2970 = vadd.f32 %v2968, %v2969
    %v2971 = vadd.f32 %v2970, %v2890
    %v2972 = vsel %vm320, %v2891, 0.0
    %v2973 = vadd.f32 %v2971, %v2972
    %v2974 = vadd.f32 %v2973, %v2892
    %v2975 = vsel %vm320, %v2893, 0.0
    %v2976 = vadd.f32 %v2974, %v2975
    %2977 = vadd.xlane.f32.xlu0 %v2976
    %v2978 = vpop.xlane.xlu0 %2977
    %v2979 = vrot.slane %v2978, 4
    %v2980 = vadd.f32 %v2978, %v2979
    %v2981 = vrot.slane %v2980, 2
    %v2982 = vadd.f32 %v2980, %v2981
    %v2983 = vrot.slane %v2982, 1
    %v2984 = vadd.f32 %v2982, %v2983
    %s2985 = vtos %v2984
    %v2986 = vmul.f32 %v2838, %v2838
    %v2987 = vmul.f32 %v2839, %v2839
    %v2988 = vmul.f32 %v2840, %v2840
    %v2989 = vmul.f32 %v2841, %v2841
    %v2990 = vmul.f32 %v2842, %v2842
    %v2991 = vmul.f32 %v2843, %v2843
    %v2992 = vmul.f32 %v2844, %v2844
    %v2993 = vmul.f32 %v2845, %v2845
    %v2994 = vmul.f32 %v2846, %v2846
    %v2995 = vmul.f32 %v2847, %v2847
    %v2996 = vmul.f32 %v2848, %v2848
    %v2997 = vmul.f32 %v2849, %v2849
    %v2998 = vmul.f32 %v2850, %v2850
    %v2999 = vmul.f32 %v2851, %v2851
    %v3000 = vmul.f32 %v2852, %v2852
    %v3001 = vmul.f32 %v2853, %v2853
    %v3002 = vmul.f32 %v2854, %v2854
    %v3003 = vmul.f32 %v2855, %v2855
    %v3004 = vmul.f32 %v2856, %v2856
    %v3005 = vmul.f32 %v2857, %v2857
    %v3006 = vmul.f32 %v2858, %v2858
    %v3007 = vmul.f32 %v2859, %v2859
    %v3008 = vmul.f32 %v2860, %v2860
    %v3009 = vmul.f32 %v2861, %v2861
    %v3010 = vmul.f32 %v2862, %v2862
    %v3011 = vmul.f32 %v2863, %v2863
    %v3012 = vmul.f32 %v2864, %v2864
    %v3013 = vmul.f32 %v2865, %v2865
    %v3014 = vmul.f32 %v2866, %v2866
    %v3015 = vmul.f32 %v2867, %v2867
    %v3016 = vmul.f32 %v2868, %v2868
    %v3017 = vmul.f32 %v2869, %v2869
    %v3018 = vmul.f32 %v2870, %v2870
    %v3019 = vmul.f32 %v2871, %v2871
    %v3020 = vmul.f32 %v2872, %v2872
    %v3021 = vmul.f32 %v2873, %v2873
    %v3022 = vmul.f32 %v2874, %v2874
    %v3023 = vmul.f32 %v2875, %v2875
    %v3024 = vmul.f32 %v2876, %v2876
    %v3025 = vmul.f32 %v2877, %v2877
    %v3026 = vmul.f32 %v2878, %v2878
    %v3027 = vmul.f32 %v2879, %v2879
    %v3028 = vmul.f32 %v2880, %v2880
    %v3029 = vmul.f32 %v2881, %v2881
    %v3030 = vmul.f32 %v2882, %v2882
    %v3031 = vmul.f32 %v2883, %v2883
    %v3032 = vmul.f32 %v2884, %v2884
    %v3033 = vmul.f32 %v2885, %v2885
    %v3034 = vmul.f32 %v2886, %v2886
    %v3035 = vmul.f32 %v2887, %v2887
    %v3036 = vmul.f32 %v2888, %v2888
    %v3037 = vmul.f32 %v2889, %v2889
    %v3038 = vmul.f32 %v2890, %v2890
    %v3039 = vmul.f32 %v2891, %v2891
    %v3040 = vmul.f32 %v2892, %v2892
    %v3041 = vmul.f32 %v2893, %v2893
    %v3042 = vsel %vm320, %v2987, 0.0
    %v3043 = vadd.f32 %v2986, %v3042
    %v3044 = vadd.f32 %v3043, %v2988
    %v3045 = vsel %vm320, %v2989, 0.0
    %v3046 = vadd.f32 %v3044, %v3045
    %v3047 = vadd.f32 %v3046, %v2990
    %v3048 = vsel %vm320, %v2991, 0.0
    %v3049 = vadd.f32 %v3047, %v3048
    %v3050 = vadd.f32 %v3049, %v2992
    %v3051 = vsel %vm320, %v2993, 0.0
    %v3052 = vadd.f32 %v3050, %v3051
    %v3053 = vadd.f32 %v3052, %v2994
    %v3054 = vsel %vm320, %v2995, 0.0
    %v3055 = vadd.f32 %v3053, %v3054
    %v3056 = vadd.f32 %v3055, %v2996
    %v3057 = vsel %vm320, %v2997, 0.0
    %v3058 = vadd.f32 %v3056, %v3057
    %v3059 = vadd.f32 %v3058, %v2998
    %v3060 = vsel %vm320, %v2999, 0.0
    %v3061 = vadd.f32 %v3059, %v3060
    %v3062 = vadd.f32 %v3061, %v3000
    %v3063 = vsel %vm320, %v3001, 0.0
    %v3064 = vadd.f32 %v3062, %v3063
    %v3065 = vadd.f32 %v3064, %v3002
    %v3066 = vsel %vm320, %v3003, 0.0
    %v3067 = vadd.f32 %v3065, %v3066
    %v3068 = vadd.f32 %v3067, %v3004
    %v3069 = vsel %vm320, %v3005, 0.0
    %v3070 = vadd.f32 %v3068, %v3069
    %v3071 = vadd.f32 %v3070, %v3006
    %v3072 = vsel %vm320, %v3007, 0.0
    %v3073 = vadd.f32 %v3071, %v3072
    %v3074 = vadd.f32 %v3073, %v3008
    %v3075 = vsel %vm320, %v3009, 0.0
    %v3076 = vadd.f32 %v3074, %v3075
    %v3077 = vadd.f32 %v3076, %v3010
    %v3078 = vsel %vm320, %v3011, 0.0
    %v3079 = vadd.f32 %v3077, %v3078
    %v3080 = vadd.f32 %v3079, %v3012
    %v3081 = vsel %vm320, %v3013, 0.0
    %v3082 = vadd.f32 %v3080, %v3081
    %v3083 = vadd.f32 %v3082, %v3014
    %v3084 = vsel %vm320, %v3015, 0.0
    %v3085 = vadd.f32 %v3083, %v3084
    %v3086 = vadd.f32 %v3085, %v3016
    %v3087 = vsel %vm320, %v3017, 0.0
    %v3088 = vadd.f32 %v3086, %v3087
    %v3089 = vadd.f32 %v3088, %v3018
    %v3090 = vsel %vm320, %v3019, 0.0
    %v3091 = vadd.f32 %v3089, %v3090
    %v3092 = vadd.f32 %v3091, %v3020
    %v3093 = vsel %vm320, %v3021, 0.0
    %v3094 = vadd.f32 %v3092, %v3093
    %v3095 = vadd.f32 %v3094, %v3022
    %v3096 = vsel %vm320, %v3023, 0.0
    %v3097 = vadd.f32 %v3095, %v3096
    %v3098 = vadd.f32 %v3097, %v3024
    %v3099 = vsel %vm320, %v3025, 0.0
    %v3100 = vadd.f32 %v3098, %v3099
    %v3101 = vadd.f32 %v3100, %v3026
    %v3102 = vsel %vm320, %v3027, 0.0
    %v3103 = vadd.f32 %v3101, %v3102
    %v3104 = vadd.f32 %v3103, %v3028
    %v3105 = vsel %vm320, %v3029, 0.0
    %v3106 = vadd.f32 %v3104, %v3105
    %v3107 = vadd.f32 %v3106, %v3030
    %v3108 = vsel %vm320, %v3031, 0.0
    %v3109 = vadd.f32 %v3107, %v3108
    %v3110 = vadd.f32 %v3109, %v3032
    %v3111 = vsel %vm320, %v3033, 0.0
    %v3112 = vadd.f32 %v3110, %v3111
    %v3113 = vadd.f32 %v3112, %v3034
    %v3114 = vsel %vm320, %v3035, 0.0
    %v3115 = vadd.f32 %v3113, %v3114
    %v3116 = vadd.f32 %v3115, %v3036
    %v3117 = vsel %vm320, %v3037, 0.0
    %v3118 = vadd.f32 %v3116, %v3117
    %v3119 = vadd.f32 %v3118, %v3038
    %v3120 = vsel %vm320, %v3039, 0.0
    %v3121 = vadd.f32 %v3119, %v3120
    %v3122 = vadd.f32 %v3121, %v3040
    %v3123 = vsel %vm320, %v3041, 0.0
    %v3124 = vadd.f32 %v3122, %v3123
    %3125 = vadd.xlane.f32.xlu0 %v3124
    %v3126 = vpop.xlane.xlu0 %3125
    %v3127 = vrot.slane %v3126, 4
    %v3128 = vadd.f32 %v3126, %v3127
    %v3129 = vrot.slane %v3128, 2
    %v3130 = vadd.f32 %v3128, %v3129
    %v3131 = vrot.slane %v3130, 1
    %v3132 = vadd.f32 %v3130, %v3131
    %s3133 = vtos %v3132
    %s3134 = smul.f32 %s2985, 1.9929847e-05
    %s3135 = smul.f32 %s3133, 1.9929847e-05
    %s3136 = smul.f32 %s3134, %s3134
    %s3137 = ssub.f32 %s3135, %s3136
    %s3138 = sadd.f32 %s3137, 1e-05
    %v3139 = vstv %s3138
    %v3140 = vrsqrt.pop %v3139
    %v3141 = vmul.f32 %v3140, %v3139
    %v3142 = vmul.f32 %v3141, %v3140
    %v3143 = vmul.f32 0.5, %v3142
    %v3144 = vsub.f32 1.5, %v3143
    %v3145 = vmul.f32 %v3140, %v3144
    %vm3146 = vweird.f32 %v3139
    %vm3147 = vweird.f32 %v3140
    %vm3148 = vmor %vm3146, %vm3147
    %v3149 = vsel %vm3148, %v3140, %v3145
    %s3150 = vtos %v3149
    %s3151 = sld [smem:[#allocation8 + $0x2]]
    %s3152 = smul.f32 %s3150, %s3151
    %s3153 = sld [smem:[#allocation9 + $0x2]]
    %s3154 = smul.f32 %s3134, %s3152
    %s3155 = ssub.f32 %s3153, %s3154
    %3156 = vmatpush.msra.mxu0 %v2868
    %3157 = vmatpush.msra.mxu0 %v2866
    %3158 = vmatpush.msra.mxu0 %v2864
    %3159 = vmatpush.msra.mxu0 %v2862
    %3160 = vmatpush.msra.mxu0 %v2860
    %3161 = vmatpush.msra.mxu0 %v2858
    %3162 = vmatpush.msra.mxu0 %v2856
    %3163 = vmatpush.msra.mxu0 %v2854
    %3164 = vmatpush.msra.mxu0 %v2852
    %3165 = vmatpush.msra.mxu0 %v2850
    %3166 = vmatpush.msra.mxu0 %v2848
    %3167 = vmatpush.msra.mxu0 %v2846
    %3168 = vmatpush.msra.mxu0 %v2844
    %3169 = vmatpush.msra.mxu0 %v2842
    %3170 = vmatpush.msra.mxu0 %v2840
    %3171 = vmatpush.msra.mxu0 %v2838
    %3172 = vmatmul.f32.gmra.mxu0 %v207
    %v3173 = vpop.f32.mrf.mxu0
    %v3174 = vadd.f32 0.0, %v3173
    %3175 = vmatmul.f32.gmra.mxu0 %v209
    %v3176 = vpop.f32.mrf.mxu0
    %v3177 = vadd.f32 0.0, %v3176
    %3178 = vmatmul.f32.gmra.mxu0 %v211
    %v3179 = vpop.f32.mrf.mxu0
    %v3180 = vadd.f32 0.0, %v3179
    %3181 = vmatmul.f32.gmra.mxu0 %v213
    %v3182 = vpop.f32.mrf.mxu0
    %v3183 = vadd.f32 0.0, %v3182
    %3184 = vmatmul.f32.gmra.mxu0 %v215
    %v3185 = vpop.f32.mrf.mxu0
    %v3186 = vadd.f32 0.0, %v3185
    %3187 = vmatmul.f32.gmra.mxu0 %v217
    %v3188 = vpop.f32.mrf.mxu0
    %v3189 = vadd.f32 0.0, %v3188
    %3190 = vmatmul.f32.gmra.mxu0 %v219
    %v3191 = vpop.f32.mrf.mxu0
    %v3192 = vadd.f32 0.0, %v3191
    %3193 = vmatmul.f32.gmra.mxu0 %v221
    %v3194 = vpop.f32.mrf.mxu0
    %v3195 = vadd.f32 0.0, %v3194
    %3196 = vmatmul.f32.gmra.mxu0 %v223
    %v3197 = vpop.f32.mrf.mxu0
    %v3198 = vadd.f32 0.0, %v3197
    %3199 = vmatmul.f32.gmra.mxu0 %v225
    %v3200 = vpop.f32.mrf.mxu0
    %v3201 = vadd.f32 0.0, %v3200
    %3202 = vmatmul.f32.gmra.mxu0 %v227
    %v3203 = vpop.f32.mrf.mxu0
    %v3204 = vadd.f32 0.0, %v3203
    %3205 = vmatmul.f32.gmra.mxu0 %v229
    %v3206 = vpop.f32.mrf.mxu0
    %v3207 = vadd.f32 0.0, %v3206
    %3208 = vmatmul.f32.gmra.mxu0 %v231
    %v3209 = vpop.f32.mrf.mxu0
    %v3210 = vadd.f32 0.0, %v3209
    %3211 = vmatmul.f32.gmra.mxu0 %v233
    %v3212 = vpop.f32.mrf.mxu0
    %v3213 = vadd.f32 0.0, %v3212
    %3214 = vdwg.mxu0
    %3215 = vmatpush.msra.mxu0 0.0
    %3216 = vmatpush.msra.mxu0 0.0
    %3217 = vmatpush.msra.mxu0 0.0
    %3218 = vmatpush.msra.mxu0 0.0
    %3219 = vmatpush.msra.mxu0 %v2892
    %3220 = vmatpush.msra.mxu0 %v2890
    %3221 = vmatpush.msra.mxu0 %v2888
    %3222 = vmatpush.msra.mxu0 %v2886
    %3223 = vmatpush.msra.mxu0 %v2884
    %3224 = vmatpush.msra.mxu0 %v2882
    %3225 = vmatpush.msra.mxu0 %v2880
    %3226 = vmatpush.msra.mxu0 %v2878
    %3227 = vmatpush.msra.mxu0 %v2876
    %3228 = vmatpush.msra.mxu0 %v2874
    %3229 = vmatpush.msra.mxu0 %v2872
    %3230 = vmatpush.msra.mxu0 %v2870
    %3231 = vmatmul.f32.gmra.mxu0 %v584
    %v3232 = vpop.f32.mrf.mxu0
    %v3233 = vadd.f32 %v3174, %v3232
    %3234 = vmatmul.f32.gmra.mxu0 %v587
    %v3235 = vpop.f32.mrf.mxu0
    %v3236 = vadd.f32 %v3177, %v3235
    %3237 = vmatmul.f32.gmra.mxu0 %v590
    %v3238 = vpop.f32.mrf.mxu0
    %v3239 = vadd.f32 %v3180, %v3238
    %3240 = vmatmul.f32.gmra.mxu0 %v593
    %v3241 = vpop.f32.mrf.mxu0
    %v3242 = vadd.f32 %v3183, %v3241
    %3243 = vmatmul.f32.gmra.mxu0 %v596
    %v3244 = vpop.f32.mrf.mxu0
    %v3245 = vadd.f32 %v3186, %v3244
    %3246 = vmatmul.f32.gmra.mxu0 %v599
    %v3247 = vpop.f32.mrf.mxu0
    %v3248 = vadd.f32 %v3189, %v3247
    %3249 = vmatmul.f32.gmra.mxu0 %v602
    %v3250 = vpop.f32.mrf.mxu0
    %v3251 = vadd.f32 %v3192, %v3250
    %3252 = vmatmul.f32.gmra.mxu0 %v605
    %v3253 = vpop.f32.mrf.mxu0
    %v3254 = vadd.f32 %v3195, %v3253
    %3255 = vmatmul.f32.gmra.mxu0 %v608
    %v3256 = vpop.f32.mrf.mxu0
    %v3257 = vadd.f32 %v3198, %v3256
    %3258 = vmatmul.f32.gmra.mxu0 %v611
    %v3259 = vpop.f32.mrf.mxu0
    %v3260 = vadd.f32 %v3201, %v3259
    %3261 = vmatmul.f32.gmra.mxu0 %v614
    %v3262 = vpop.f32.mrf.mxu0
    %v3263 = vadd.f32 %v3204, %v3262
    %3264 = vmatmul.f32.gmra.mxu0 %v617
    %v3265 = vpop.f32.mrf.mxu0
    %v3266 = vadd.f32 %v3207, %v3265
    %3267 = vmatmul.f32.gmra.mxu0 %v620
    %v3268 = vpop.f32.mrf.mxu0
    %v3269 = vadd.f32 %v3210, %v3268
    %3270 = vmatmul.f32.gmra.mxu0 %v623
    %v3271 = vpop.f32.mrf.mxu0
    %v3272 = vadd.f32 %v3213, %v3271
    %3273 = vdwg.mxu0
    %3274 = vmatpush.msra.mxu0 %v2869
    %3275 = vmatpush.msra.mxu0 %v2867
    %3276 = vmatpush.msra.mxu0 %v2865
    %3277 = vmatpush.msra.mxu0 %v2863
    %3278 = vmatpush.msra.mxu0 %v2861
    %3279 = vmatpush.msra.mxu0 %v2859
    %3280 = vmatpush.msra.mxu0 %v2857
    %3281 = vmatpush.msra.mxu0 %v2855
    %3282 = vmatpush.msra.mxu0 %v2853
    %3283 = vmatpush.msra.mxu0 %v2851
    %3284 = vmatpush.msra.mxu0 %v2849
    %3285 = vmatpush.msra.mxu0 %v2847
    %3286 = vmatpush.msra.mxu0 %v2845
    %3287 = vmatpush.msra.mxu0 %v2843
    %3288 = vmatpush.msra.mxu0 %v2841
    %3289 = vmatpush.msra.mxu0 %v2839
    %3290 = vmatmul.f32.gmra.mxu0 %v207
    %v3291 = vpop.f32.mrf.mxu0
    %v3292 = vadd.f32 0.0, %v3291
    %3293 = vmatmul.f32.gmra.mxu0 %v209
    %v3294 = vpop.f32.mrf.mxu0
    %v3295 = vadd.f32 0.0, %v3294
    %3296 = vmatmul.f32.gmra.mxu0 %v211
    %v3297 = vpop.f32.mrf.mxu0
    %v3298 = vadd.f32 0.0, %v3297
    %3299 = vmatmul.f32.gmra.mxu0 %v213
    %v3300 = vpop.f32.mrf.mxu0
    %v3301 = vadd.f32 0.0, %v3300
    %3302 = vmatmul.f32.gmra.mxu0 %v215
    %v3303 = vpop.f32.mrf.mxu0
    %v3304 = vadd.f32 0.0, %v3303
    %3305 = vmatmul.f32.gmra.mxu0 %v217
    %v3306 = vpop.f32.mrf.mxu0
    %v3307 = vadd.f32 0.0, %v3306
    %3308 = vmatmul.f32.gmra.mxu0 %v219
    %v3309 = vpop.f32.mrf.mxu0
    %v3310 = vadd.f32 0.0, %v3309
    %3311 = vmatmul.f32.gmra.mxu0 %v221
    %v3312 = vpop.f32.mrf.mxu0
    %v3313 = vadd.f32 0.0, %v3312
    %3314 = vmatmul.f32.gmra.mxu0 %v223
    %v3315 = vpop.f32.mrf.mxu0
    %v3316 = vadd.f32 0.0, %v3315
    %3317 = vmatmul.f32.gmra.mxu0 %v225
    %v3318 = vpop.f32.mrf.mxu0
    %v3319 = vadd.f32 0.0, %v3318
    %3320 = vmatmul.f32.gmra.mxu0 %v227
    %v3321 = vpop.f32.mrf.mxu0
    %v3322 = vadd.f32 0.0, %v3321
    %3323 = vmatmul.f32.gmra.mxu0 %v229
    %v3324 = vpop.f32.mrf.mxu0
    %v3325 = vadd.f32 0.0, %v3324
    %3326 = vmatmul.f32.gmra.mxu0 %v231
    %v3327 = vpop.f32.mrf.mxu0
    %v3328 = vadd.f32 0.0, %v3327
    %3329 = vmatmul.f32.gmra.mxu0 %v233
    %v3330 = vpop.f32.mrf.mxu0
    %v3331 = vadd.f32 0.0, %v3330
    %3332 = vdwg.mxu0
    %3333 = vmatpush.msra.mxu0 0.0
    %3334 = vmatpush.msra.mxu0 0.0
    %3335 = vmatpush.msra.mxu0 0.0
    %3336 = vmatpush.msra.mxu0 0.0
    %3337 = vmatpush.msra.mxu0 %v2893
    %3338 = vmatpush.msra.mxu0 %v2891
    %3339 = vmatpush.msra.mxu0 %v2889
    %3340 = vmatpush.msra.mxu0 %v2887
    %3341 = vmatpush.msra.mxu0 %v2885
    %3342 = vmatpush.msra.mxu0 %v2883
    %3343 = vmatpush.msra.mxu0 %v2881
    %3344 = vmatpush.msra.mxu0 %v2879
    %3345 = vmatpush.msra.mxu0 %v2877
    %3346 = vmatpush.msra.mxu0 %v2875
    %3347 = vmatpush.msra.mxu0 %v2873
    %3348 = vmatpush.msra.mxu0 %v2871
    %3349 = vmatmul.f32.gmra.mxu0 %v584
    %v3350 = vpop.f32.mrf.mxu0
    %v3351 = vadd.f32 %v3292, %v3350
    %3352 = vmatmul.f32.gmra.mxu0 %v587
    %v3353 = vpop.f32.mrf.mxu0
    %v3354 = vadd.f32 %v3295, %v3353
    %3355 = vmatmul.f32.gmra.mxu0 %v590
    %v3356 = vpop.f32.mrf.mxu0
    %v3357 = vadd.f32 %v3298, %v3356
    %3358 = vmatmul.f32.gmra.mxu0 %v593
    %v3359 = vpop.f32.mrf.mxu0
    %v3360 = vadd.f32 %v3301, %v3359
    %3361 = vmatmul.f32.gmra.mxu0 %v596
    %v3362 = vpop.f32.mrf.mxu0
    %v3363 = vadd.f32 %v3304, %v3362
    %3364 = vmatmul.f32.gmra.mxu0 %v599
    %v3365 = vpop.f32.mrf.mxu0
    %v3366 = vadd.f32 %v3307, %v3365
    %3367 = vmatmul.f32.gmra.mxu0 %v602
    %v3368 = vpop.f32.mrf.mxu0
    %v3369 = vadd.f32 %v3310, %v3368
    %3370 = vmatmul.f32.gmra.mxu0 %v605
    %v3371 = vpop.f32.mrf.mxu0
    %v3372 = vadd.f32 %v3313, %v3371
    %3373 = vmatmul.f32.gmra.mxu0 %v608
    %v3374 = vpop.f32.mrf.mxu0
    %v3375 = vadd.f32 %v3316, %v3374
    %3376 = vmatmul.f32.gmra.mxu0 %v611
    %v3377 = vpop.f32.mrf.mxu0
    %v3378 = vadd.f32 %v3319, %v3377
    %3379 = vmatmul.f32.gmra.mxu0 %v614
    %v3380 = vpop.f32.mrf.mxu0
    %v3381 = vadd.f32 %v3322, %v3380
    %3382 = vmatmul.f32.gmra.mxu0 %v617
    %v3383 = vpop.f32.mrf.mxu0
    %v3384 = vadd.f32 %v3325, %v3383
    %3385 = vmatmul.f32.gmra.mxu0 %v620
    %v3386 = vpop.f32.mrf.mxu0
    %v3387 = vadd.f32 %v3328, %v3386
    %3388 = vmatmul.f32.gmra.mxu0 %v623
    %v3389 = vpop.f32.mrf.mxu0
    %v3390 = vadd.f32 %v3331, %v3389
    %3391 = vdwg.mxu0
    %v3392 = vstv %s3152
    %v3393 = vmul.f32 %v3233, %v3392
    %v3394 = vmul.f32 %v3351, %v3392
    %v3395 = vmul.f32 %v3236, %v3392
    %v3396 = vmul.f32 %v3354, %v3392
    %v3397 = vmul.f32 %v3239, %v3392
    %v3398 = vmul.f32 %v3357, %v3392
    %v3399 = vmul.f32 %v3242, %v3392
    %v3400 = vmul.f32 %v3360, %v3392
    %v3401 = vmul.f32 %v3245, %v3392
    %v3402 = vmul.f32 %v3363, %v3392
    %v3403 = vmul.f32 %v3248, %v3392
    %v3404 = vmul.f32 %v3366, %v3392
    %v3405 = vmul.f32 %v3251, %v3392
    %v3406 = vmul.f32 %v3369, %v3392
    %v3407 = vmul.f32 %v3254, %v3392
    %v3408 = vmul.f32 %v3372, %v3392
    %v3409 = vmul.f32 %v3257, %v3392
    %v3410 = vmul.f32 %v3375, %v3392
    %v3411 = vmul.f32 %v3260, %v3392
    %v3412 = vmul.f32 %v3378, %v3392
    %v3413 = vmul.f32 %v3263, %v3392
    %v3414 = vmul.f32 %v3381, %v3392
    %v3415 = vmul.f32 %v3266, %v3392
    %v3416 = vmul.f32 %v3384, %v3392
    %v3417 = vmul.f32 %v3269, %v3392
    %v3418 = vmul.f32 %v3387, %v3392
    %v3419 = vmul.f32 %v3272, %v3392
    %v3420 = vmul.f32 %v3390, %v3392
    %v3421 = vstv %s3155
    %v3422 = vadd.f32 %v3393, %v3421
    %v3423 = vadd.f32 %v3394, %v3421
    %v3424 = vadd.f32 %v3395, %v3421
    %v3425 = vadd.f32 %v3396, %v3421
    %v3426 = vadd.f32 %v3397, %v3421
    %v3427 = vadd.f32 %v3398, %v3421
    %v3428 = vadd.f32 %v3399, %v3421
    %v3429 = vadd.f32 %v3400, %v3421
    %v3430 = vadd.f32 %v3401, %v3421
    %v3431 = vadd.f32 %v3402, %v3421
    %v3432 = vadd.f32 %v3403, %v3421
    %v3433 = vadd.f32 %v3404, %v3421
    %v3434 = vadd.f32 %v3405, %v3421
    %v3435 = vadd.f32 %v3406, %v3421
    %v3436 = vadd.f32 %v3407, %v3421
    %v3437 = vadd.f32 %v3408, %v3421
    %v3438 = vadd.f32 %v3409, %v3421
    %v3439 = vadd.f32 %v3410, %v3421
    %v3440 = vadd.f32 %v3411, %v3421
    %v3441 = vadd.f32 %v3412, %v3421
    %v3442 = vadd.f32 %v3413, %v3421
    %v3443 = vadd.f32 %v3414, %v3421
    %v3444 = vadd.f32 %v3415, %v3421
    %v3445 = vadd.f32 %v3416, %v3421
    %v3446 = vadd.f32 %v3417, %v3421
    %v3447 = vadd.f32 %v3418, %v3421
    %v3448 = vadd.f32 %v3419, %v3421
    %v3449 = vadd.f32 %v3420, %v3421
    %s3450 = scalar_lea.vmem [#allocation7], 6
    %v3451 = vld [vmem:[%s3450] sm:$0x7]
    %v3452 = vperm.slane %v3451, 0
    %v3453 = vperm.slane %v3451, 1
    %v3454 = vperm.slane %v3451, 2
    %vm3455 = vcmp.eq.s32.totalorder %v236, %v3452
    %vm3456 = vcmp.eq.s32.totalorder %v236, %v3453
    %vm3457 = vcmp.eq.s32.totalorder %v236, %v3454
    %vm3458 = vcmp.eq.s32.totalorder %v237, %v3452
    %vm3459 = vcmp.eq.s32.totalorder %v237, %v3453
    %vm3460 = vcmp.eq.s32.totalorder %v237, %v3454
    %vm3461 = vcmp.eq.s32.totalorder %v238, %v3452
    %vm3462 = vcmp.eq.s32.totalorder %v238, %v3453
    %vm3463 = vcmp.eq.s32.totalorder %v238, %v3454
    %vm3464 = vcmp.eq.s32.totalorder %v239, %v3452
    %vm3465 = vcmp.eq.s32.totalorder %v239, %v3453
    %vm3466 = vcmp.eq.s32.totalorder %v239, %v3454
    %vm3467 = vcmp.eq.s32.totalorder %v240, %v3452
    %vm3468 = vcmp.eq.s32.totalorder %v240, %v3453
    %vm3469 = vcmp.eq.s32.totalorder %v240, %v3454
    %vm3470 = vcmp.eq.s32.totalorder %v241, %v3452
    %vm3471 = vcmp.eq.s32.totalorder %v241, %v3453
    %vm3472 = vcmp.eq.s32.totalorder %v241, %v3454
    %vm3473 = vcmp.eq.s32.totalorder %v242, %v3452
    %vm3474 = vcmp.eq.s32.totalorder %v242, %v3453
    %vm3475 = vcmp.eq.s32.totalorder %v242, %v3454
    %vm3476 = vcmp.eq.s32.totalorder %v243, %v3452
    %vm3477 = vcmp.eq.s32.totalorder %v243, %v3453
    %vm3478 = vcmp.eq.s32.totalorder %v243, %v3454
    %vm3479 = vcmp.eq.s32.totalorder %v244, %v3452
    %vm3480 = vcmp.eq.s32.totalorder %v244, %v3453
    %vm3481 = vcmp.eq.s32.totalorder %v244, %v3454
    %vm3482 = vcmp.eq.s32.totalorder %v245, %v3452
    %vm3483 = vcmp.eq.s32.totalorder %v245, %v3453
    %vm3484 = vcmp.eq.s32.totalorder %v245, %v3454
    %vm3485 = vcmp.eq.s32.totalorder %v246, %v3452
    %vm3486 = vcmp.eq.s32.totalorder %v246, %v3453
    %vm3487 = vcmp.eq.s32.totalorder %v246, %v3454
    %vm3488 = vcmp.eq.s32.totalorder %v247, %v3452
    %vm3489 = vcmp.eq.s32.totalorder %v247, %v3453
    %vm3490 = vcmp.eq.s32.totalorder %v247, %v3454
    %vm3491 = vcmp.eq.s32.totalorder %v248, %v3452
    %vm3492 = vcmp.eq.s32.totalorder %v248, %v3453
    %vm3493 = vcmp.eq.s32.totalorder %v248, %v3454
    %vm3494 = vcmp.eq.s32.totalorder %v249, %v3452
    %vm3495 = vcmp.eq.s32.totalorder %v249, %v3453
    %vm3496 = vcmp.eq.s32.totalorder %v249, %v3454
    %vm3497 = vcmp.eq.s32.totalorder %v250, %v3452
    %vm3498 = vcmp.eq.s32.totalorder %v250, %v3453
    %vm3499 = vcmp.eq.s32.totalorder %v250, %v3454
    %vm3500 = vcmp.eq.s32.totalorder %v251, %v3452
    %vm3501 = vcmp.eq.s32.totalorder %v251, %v3453
    %vm3502 = vcmp.eq.s32.totalorder %v251, %v3454
    %vm3503 = vcmp.eq.s32.totalorder %v252, %v3452
    %vm3504 = vcmp.eq.s32.totalorder %v252, %v3453
    %vm3505 = vcmp.eq.s32.totalorder %v252, %v3454
    %vm3506 = vcmp.eq.s32.totalorder %v253, %v3452
    %vm3507 = vcmp.eq.s32.totalorder %v253, %v3453
    %vm3508 = vcmp.eq.s32.totalorder %v253, %v3454
    %vm3509 = vcmp.eq.s32.totalorder %v254, %v3452
    %vm3510 = vcmp.eq.s32.totalorder %v254, %v3453
    %vm3511 = vcmp.eq.s32.totalorder %v254, %v3454
    %vm3512 = vcmp.eq.s32.totalorder %v255, %v3452
    %vm3513 = vcmp.eq.s32.totalorder %v255, %v3453
    %vm3514 = vcmp.eq.s32.totalorder %v255, %v3454
    %vm3515 = vcmp.eq.s32.totalorder %v256, %v3452
    %vm3516 = vcmp.eq.s32.totalorder %v256, %v3453
    %vm3517 = vcmp.eq.s32.totalorder %v256, %v3454
    %vm3518 = vcmp.eq.s32.totalorder %v257, %v3452
    %vm3519 = vcmp.eq.s32.totalorder %v257, %v3453
    %vm3520 = vcmp.eq.s32.totalorder %v257, %v3454
    %vm3521 = vcmp.eq.s32.totalorder %v258, %v3452
    %vm3522 = vcmp.eq.s32.totalorder %v258, %v3453
    %vm3523 = vcmp.eq.s32.totalorder %v258, %v3454
    %vm3524 = vcmp.eq.s32.totalorder %v259, %v3452
    %vm3525 = vcmp.eq.s32.totalorder %v259, %v3453
    %vm3526 = vcmp.eq.s32.totalorder %v259, %v3454
    %vm3527 = vcmp.eq.s32.totalorder %v260, %v3452
    %vm3528 = vcmp.eq.s32.totalorder %v260, %v3453
    %vm3529 = vcmp.eq.s32.totalorder %v260, %v3454
    %vm3530 = vcmp.eq.s32.totalorder %v261, %v3452
    %vm3531 = vcmp.eq.s32.totalorder %v261, %v3453
    %vm3532 = vcmp.eq.s32.totalorder %v261, %v3454
    %vm3533 = vcmp.eq.s32.totalorder %v262, %v3452
    %vm3534 = vcmp.eq.s32.totalorder %v262, %v3453
    %vm3535 = vcmp.eq.s32.totalorder %v262, %v3454
    %vm3536 = vcmp.eq.s32.totalorder %v263, %v3452
    %vm3537 = vcmp.eq.s32.totalorder %v263, %v3453
    %vm3538 = vcmp.eq.s32.totalorder %v263, %v3454
    %v3539 = vsel %vm3455, 1, 0
    %v3540 = vsel %vm3456, 1, 0
    %v3541 = vsel %vm3457, 1, 0
    %v3542 = vsel %vm3458, 1, 0
    %v3543 = vsel %vm3459, 1, 0
    %v3544 = vsel %vm3460, 1, 0
    %v3545 = vsel %vm3461, 1, 0
    %v3546 = vsel %vm3462, 1, 0
    %v3547 = vsel %vm3463, 1, 0
    %v3548 = vsel %vm3464, 1, 0
    %v3549 = vsel %vm3465, 1, 0
    %v3550 = vsel %vm3466, 1, 0
    %v3551 = vsel %vm3467, 1, 0
    %v3552 = vsel %vm3468, 1, 0
    %v3553 = vsel %vm3469, 1, 0
    %v3554 = vsel %vm3470, 1, 0
    %v3555 = vsel %vm3471, 1, 0
    %v3556 = vsel %vm3472, 1, 0
    %v3557 = vsel %vm3473, 1, 0
    %v3558 = vsel %vm3474, 1, 0
    %v3559 = vsel %vm3475, 1, 0
    %v3560 = vsel %vm3476, 1, 0
    %v3561 = vsel %vm3477, 1, 0
    %v3562 = vsel %vm3478, 1, 0
    %v3563 = vsel %vm3479, 1, 0
    %v3564 = vsel %vm3480, 1, 0
    %v3565 = vsel %vm3481, 1, 0
    %v3566 = vsel %vm3482, 1, 0
    %v3567 = vsel %vm3483, 1, 0
    %v3568 = vsel %vm3484, 1, 0
    %v3569 = vsel %vm3485, 1, 0
    %v3570 = vsel %vm3486, 1, 0
    %v3571 = vsel %vm3487, 1, 0
    %v3572 = vsel %vm3488, 1, 0
    %v3573 = vsel %vm3489, 1, 0
    %v3574 = vsel %vm3490, 1, 0
    %v3575 = vsel %vm3491, 1, 0
    %v3576 = vsel %vm3492, 1, 0
    %v3577 = vsel %vm3493, 1, 0
    %v3578 = vsel %vm3494, 1, 0
    %v3579 = vsel %vm3495, 1, 0
    %v3580 = vsel %vm3496, 1, 0
    %v3581 = vsel %vm3497, 1, 0
    %v3582 = vsel %vm3498, 1, 0
    %v3583 = vsel %vm3499, 1, 0
    %v3584 = vsel %vm3500, 1, 0
    %v3585 = vsel %vm3501, 1, 0
    %v3586 = vsel %vm3502, 1, 0
    %v3587 = vsel %vm3503, 1, 0
    %v3588 = vsel %vm3504, 1, 0
    %v3589 = vsel %vm3505, 1, 0
    %v3590 = vsel %vm3506, 1, 0
    %v3591 = vsel %vm3507, 1, 0
    %v3592 = vsel %vm3508, 1, 0
    %v3593 = vsel %vm3509, 1, 0
    %v3594 = vsel %vm3510, 1, 0
    %v3595 = vsel %vm3511, 1, 0
    %v3596 = vsel %vm3512, 1, 0
    %v3597 = vsel %vm3513, 1, 0
    %v3598 = vsel %vm3514, 1, 0
    %v3599 = vsel %vm3515, 1, 0
    %v3600 = vsel %vm3516, 1, 0
    %v3601 = vsel %vm3517, 1, 0
    %v3602 = vsel %vm3518, 1, 0
    %v3603 = vsel %vm3519, 1, 0
    %v3604 = vsel %vm3520, 1, 0
    %v3605 = vsel %vm3521, 1, 0
    %v3606 = vsel %vm3522, 1, 0
    %v3607 = vsel %vm3523, 1, 0
    %v3608 = vsel %vm3524, 1, 0
    %v3609 = vsel %vm3525, 1, 0
    %v3610 = vsel %vm3526, 1, 0
    %v3611 = vsel %vm3527, 1, 0
    %v3612 = vsel %vm3528, 1, 0
    %v3613 = vsel %vm3529, 1, 0
    %v3614 = vsel %vm3530, 1, 0
    %v3615 = vsel %vm3531, 1, 0
    %v3616 = vsel %vm3532, 1, 0
    %v3617 = vsel %vm3533, 1, 0
    %v3618 = vsel %vm3534, 1, 0
    %v3619 = vsel %vm3535, 1, 0
    %v3620 = vsel %vm3536, 1, 0
    %v3621 = vsel %vm3537, 1, 0
    %v3622 = vsel %vm3538, 1, 0
    %v3623 = vcvt.s32.f32 %v3539
    %v3624 = vcvt.s32.f32 %v3540
    %v3625 = vcvt.s32.f32 %v3541
    %v3626 = vcvt.s32.f32 %v3542
    %v3627 = vcvt.s32.f32 %v3543
    %v3628 = vcvt.s32.f32 %v3544
    %v3629 = vcvt.s32.f32 %v3545
    %v3630 = vcvt.s32.f32 %v3546
    %v3631 = vcvt.s32.f32 %v3547
    %v3632 = vcvt.s32.f32 %v3548
    %v3633 = vcvt.s32.f32 %v3549
    %v3634 = vcvt.s32.f32 %v3550
    %v3635 = vcvt.s32.f32 %v3551
    %v3636 = vcvt.s32.f32 %v3552
    %v3637 = vcvt.s32.f32 %v3553
    %v3638 = vcvt.s32.f32 %v3554
    %v3639 = vcvt.s32.f32 %v3555
    %v3640 = vcvt.s32.f32 %v3556
    %v3641 = vcvt.s32.f32 %v3557
    %v3642 = vcvt.s32.f32 %v3558
    %v3643 = vcvt.s32.f32 %v3559
    %v3644 = vcvt.s32.f32 %v3560
    %v3645 = vcvt.s32.f32 %v3561
    %v3646 = vcvt.s32.f32 %v3562
    %v3647 = vcvt.s32.f32 %v3563
    %v3648 = vcvt.s32.f32 %v3564
    %v3649 = vcvt.s32.f32 %v3565
    %v3650 = vcvt.s32.f32 %v3566
    %v3651 = vcvt.s32.f32 %v3567
    %v3652 = vcvt.s32.f32 %v3568
    %v3653 = vcvt.s32.f32 %v3569
    %v3654 = vcvt.s32.f32 %v3570
    %v3655 = vcvt.s32.f32 %v3571
    %v3656 = vcvt.s32.f32 %v3572
    %v3657 = vcvt.s32.f32 %v3573
    %v3658 = vcvt.s32.f32 %v3574
    %v3659 = vcvt.s32.f32 %v3575
    %v3660 = vcvt.s32.f32 %v3576
    %v3661 = vcvt.s32.f32 %v3577
    %v3662 = vcvt.s32.f32 %v3578
    %v3663 = vcvt.s32.f32 %v3579
    %v3664 = vcvt.s32.f32 %v3580
    %v3665 = vcvt.s32.f32 %v3581
    %v3666 = vcvt.s32.f32 %v3582
    %v3667 = vcvt.s32.f32 %v3583
    %v3668 = vcvt.s32.f32 %v3584
    %v3669 = vcvt.s32.f32 %v3585
    %v3670 = vcvt.s32.f32 %v3586
    %v3671 = vcvt.s32.f32 %v3587
    %v3672 = vcvt.s32.f32 %v3588
    %v3673 = vcvt.s32.f32 %v3589
    %v3674 = vcvt.s32.f32 %v3590
    %v3675 = vcvt.s32.f32 %v3591
    %v3676 = vcvt.s32.f32 %v3592
    %v3677 = vcvt.s32.f32 %v3593
    %v3678 = vcvt.s32.f32 %v3594
    %v3679 = vcvt.s32.f32 %v3595
    %v3680 = vcvt.s32.f32 %v3596
    %v3681 = vcvt.s32.f32 %v3597
    %v3682 = vcvt.s32.f32 %v3598
    %v3683 = vcvt.s32.f32 %v3599
    %v3684 = vcvt.s32.f32 %v3600
    %v3685 = vcvt.s32.f32 %v3601
    %v3686 = vcvt.s32.f32 %v3602
    %v3687 = vcvt.s32.f32 %v3603
    %v3688 = vcvt.s32.f32 %v3604
    %v3689 = vcvt.s32.f32 %v3605
    %v3690 = vcvt.s32.f32 %v3606
    %v3691 = vcvt.s32.f32 %v3607
    %v3692 = vcvt.s32.f32 %v3608
    %v3693 = vcvt.s32.f32 %v3609
    %v3694 = vcvt.s32.f32 %v3610
    %v3695 = vcvt.s32.f32 %v3611
    %v3696 = vcvt.s32.f32 %v3612
    %v3697 = vcvt.s32.f32 %v3613
    %v3698 = vcvt.s32.f32 %v3614
    %v3699 = vcvt.s32.f32 %v3615
    %v3700 = vcvt.s32.f32 %v3616
    %v3701 = vcvt.s32.f32 %v3617
    %v3702 = vcvt.s32.f32 %v3618
    %v3703 = vcvt.s32.f32 %v3619
    %v3704 = vcvt.s32.f32 %v3620
    %v3705 = vcvt.s32.f32 %v3621
    %v3706 = vcvt.s32.f32 %v3622
    %v3708 = vsel %vm320, %v3423, 0
    %v3711 = vsel %vm320, %v3425, 0
    %v3714 = vsel %vm320, %v3427, 0
    %v3717 = vsel %vm320, %v3429, 0
    %v3720 = vsel %vm320, %v3431, 0
    %v3723 = vsel %vm320, %v3433, 0
    %v3726 = vsel %vm320, %v3435, 0
    %v3729 = vsel %vm320, %v3437, 0
    %v3732 = vsel %vm320, %v3439, 0
    %v3735 = vsel %vm320, %v3441, 0
    %v3738 = vsel %vm320, %v3443, 0
    %v3741 = vsel %vm320, %v3445, 0
    %v3744 = vsel %vm320, %v3447, 0
    %v3747 = vsel %vm320, %v3449, 0
    %3749 = vmatpush.msra.mxu0 %v3668
    %3750 = vmatpush.msra.mxu0 %v3665
    %3751 = vmatpush.msra.mxu0 %v3662
    %3752 = vmatpush.msra.mxu0 %v3659
    %3753 = vmatpush.msra.mxu0 %v3656
    %3754 = vmatpush.msra.mxu0 %v3653
    %3755 = vmatpush.msra.mxu0 %v3650
    %3756 = vmatpush.msra.mxu0 %v3647
    %3757 = vmatpush.msra.mxu0 %v3644
    %3758 = vmatpush.msra.mxu0 %v3641
    %3759 = vmatpush.msra.mxu0 %v3638
    %3760 = vmatpush.msra.mxu0 %v3635
    %3761 = vmatpush.msra.mxu0 %v3632
    %3762 = vmatpush.msra.mxu0 %v3629
    %3763 = vmatpush.msra.mxu0 %v3626
    %3764 = vmatpush.msra.mxu0 %v3623
    %3765 = vmatmul.f32.gmra.mxu0 %v3422
    %v3766 = vpop.f32.mrf.mxu0
    %v3767 = vadd.f32 0.0, %v3766
    %3768 = vmatmul.f32.gmra.mxu0 %v3424
    %v3769 = vpop.f32.mrf.mxu0
    %v3770 = vadd.f32 0.0, %v3769
    %3771 = vmatmul.f32.gmra.mxu0 %v3426
    %v3772 = vpop.f32.mrf.mxu0
    %v3773 = vadd.f32 0.0, %v3772
    %3774 = vmatmul.f32.gmra.mxu0 %v3428
    %v3775 = vpop.f32.mrf.mxu0
    %v3776 = vadd.f32 0.0, %v3775
    %3777 = vmatmul.f32.gmra.mxu0 %v3430
    %v3778 = vpop.f32.mrf.mxu0
    %v3779 = vadd.f32 0.0, %v3778
    %3780 = vmatmul.f32.gmra.mxu0 %v3432
    %v3781 = vpop.f32.mrf.mxu0
    %v3782 = vadd.f32 0.0, %v3781
    %3783 = vmatmul.f32.gmra.mxu0 %v3434
    %v3784 = vpop.f32.mrf.mxu0
    %v3785 = vadd.f32 0.0, %v3784
    %3786 = vmatmul.f32.gmra.mxu0 %v3436
    %v3787 = vpop.f32.mrf.mxu0
    %v3788 = vadd.f32 0.0, %v3787
    %3789 = vmatmul.f32.gmra.mxu0 %v3438
    %v3790 = vpop.f32.mrf.mxu0
    %v3791 = vadd.f32 0.0, %v3790
    %3792 = vmatmul.f32.gmra.mxu0 %v3440
    %v3793 = vpop.f32.mrf.mxu0
    %v3794 = vadd.f32 0.0, %v3793
    %3795 = vmatmul.f32.gmra.mxu0 %v3442
    %v3796 = vpop.f32.mrf.mxu0
    %v3797 = vadd.f32 0.0, %v3796
    %3798 = vmatmul.f32.gmra.mxu0 %v3444
    %v3799 = vpop.f32.mrf.mxu0
    %v3800 = vadd.f32 0.0, %v3799
    %3801 = vmatmul.f32.gmra.mxu0 %v3446
    %v3802 = vpop.f32.mrf.mxu0
    %v3803 = vadd.f32 0.0, %v3802
    %3804 = vmatmul.f32.gmra.mxu0 %v3448
    %v3805 = vpop.f32.mrf.mxu0
    %v3806 = vadd.f32 0.0, %v3805
    %3807 = vdwg.mxu0
    %3808 = vmatpush.msra.mxu0 0.0
    %3809 = vmatpush.msra.mxu0 0.0
    %3810 = vmatpush.msra.mxu0 0.0
    %3811 = vmatpush.msra.mxu0 0.0
    %3812 = vmatpush.msra.mxu0 %v3704
    %3813 = vmatpush.msra.mxu0 %v3701
    %3814 = vmatpush.msra.mxu0 %v3698
    %3815 = vmatpush.msra.mxu0 %v3695
    %3816 = vmatpush.msra.mxu0 %v3692
    %3817 = vmatpush.msra.mxu0 %v3689
    %3818 = vmatpush.msra.mxu0 %v3686
    %3819 = vmatpush.msra.mxu0 %v3683
    %3820 = vmatpush.msra.mxu0 %v3680
    %3821 = vmatpush.msra.mxu0 %v3677
    %3822 = vmatpush.msra.mxu0 %v3674
    %3823 = vmatpush.msra.mxu0 %v3671
    %3824 = vmatmul.f32.gmra.mxu0 %v3708
    %v3825 = vpop.f32.mrf.mxu0
    %v3826 = vadd.f32 %v3767, %v3825
    %3827 = vmatmul.f32.gmra.mxu0 %v3711
    %v3828 = vpop.f32.mrf.mxu0
    %v3829 = vadd.f32 %v3770, %v3828
    %3830 = vmatmul.f32.gmra.mxu0 %v3714
    %v3831 = vpop.f32.mrf.mxu0
    %v3832 = vadd.f32 %v3773, %v3831
    %3833 = vmatmul.f32.gmra.mxu0 %v3717
    %v3834 = vpop.f32.mrf.mxu0
    %v3835 = vadd.f32 %v3776, %v3834
    %3836 = vmatmul.f32.gmra.mxu0 %v3720
    %v3837 = vpop.f32.mrf.mxu0
    %v3838 = vadd.f32 %v3779, %v3837
    %3839 = vmatmul.f32.gmra.mxu0 %v3723
    %v3840 = vpop.f32.mrf.mxu0
    %v3841 = vadd.f32 %v3782, %v3840
    %3842 = vmatmul.f32.gmra.mxu0 %v3726
    %v3843 = vpop.f32.mrf.mxu0
    %v3844 = vadd.f32 %v3785, %v3843
    %3845 = vmatmul.f32.gmra.mxu0 %v3729
    %v3846 = vpop.f32.mrf.mxu0
    %v3847 = vadd.f32 %v3788, %v3846
    %3848 = vmatmul.f32.gmra.mxu0 %v3732
    %v3849 = vpop.f32.mrf.mxu0
    %v3850 = vadd.f32 %v3791, %v3849
    %3851 = vmatmul.f32.gmra.mxu0 %v3735
    %v3852 = vpop.f32.mrf.mxu0
    %v3853 = vadd.f32 %v3794, %v3852
    %3854 = vmatmul.f32.gmra.mxu0 %v3738
    %v3855 = vpop.f32.mrf.mxu0
    %v3856 = vadd.f32 %v3797, %v3855
    %3857 = vmatmul.f32.gmra.mxu0 %v3741
    %v3858 = vpop.f32.mrf.mxu0
    %v3859 = vadd.f32 %v3800, %v3858
    %3860 = vmatmul.f32.gmra.mxu0 %v3744
    %v3861 = vpop.f32.mrf.mxu0
    %v3862 = vadd.f32 %v3803, %v3861
    %3863 = vmatmul.f32.gmra.mxu0 %v3747
    %v3864 = vpop.f32.mrf.mxu0
    %v3865 = vadd.f32 %v3806, %v3864
    %3866 = vdwg.mxu0
    %3867 = vmatpush.msra.mxu0 %v3669
    %3868 = vmatpush.msra.mxu0 %v3666
    %3869 = vmatpush.msra.mxu0 %v3663
    %3870 = vmatpush.msra.mxu0 %v3660
    %3871 = vmatpush.msra.mxu0 %v3657
    %3872 = vmatpush.msra.mxu0 %v3654
    %3873 = vmatpush.msra.mxu0 %v3651
    %3874 = vmatpush.msra.mxu0 %v3648
    %3875 = vmatpush.msra.mxu0 %v3645
    %3876 = vmatpush.msra.mxu0 %v3642
    %3877 = vmatpush.msra.mxu0 %v3639
    %3878 = vmatpush.msra.mxu0 %v3636
    %3879 = vmatpush.msra.mxu0 %v3633
    %3880 = vmatpush.msra.mxu0 %v3630
    %3881 = vmatpush.msra.mxu0 %v3627
    %3882 = vmatpush.msra.mxu0 %v3624
    %3883 = vmatmul.f32.gmra.mxu0 %v3422
    %v3884 = vpop.f32.mrf.mxu0
    %v3885 = vadd.f32 0.0, %v3884
    %3886 = vmatmul.f32.gmra.mxu0 %v3424
    %v3887 = vpop.f32.mrf.mxu0
    %v3888 = vadd.f32 0.0, %v3887
    %3889 = vmatmul.f32.gmra.mxu0 %v3426
    %v3890 = vpop.f32.mrf.mxu0
    %v3891 = vadd.f32 0.0, %v3890
    %3892 = vmatmul.f32.gmra.mxu0 %v3428
    %v3893 = vpop.f32.mrf.mxu0
    %v3894 = vadd.f32 0.0, %v3893
    %3895 = vmatmul.f32.gmra.mxu0 %v3430
    %v3896 = vpop.f32.mrf.mxu0
    %v3897 = vadd.f32 0.0, %v3896
    %3898 = vmatmul.f32.gmra.mxu0 %v3432
    %v3899 = vpop.f32.mrf.mxu0
    %v3900 = vadd.f32 0.0, %v3899
    %3901 = vmatmul.f32.gmra.mxu0 %v3434
    %v3902 = vpop.f32.mrf.mxu0
    %v3903 = vadd.f32 0.0, %v3902
    %3904 = vmatmul.f32.gmra.mxu0 %v3436
    %v3905 = vpop.f32.mrf.mxu0
    %v3906 = vadd.f32 0.0, %v3905
    %3907 = vmatmul.f32.gmra.mxu0 %v3438
    %v3908 = vpop.f32.mrf.mxu0
    %v3909 = vadd.f32 0.0, %v3908
    %3910 = vmatmul.f32.gmra.mxu0 %v3440
    %v3911 = vpop.f32.mrf.mxu0
    %v3912 = vadd.f32 0.0, %v3911
    %3913 = vmatmul.f32.gmra.mxu0 %v3442
    %v3914 = vpop.f32.mrf.mxu0
    %v3915 = vadd.f32 0.0, %v3914
    %3916 = vmatmul.f32.gmra.mxu0 %v3444
    %v3917 = vpop.f32.mrf.mxu0
    %v3918 = vadd.f32 0.0, %v3917
    %3919 = vmatmul.f32.gmra.mxu0 %v3446
    %v3920 = vpop.f32.mrf.mxu0
    %v3921 = vadd.f32 0.0, %v3920
    %3922 = vmatmul.f32.gmra.mxu0 %v3448
    %v3923 = vpop.f32.mrf.mxu0
    %v3924 = vadd.f32 0.0, %v3923
    %3925 = vdwg.mxu0
    %3926 = vmatpush.msra.mxu0 0.0
    %3927 = vmatpush.msra.mxu0 0.0
    %3928 = vmatpush.msra.mxu0 0.0
    %3929 = vmatpush.msra.mxu0 0.0
    %3930 = vmatpush.msra.mxu0 %v3705
    %3931 = vmatpush.msra.mxu0 %v3702
    %3932 = vmatpush.msra.mxu0 %v3699
    %3933 = vmatpush.msra.mxu0 %v3696
    %3934 = vmatpush.msra.mxu0 %v3693
    %3935 = vmatpush.msra.mxu0 %v3690
    %3936 = vmatpush.msra.mxu0 %v3687
    %3937 = vmatpush.msra.mxu0 %v3684
    %3938 = vmatpush.msra.mxu0 %v3681
    %3939 = vmatpush.msra.mxu0 %v3678
    %3940 = vmatpush.msra.mxu0 %v3675
    %3941 = vmatpush.msra.mxu0 %v3672
    %3942 = vmatmul.f32.gmra.mxu0 %v3708
    %v3943 = vpop.f32.mrf.mxu0
    %v3944 = vadd.f32 %v3885, %v3943
    %3945 = vmatmul.f32.gmra.mxu0 %v3711
    %v3946 = vpop.f32.mrf.mxu0
    %v3947 = vadd.f32 %v3888, %v3946
    %3948 = vmatmul.f32.gmra.mxu0 %v3714
    %v3949 = vpop.f32.mrf.mxu0
    %v3950 = vadd.f32 %v3891, %v3949
    %3951 = vmatmul.f32.gmra.mxu0 %v3717
    %v3952 = vpop.f32.mrf.mxu0
    %v3953 = vadd.f32 %v3894, %v3952
    %3954 = vmatmul.f32.gmra.mxu0 %v3720
    %v3955 = vpop.f32.mrf.mxu0
    %v3956 = vadd.f32 %v3897, %v3955
    %3957 = vmatmul.f32.gmra.mxu0 %v3723
    %v3958 = vpop.f32.mrf.mxu0
    %v3959 = vadd.f32 %v3900, %v3958
    %3960 = vmatmul.f32.gmra.mxu0 %v3726
    %v3961 = vpop.f32.mrf.mxu0
    %v3962 = vadd.f32 %v3903, %v3961
    %3963 = vmatmul.f32.gmra.mxu0 %v3729
    %v3964 = vpop.f32.mrf.mxu0
    %v3965 = vadd.f32 %v3906, %v3964
    %3966 = vmatmul.f32.gmra.mxu0 %v3732
    %v3967 = vpop.f32.mrf.mxu0
    %v3968 = vadd.f32 %v3909, %v3967
    %3969 = vmatmul.f32.gmra.mxu0 %v3735
    %v3970 = vpop.f32.mrf.mxu0
    %v3971 = vadd.f32 %v3912, %v3970
    %3972 = vmatmul.f32.gmra.mxu0 %v3738
    %v3973 = vpop.f32.mrf.mxu0
    %v3974 = vadd.f32 %v3915, %v3973
    %3975 = vmatmul.f32.gmra.mxu0 %v3741
    %v3976 = vpop.f32.mrf.mxu0
    %v3977 = vadd.f32 %v3918, %v3976
    %3978 = vmatmul.f32.gmra.mxu0 %v3744
    %v3979 = vpop.f32.mrf.mxu0
    %v3980 = vadd.f32 %v3921, %v3979
    %3981 = vmatmul.f32.gmra.mxu0 %v3747
    %v3982 = vpop.f32.mrf.mxu0
    %v3983 = vadd.f32 %v3924, %v3982
    %3984 = vdwg.mxu0
    %3985 = vmatpush.msra.mxu0 %v3670
    %3986 = vmatpush.msra.mxu0 %v3667
    %3987 = vmatpush.msra.mxu0 %v3664
    %3988 = vmatpush.msra.mxu0 %v3661
    %3989 = vmatpush.msra.mxu0 %v3658
    %3990 = vmatpush.msra.mxu0 %v3655
    %3991 = vmatpush.msra.mxu0 %v3652
    %3992 = vmatpush.msra.mxu0 %v3649
    %3993 = vmatpush.msra.mxu0 %v3646
    %3994 = vmatpush.msra.mxu0 %v3643
    %3995 = vmatpush.msra.mxu0 %v3640
    %3996 = vmatpush.msra.mxu0 %v3637
    %3997 = vmatpush.msra.mxu0 %v3634
    %3998 = vmatpush.msra.mxu0 %v3631
    %3999 = vmatpush.msra.mxu0 %v3628
    %4000 = vmatpush.msra.mxu0 %v3625
    %4001 = vmatmul.f32.gmra.mxu0 %v3422
    %v4002 = vpop.f32.mrf.mxu0
    %v4003 = vadd.f32 0.0, %v4002
    %4004 = vmatmul.f32.gmra.mxu0 %v3424
    %v4005 = vpop.f32.mrf.mxu0
    %v4006 = vadd.f32 0.0, %v4005
    %4007 = vmatmul.f32.gmra.mxu0 %v3426
    %v4008 = vpop.f32.mrf.mxu0
    %v4009 = vadd.f32 0.0, %v4008
    %4010 = vmatmul.f32.gmra.mxu0 %v3428
    %v4011 = vpop.f32.mrf.mxu0
    %v4012 = vadd.f32 0.0, %v4011
    %4013 = vmatmul.f32.gmra.mxu0 %v3430
    %v4014 = vpop.f32.mrf.mxu0
    %v4015 = vadd.f32 0.0, %v4014
    %4016 = vmatmul.f32.gmra.mxu0 %v3432
    %v4017 = vpop.f32.mrf.mxu0
    %v4018 = vadd.f32 0.0, %v4017
    %4019 = vmatmul.f32.gmra.mxu0 %v3434
    %v4020 = vpop.f32.mrf.mxu0
    %v4021 = vadd.f32 0.0, %v4020
    %4022 = vmatmul.f32.gmra.mxu0 %v3436
    %v4023 = vpop.f32.mrf.mxu0
    %v4024 = vadd.f32 0.0, %v4023
    %4025 = vmatmul.f32.gmra.mxu0 %v3438
    %v4026 = vpop.f32.mrf.mxu0
    %v4027 = vadd.f32 0.0, %v4026
    %4028 = vmatmul.f32.gmra.mxu0 %v3440
    %v4029 = vpop.f32.mrf.mxu0
    %v4030 = vadd.f32 0.0, %v4029
    %4031 = vmatmul.f32.gmra.mxu0 %v3442
    %v4032 = vpop.f32.mrf.mxu0
    %v4033 = vadd.f32 0.0, %v4032
    %4034 = vmatmul.f32.gmra.mxu0 %v3444
    %v4035 = vpop.f32.mrf.mxu0
    %v4036 = vadd.f32 0.0, %v4035
    %4037 = vmatmul.f32.gmra.mxu0 %v3446
    %v4038 = vpop.f32.mrf.mxu0
    %v4039 = vadd.f32 0.0, %v4038
    %4040 = vmatmul.f32.gmra.mxu0 %v3448
    %v4041 = vpop.f32.mrf.mxu0
    %v4042 = vadd.f32 0.0, %v4041
    %4043 = vdwg.mxu0
    %4044 = vmatpush.msra.mxu0 0.0
    %4045 = vmatpush.msra.mxu0 0.0
    %4046 = vmatpush.msra.mxu0 0.0
    %4047 = vmatpush.msra.mxu0 0.0
    %4048 = vmatpush.msra.mxu0 %v3706
    %4049 = vmatpush.msra.mxu0 %v3703
    %4050 = vmatpush.msra.mxu0 %v3700
    %4051 = vmatpush.msra.mxu0 %v3697
    %4052 = vmatpush.msra.mxu0 %v3694
    %4053 = vmatpush.msra.mxu0 %v3691
    %4054 = vmatpush.msra.mxu0 %v3688
    %4055 = vmatpush.msra.mxu0 %v3685
    %4056 = vmatpush.msra.mxu0 %v3682
    %4057 = vmatpush.msra.mxu0 %v3679
    %4058 = vmatpush.msra.mxu0 %v3676
    %4059 = vmatpush.msra.mxu0 %v3673
    %4060 = vmatmul.f32.gmra.mxu0 %v3708
    %v4061 = vpop.f32.mrf.mxu0
    %v4062 = vadd.f32 %v4003, %v4061
    %4063 = vmatmul.f32.gmra.mxu0 %v3711
    %v4064 = vpop.f32.mrf.mxu0
    %v4065 = vadd.f32 %v4006, %v4064
    %4066 = vmatmul.f32.gmra.mxu0 %v3714
    %v4067 = vpop.f32.mrf.mxu0
    %v4068 = vadd.f32 %v4009, %v4067
    %4069 = vmatmul.f32.gmra.mxu0 %v3717
    %v4070 = vpop.f32.mrf.mxu0
    %v4071 = vadd.f32 %v4012, %v4070
    %4072 = vmatmul.f32.gmra.mxu0 %v3720
    %v4073 = vpop.f32.mrf.mxu0
    %v4074 = vadd.f32 %v4015, %v4073
    %4075 = vmatmul.f32.gmra.mxu0 %v3723
    %v4076 = vpop.f32.mrf.mxu0
    %v4077 = vadd.f32 %v4018, %v4076
    %4078 = vmatmul.f32.gmra.mxu0 %v3726
    %v4079 = vpop.f32.mrf.mxu0
    %v4080 = vadd.f32 %v4021, %v4079
    %4081 = vmatmul.f32.gmra.mxu0 %v3729
    %v4082 = vpop.f32.mrf.mxu0
    %v4083 = vadd.f32 %v4024, %v4082
    %4084 = vmatmul.f32.gmra.mxu0 %v3732
    %v4085 = vpop.f32.mrf.mxu0
    %v4086 = vadd.f32 %v4027, %v4085
    %4087 = vmatmul.f32.gmra.mxu0 %v3735
    %v4088 = vpop.f32.mrf.mxu0
    %v4089 = vadd.f32 %v4030, %v4088
    %4090 = vmatmul.f32.gmra.mxu0 %v3738
    %v4091 = vpop.f32.mrf.mxu0
    %v4092 = vadd.f32 %v4033, %v4091
    %4093 = vmatmul.f32.gmra.mxu0 %v3741
    %v4094 = vpop.f32.mrf.mxu0
    %v4095 = vadd.f32 %v4036, %v4094
    %4096 = vmatmul.f32.gmra.mxu0 %v3744
    %v4097 = vpop.f32.mrf.mxu0
    %v4098 = vadd.f32 %v4039, %v4097
    %4099 = vmatmul.f32.gmra.mxu0 %v3747
    %v4100 = vpop.f32.mrf.mxu0
    %v4101 = vadd.f32 %v4042, %v4100
    %4102 = vdwg.mxu0
    %v4103 = vadd.f32 %v2560, %v3826
    %v4104 = vadd.f32 %v2678, %v3944
    %v4105 = vadd.f32 %v2796, %v4062
    %v4106 = vadd.f32 %v2563, %v3829
    %v4107 = vadd.f32 %v2681, %v3947
    %v4108 = vadd.f32 %v2799, %v4065
    %v4109 = vadd.f32 %v2566, %v3832
    %v4110 = vadd.f32 %v2684, %v3950
    %v4111 = vadd.f32 %v2802, %v4068
    %v4112 = vadd.f32 %v2569, %v3835
    %v4113 = vadd.f32 %v2687, %v3953
    %v4114 = vadd.f32 %v2805, %v4071
    %v4115 = vadd.f32 %v2572, %v3838
    %v4116 = vadd.f32 %v2690, %v3956
    %v4117 = vadd.f32 %v2808, %v4074
    %v4118 = vadd.f32 %v2575, %v3841
    %v4119 = vadd.f32 %v2693, %v3959
    %v4120 = vadd.f32 %v2811, %v4077
    %v4121 = vadd.f32 %v2578, %v3844
    %v4122 = vadd.f32 %v2696, %v3962
    %v4123 = vadd.f32 %v2814, %v4080
    %v4124 = vadd.f32 %v2581, %v3847
    %v4125 = vadd.f32 %v2699, %v3965
    %v4126 = vadd.f32 %v2817, %v4083
    %v4127 = vadd.f32 %v2584, %v3850
    %v4128 = vadd.f32 %v2702, %v3968
    %v4129 = vadd.f32 %v2820, %v4086
    %v4130 = vadd.f32 %v2587, %v3853
    %v4131 = vadd.f32 %v2705, %v3971
    %v4132 = vadd.f32 %v2823, %v4089
    %v4133 = vadd.f32 %v2590, %v3856
    %v4134 = vadd.f32 %v2708, %v3974
    %v4135 = vadd.f32 %v2826, %v4092
    %v4136 = vadd.f32 %v2593, %v3859
    %v4137 = vadd.f32 %v2711, %v3977
    %v4138 = vadd.f32 %v2829, %v4095
    %v4139 = vadd.f32 %v2596, %v3862
    %v4140 = vadd.f32 %v2714, %v3980
    %v4141 = vadd.f32 %v2832, %v4098
    %v4142 = vadd.f32 %v2599, %v3865
    %v4143 = vadd.f32 %v2717, %v3983
    %v4144 = vadd.f32 %v2835, %v4101
    %4145 = vst [vmem:[%s5] sm:$0xff] %v4103
    %4146 = vst [vmem:[%s5 + $0x8] sm:$0xff] %v4104
    %vm4147 = vcmask 261120
    %4148 = vst.msk [vmem:[%s5 + $0x10] sm:$0xff] %vm4147, %v4105
    %4149 = vst [vmem:[%s5 + $0x18] sm:$0xff] %v4106
    %4150 = vst [vmem:[%s5 + $0x20] sm:$0xff] %v4107
    %4151 = vst.msk [vmem:[%s5 + $0x28] sm:$0xff] %vm4147, %v4108
    %4152 = vst [vmem:[%s5 + $0x30] sm:$0xff] %v4109
    %4153 = vst [vmem:[%s5 + $0x38] sm:$0xff] %v4110
    %4154 = vst.msk [vmem:[%s5 + $0x40] sm:$0xff] %vm4147, %v4111
    %4155 = vst [vmem:[%s5 + $0x48] sm:$0xff] %v4112
    %4156 = vst [vmem:[%s5 + $0x50] sm:$0xff] %v4113
    %4157 = vst.msk [vmem:[%s5 + $0x58] sm:$0xff] %vm4147, %v4114
    %4158 = vst [vmem:[%s5 + $0x60] sm:$0xff] %v4115
    %4159 = vst [vmem:[%s5 + $0x68] sm:$0xff] %v4116
    %4160 = vst.msk [vmem:[%s5 + $0x70] sm:$0xff] %vm4147, %v4117
    %4161 = vst [vmem:[%s5 + $0x78] sm:$0xff] %v4118
    %4162 = vst [vmem:[%s5 + $0x80] sm:$0xff] %v4119
    %4163 = vst.msk [vmem:[%s5 + $0x88] sm:$0xff] %vm4147, %v4120
    %4164 = vst [vmem:[%s5 + $0x90] sm:$0xff] %v4121
    %4165 = vst [vmem:[%s5 + $0x98] sm:$0xff] %v4122
    %4166 = vst.msk [vmem:[%s5 + $0xa0] sm:$0xff] %vm4147, %v4123
    %4167 = vst [vmem:[%s5 + $0xa8] sm:$0xff] %v4124
    %4168 = vst [vmem:[%s5 + $0xb0] sm:$0xff] %v4125
    %4169 = vst.msk [vmem:[%s5 + $0xb8] sm:$0xff] %vm4147, %v4126
    %4170 = vst [vmem:[%s5 + $0xc0] sm:$0xff] %v4127
    %4171 = vst [vmem:[%s5 + $0xc8] sm:$0xff] %v4128
    %4172 = vst.msk [vmem:[%s5 + $0xd0] sm:$0xff] %vm4147, %v4129
    %4173 = vst [vmem:[%s5 + $0xd8] sm:$0xff] %v4130
    %4174 = vst [vmem:[%s5 + $0xe0] sm:$0xff] %v4131
    %4175 = vst.msk [vmem:[%s5 + $0xe8] sm:$0xff] %vm4147, %v4132
    %4176 = vst [vmem:[%s5 + $0xf0] sm:$0xff] %v4133
    %4177 = vst [vmem:[%s5 + $0xf8] sm:$0xff] %v4134
    %4178 = vst.msk [vmem:[%s5 + $0x100] sm:$0xff] %vm4147, %v4135
    %4179 = vst [vmem:[%s5 + $0x108] sm:$0xff] %v4136
    %4180 = vst [vmem:[%s5 + $0x110] sm:$0xff] %v4137
    %4181 = vst.msk [vmem:[%s5 + $0x118] sm:$0xff] %vm4147, %v4138
    %4182 = vst [vmem:[%s5 + $0x120] sm:$0xff] %v4139
    %4183 = vst [vmem:[%s5 + $0x128] sm:$0xff] %v4140
    %4184 = vst.msk [vmem:[%s5 + $0x130] sm:$0xff] %vm4147, %v4141
    %4185 = vst [vmem:[%s5 + $0x138] sm:$0xff] %v4142
    %4186 = vst [vmem:[%s5 + $0x140] sm:$0xff] %v4143
    %4187 = vst.msk [vmem:[%s5 + $0x148] sm:$0xff] %vm4147, %v4144
    // Predicated region
    $region42: #{model_forward.1} parent=1 // pred_check
      _
    $region43: #{model_forward.1} parent=1 // pred_check_branch
      %4189 = sbr.rel (0) target = $region45
    $region44: #{model_forward.1} parent=1 // pred_region
      _
    $region45: #{model_forward.1} parent=1 // pred_fallthru
      _
    // Predicated region
    $region46: #{model_forward.1} parent=1 // pred_check
      _
    $region47: #{model_forward.1} parent=1 // pred_check_branch
      %4191 = sbr.rel (0) target = $region49
    $region48: #{model_forward.1} parent=1 // pred_region
      _
    $region49: #{model_forward.1} parent=1 // pred_fallthru
      _
    %4192 = vsyncpa [#allocation3], 1
    %4193 = vsyncpa [#allocation6], 1
    %4194 = vsyncpa [#allocation4], 1
    %4195 = vsyncpa [#allocation10], 1

</llo_original>
